<compile_context>
chip_gen: v5e
topology: v5e:2x2
jax: 0.10.0
libtpu: 0.0.40
codegen_flags: <defaults>
</compile_context>

<pallas_src>
import functools
import math

import jax
import jax.numpy as jnp
from jax.experimental import pallas as pl
from jax.experimental.pallas import tpu as pltpu

CLAMP = 1.9
CLAMP_SCALE = 2.0 * CLAMP / math.pi      # SoftClampling: s -> (2c/pi) * atan(s / c)
_VMEM_LIMIT = 32 * 1024 * 1024           # explicit scoped-VMEM budget (safe on v5e/v6e/v7x)


def _pick_tile_n(n):
    """Lane tile along the point axis: a multiple of 128 dividing N, else the whole N."""
    for t in (512, 256, 128):
        if n % t == 0:
            return t
    return n


def _atan_f32(x):
    # Cephes-style float32 arctan built only from abs/mul/add/div/select so SoftClampling
    # stays fused in-kernel without relying on a lax.atan Mosaic lowering (~1e-7 accuracy).
    ax = jnp.abs(x)
    big = ax > 2.414213562373095          # tan(3*pi/8)
    mid = ax > 0.4142135623730951         # tan(pi/8)
    xr_big = -1.0 / jnp.maximum(ax, 1e-30)
    xr_mid = (ax - 1.0) / (ax + 1.0)
    xr = jnp.where(big, xr_big, jnp.where(mid, xr_mid, ax))
    y0 = jnp.where(big, math.pi / 2, jnp.where(mid, math.pi / 4, 0.0))
    z = xr * xr
    p = ((8.05374449538e-2 * z - 1.38776856032e-1) * z + 1.99777106478e-1) * z \
        - 3.33329491539e-1
    r = y0 + (xr + xr * z * p)
    return jnp.where(x < 0.0, -r, r)


# ---------------- kernel 1: Permutation('inv1x1') + ActNorm (fused, channels-first) ----------
def _perm_actnorm_kernel(x_ref, w_ref, logs_ref, bias_ref, ya_ref, yb_ref, *, C, c1):
    x = x_ref[0]                                           # (C, T)
    # inv1x1 on the VPU: C (=4) broadcast FMAs instead of a tiny MXU matmul.
    z = w_ref[:, 0:1] * x[0:1, :]
    for j in range(1, C):
        z = z + w_ref[:, j:j + 1] * x[j:j + 1, :]
    z = z * jnp.exp(logs_ref[...]) + bias_ref[...]         # ActNorm ((C,1) broadcasts over lanes)
    ya_ref[0] = z[:c1, :].astype(ya_ref.dtype)             # pre-split for the coupling
    yb_ref[0] = z[c1:, :].astype(yb_ref.dtype)


def perm_actnorm(x_cf, w, logs, bias, *, c1, tile_n):
    B, C, N = x_cf.shape
    c2 = C - c1
    n_t = N // tile_n
    return pl.pallas_call(
        functools.partial(_perm_actnorm_kernel, C=C, c1=c1),
        out_shape=(jax.ShapeDtypeStruct((B, c1, N), x_cf.dtype),
                   jax.ShapeDtypeStruct((B, c2, N), x_cf.dtype)),
        grid=(B, n_t),
        in_specs=[
            pl.BlockSpec((1, C, tile_n), lambda b, t: (b, 0, t)),
            pl.BlockSpec((C, C), lambda b, t: (0, 0)),
            pl.BlockSpec((C, 1), lambda b, t: (0, 0)),
            pl.BlockSpec((C, 1), lambda b, t: (0, 0)),
        ],
        out_specs=(pl.BlockSpec((1, c1, tile_n), lambda b, t: (b, 0, t)),
                   pl.BlockSpec((1, c2, tile_n), lambda b, t: (b, 0, t))),
        compiler_params=pltpu.CompilerParams(
            dimension_semantics=("parallel", "parallel"),
            vmem_limit_bytes=_VMEM_LIMIT),
    )(x_cf, w, logs, bias)


# -------- kernel 2: fused affine coupling (F net + G net + softclamp + combine + logdet) ------
def _coupling_kernel(feat_ref, xb_ref,
                     w1f_ref, b1f_ref, w2f_ref, b2f_ref, w3f_ref, b3f_ref,
                     w1g_ref, b1g_ref, w2g_ref, b2g_ref, w3g_ref, b3g_ref,
                     yb_ref, ld_ref, *, K, c2):
    x = feat_ref[0]                      # (Cin, T) -- shared input, read once for both nets
    xb = xb_ref[0]                       # (c2, T)

    def head(w1, b1, w2, b2, w3, b3):
        h = jnp.dot(w1[...], x, preferred_element_type=jnp.float32) + b1[...]
        h = jnp.maximum(h, 0.0)
        h = jnp.dot(w2[...], h, preferred_element_type=jnp.float32) + b2[...]
        h = jnp.maximum(h, 0.0)
        o = jnp.dot(w3[...], h, preferred_element_type=jnp.float32) + b3[...]
        if K > 1:
            # KnnConvUnit tail: rows of o are ordered [c*K + k]; max over the K neighbors.
            parts = [jnp.max(o[c * K:(c + 1) * K, :], axis=0, keepdims=True)
                     for c in range(c2)]
            o = jnp.concatenate(parts, axis=0)
        return o                         # (c2, T)

    s_raw = head(w1f_ref, b1f_ref, w2f_ref, b2f_ref, w3f_ref, b3f_ref)
    t = head(w1g_ref, b1g_ref, w2g_ref, b2g_ref, w3g_ref, b3g_ref)

    s = CLAMP_SCALE * _atan_f32(s_raw * (1.0 / CLAMP))     # SoftClampling (fused)
    yb_ref[0] = ((xb + t) * jnp.exp(s)).astype(yb_ref.dtype)

    tot = jnp.sum(s, axis=1, keepdims=True)                # (c2, 1) lane reduce
    tot = jnp.sum(tot, axis=0, keepdims=True)              # (1, 1)  sublane reduce
    ld_ref[...] = jnp.broadcast_to(tot.reshape(1, 1, 1, 1), ld_ref.shape)


def coupling_affine(feat, xb, net_f, net_g, *, K, tile_n):
    """yb = (xb + t) * exp(softclamp(s)); per-batch logdet = sum(softclamp(s))."""
    B, Cin, N = feat.shape
    c2 = xb.shape[1]
    n_t = N // tile_n
    w_args = (net_f["w1"], net_f["b1"], net_f["w2"], net_f["b2"], net_f["w3"], net_f["b3"],
              net_g["w1"], net_g["b1"], net_g["w2"], net_g["b2"], net_g["w3"], net_g["b3"])
    w_specs = [pl.BlockSpec(w.shape, lambda b, t: (0, 0)) for w in w_args]
    yb, ld = pl.pallas_call(
        functools.partial(_coupling_kernel, K=K, c2=c2),
        out_shape=(jax.ShapeDtypeStruct((B, c2, N), feat.dtype),
                   jax.ShapeDtypeStruct((B, n_t, 8, 128), jnp.float32)),
        grid=(B, n_t),
        in_specs=[pl.BlockSpec((1, Cin, tile_n), lambda b, t: (b, 0, t)),
                  pl.BlockSpec((1, c2, tile_n), lambda b, t: (b, 0, t))] + w_specs,
        out_specs=(pl.BlockSpec((1, c2, tile_n), lambda b, t: (b, 0, t)),
                   pl.BlockSpec((1, 1, 8, 128), lambda b, t: (b, t, 0, 0))),
        compiler_params=pltpu.CompilerParams(
            dimension_semantics=("parallel", "parallel"),
            vmem_limit_bytes=_VMEM_LIMIT),
    )(feat, xb, *w_args)
    return yb, jnp.sum(ld[:, :, 0, 0], axis=1)             # (B,)


# ------------------------------------------ JAX glue -----------------------------------------
def knn_group_cf(xa, knn_idx):
    """xa: [B, c1, N]; knn_idx: [B, N, K] -> [B, 3*c1*K, N] with channel index = c*K + k."""
    idx = jnp.transpose(knn_idx, (0, 2, 1))                       # (B, K, N)
    nbrs = jax.vmap(lambda feat, ind: feat[:, ind])(xa, idx)      # (B, c1, K, N)  data-dep gather
    center = jnp.broadcast_to(xa[:, :, None, :], nbrs.shape)
    g4 = jnp.concatenate([center, nbrs, nbrs - center], axis=1)   # (B, 3*c1, K, N)
    b, c3, k, n = g4.shape
    return g4.reshape(b, c3 * k, n)


def _kron_net(net, K):
    """Expand shared per-neighbor 1x1-conv weights into block-diagonal matrices so the whole
    KnnConv MLP becomes one matmul per layer (consistent channel ordering feature*K + k)."""
    eye = jnp.eye(K, dtype=net["w1"].dtype)
    return {
        "w1": jnp.kron(net["w1"], eye), "b1": jnp.repeat(net["b1"], K, axis=0),
        "w2": jnp.kron(net["w2"], eye), "b2": jnp.repeat(net["b2"], K, axis=0),
        "w3": jnp.kron(net["w3"], eye), "b3": jnp.repeat(net["b3"], K, axis=0),
    }


def init_params(key, idim, hdim):
    c1 = idim - idim // 2
    c2 = idim // 2
    ks = iter(jax.random.split(key, 32))

    def dense(o, i):
        return 0.1 * jax.random.normal(next(ks), (o, i), jnp.float32)

    def bias(o):
        return 0.01 * jax.random.normal(next(ks), (o, 1), jnp.float32)

    def net(cin):
        return dict(w1=dense(hdim, cin), b1=bias(hdim),
                    w2=dense(hdim, hdim), b2=bias(hdim),
                    w3=dense(c2, hdim), b3=bias(c2))

    # inv1x1 weight: deterministic random orthogonal (stable, invertible)
    wq, _ = jnp.linalg.qr(jax.random.normal(next(ks), (idim, idim), jnp.float32))
    return {
        "perm_w": wq,
        "actnorm_logs": 0.1 * jax.random.normal(next(ks), (idim, 1), jnp.float32),
        "actnorm_bias": 0.1 * jax.random.normal(next(ks), (idim, 1), jnp.float32),
        "c1F": net(3 * c1), "c1G": net(3 * c1),   # coupling1: KnnConvUnit nets (scale, shift)
        "c2F": net(c1), "c2G": net(c1),           # coupling2: LinearUnit nets (scale, shift)
    }


def flow_assembly_forward(params, x, knn_idx):
    B, N, C = x.shape
    c1 = C - C // 2
    K = knn_idx.shape[-1]
    tile_n = _pick_tile_n(N)

    x_cf = jnp.transpose(x, (0, 2, 1))                             # channels-first (B, C, N)

    # Permutation('inv1x1') + ActNorm -- fused Pallas kernel, output already split into xa/xb
    xa, xb = perm_actnorm(x_cf, params["perm_w"], params["actnorm_logs"],
                          params["actnorm_bias"], c1=c1, tile_n=tile_n)
    logdet_perm = N * jnp.linalg.slogdet(params["perm_w"])[1]      # 4x4 det stays in glue
    logdet_act = N * jnp.sum(params["actnorm_logs"])

    # Coupling1 (KnnConvUnit): knn gather stays in glue, everything else in one fused kernel
    g = knn_group_cf(xa, knn_idx)                                  # (B, 3*c1*K, N)
    yb1, ld1 = coupling_affine(g, xb,
                               _kron_net(params["c1F"], K),
                               _kron_net(params["c1G"], K),
                               K=K, tile_n=tile_n)

    # Permutation('reverse') on channels (its logdet is dropped by the torch module)
    y1 = jnp.concatenate([xa, yb1], axis=1)                        # cheap: C=4 sublane rows
    y2 = y1[:, ::-1, :]
    xa2, xb2 = y2[:, :c1, :], y2[:, c1:, :]

    # Coupling2 (LinearUnit): same fused kernel, K=1 (no neighbor max)
    yb2, ld2 = coupling_affine(xa2, xb2, params["c2F"], params["c2G"],
                               K=1, tile_n=tile_n)

    y_cf = jnp.concatenate([xa2, yb2], axis=1)
    y = jnp.transpose(y_cf, (0, 2, 1))                             # back to [B, N, C]
    logdet = logdet_act + ld1 + logdet_perm + ld2                  # (B,)
    return y, logdet


if __name__ == "__main__":
    key = jax.random.PRNGKey(0)
    B, N, idim, hdim, K = 2, 16, 4, 32, 8
    kx, kidx, kp = jax.random.split(key, 3)

    x = jax.random.normal(kx, (B, N, idim), jnp.float32)
    knn_idx = jax.random.randint(kidx, (B, N, K), 0, N, dtype=jnp.int32)
    params = init_params(kp, idim, hdim)

    fwd = jax.jit(flow_assembly_forward)
    y, logdet = fwd(params, x, knn_idx)
    jax.block_until_ready((y, logdet))

    assert y.shape == (B, N, idim), y.shape
    assert logdet.shape == (B,), logdet.shape
    assert bool(jnp.all(jnp.isfinite(y))) and bool(jnp.all(jnp.isfinite(logdet)))
    print("KERNEL_OK")
</pallas_src>

<mosaic_0001>
module attributes {stable_mosaic.version = 11 : i64} {
  func.func @_perm_actnorm_kernel(%arg0: i32, %arg1: i32, %arg2: memref<1x4x16xf32, #tpu.memory_space<vmem>>, %arg3: memref<4x4xf32, #tpu.memory_space<vmem>>, %arg4: memref<4x1xf32, #tpu.memory_space<vmem>>, %arg5: memref<4x1xf32, #tpu.memory_space<vmem>>, %arg6: memref<1x2x16xf32, #tpu.memory_space<vmem>>, %arg7: memref<1x2x16xf32, #tpu.memory_space<vmem>>) attributes {dimension_semantics = [#tpu.dimension_semantics<parallel>, #tpu.dimension_semantics<parallel>], iteration_bounds = array<i64: 2, 1>, scalar_prefetch = 0 : i64, scratch_operands = 0 : i64, tpu.core_type = #tpu.core_type<tc>, window_params = [{transform_indices = @transform_0, window_bounds = array<i64: 1, 4, 16>}, {pipeline_mode = #tpu.pipeline_mode<synchronous>, transform_indices = @transform_1, window_bounds = array<i64: 4, 4>}, {pipeline_mode = #tpu.pipeline_mode<synchronous>, transform_indices = @transform_2, window_bounds = array<i64: 4, 1>}, {pipeline_mode = #tpu.pipeline_mode<synchronous>, transform_indices = @transform_3, window_bounds = array<i64: 4, 1>}, {transform_indices = @transform_4, window_bounds = array<i64: 1, 2, 16>}, {transform_indices = @transform_5, window_bounds = array<i64: 1, 2, 16>}]} {
    %c0 = arith.constant 0 : index
    %c0_0 = arith.constant 0 : index
    %c0_1 = arith.constant 0 : index
    %0 = vector.load %arg2[%c0, %c0_0, %c0_1] : memref<1x4x16xf32, #tpu.memory_space<vmem>>, vector<1x4x16xf32>
    %1 = vector.shape_cast %0 : vector<1x4x16xf32> to vector<4x16xf32>
    %c0_2 = arith.constant 0 : index
    %c0_3 = arith.constant 0 : index
    %2 = vector.load %arg3[%c0_2, %c0_3] : memref<4x4xf32, #tpu.memory_space<vmem>>, vector<4x1xf32>
    %3 = vector.extract_strided_slice %1 {offsets = [0, 0], sizes = [1, 16], strides = [1, 1]} : vector<4x16xf32> to vector<1x16xf32>
    %4 = vector.broadcast %2 : vector<4x1xf32> to vector<4x16xf32>
    %5 = vector.broadcast %3 : vector<1x16xf32> to vector<4x16xf32>
    %6 = arith.mulf %4, %5 : vector<4x16xf32>
    %c0_4 = arith.constant 0 : index
    %c1 = arith.constant 1 : index
    %7 = vector.load %arg3[%c0_4, %c1] : memref<4x4xf32, #tpu.memory_space<vmem>>, vector<4x1xf32>
    %8 = vector.extract_strided_slice %1 {offsets = [1, 0], sizes = [1, 16], strides = [1, 1]} : vector<4x16xf32> to vector<1x16xf32>
    %9 = vector.broadcast %7 : vector<4x1xf32> to vector<4x16xf32>
    %10 = vector.broadcast %8 : vector<1x16xf32> to vector<4x16xf32>
    %11 = arith.mulf %9, %10 : vector<4x16xf32>
    %12 = arith.addf %6, %11 : vector<4x16xf32>
    %c0_5 = arith.constant 0 : index
    %c2 = arith.constant 2 : index
    %13 = vector.load %arg3[%c0_5, %c2] : memref<4x4xf32, #tpu.memory_space<vmem>>, vector<4x1xf32>
    %14 = vector.extract_strided_slice %1 {offsets = [2, 0], sizes = [1, 16], strides = [1, 1]} : vector<4x16xf32> to vector<1x16xf32>
    %15 = vector.broadcast %13 : vector<4x1xf32> to vector<4x16xf32>
    %16 = vector.broadcast %14 : vector<1x16xf32> to vector<4x16xf32>
    %17 = arith.mulf %15, %16 : vector<4x16xf32>
    %18 = arith.addf %12, %17 : vector<4x16xf32>
    %c0_6 = arith.constant 0 : index
    %c3 = arith.constant 3 : index
    %19 = vector.load %arg3[%c0_6, %c3] : memref<4x4xf32, #tpu.memory_space<vmem>>, vector<4x1xf32>
    %20 = vector.extract_strided_slice %1 {offsets = [3, 0], sizes = [1, 16], strides = [1, 1]} : vector<4x16xf32> to vector<1x16xf32>
    %21 = vector.broadcast %19 : vector<4x1xf32> to vector<4x16xf32>
    %22 = vector.broadcast %20 : vector<1x16xf32> to vector<4x16xf32>
    %23 = arith.mulf %21, %22 : vector<4x16xf32>
    %24 = arith.addf %18, %23 : vector<4x16xf32>
    %c0_7 = arith.constant 0 : index
    %c0_8 = arith.constant 0 : index
    %25 = vector.load %arg4[%c0_7, %c0_8] : memref<4x1xf32, #tpu.memory_space<vmem>>, vector<4x1xf32>
    %26 = math.exp %25 : vector<4x1xf32>
    %27 = vector.broadcast %26 : vector<4x1xf32> to vector<4x16xf32>
    %28 = arith.mulf %24, %27 : vector<4x16xf32>
    %c0_9 = arith.constant 0 : index
    %c0_10 = arith.constant 0 : index
    %29 = vector.load %arg5[%c0_9, %c0_10] : memref<4x1xf32, #tpu.memory_space<vmem>>, vector<4x1xf32>
    %30 = vector.broadcast %29 : vector<4x1xf32> to vector<4x16xf32>
    %31 = arith.addf %28, %30 : vector<4x16xf32>
    %32 = vector.extract_strided_slice %31 {offsets = [0, 0], sizes = [2, 16], strides = [1, 1]} : vector<4x16xf32> to vector<2x16xf32>
    %c0_11 = arith.constant 0 : index
    %c0_12 = arith.constant 0 : index
    %c0_13 = arith.constant 0 : index
    %33 = vector.load %arg6[%c0_11, %c0_12, %c0_13] : memref<1x2x16xf32, #tpu.memory_space<vmem>>, vector<1x2x16xf32>
    %34 = vector.shape_cast %33 : vector<1x2x16xf32> to vector<2x16xf32>
    %35 = vector.shape_cast %32 : vector<2x16xf32> to vector<1x2x16xf32>
    tpu.vector_store %arg6[%c0_11, %c0_12, %c0_13], %35 {strides = array<i32>} : memref<1x2x16xf32, #tpu.memory_space<vmem>>, vector<1x2x16xf32>,
    %36 = vector.extract_strided_slice %31 {offsets = [2, 0], sizes = [2, 16], strides = [1, 1]} : vector<4x16xf32> to vector<2x16xf32>
    %c0_14 = arith.constant 0 : index
    %c0_15 = arith.constant 0 : index
    %c0_16 = arith.constant 0 : index
    %37 = vector.load %arg7[%c0_14, %c0_15, %c0_16] : memref<1x2x16xf32, #tpu.memory_space<vmem>>, vector<1x2x16xf32>
    %38 = vector.shape_cast %37 : vector<1x2x16xf32> to vector<2x16xf32>
    %39 = vector.shape_cast %36 : vector<2x16xf32> to vector<1x2x16xf32>
    tpu.vector_store %arg7[%c0_14, %c0_15, %c0_16], %39 {strides = array<i32>} : memref<1x2x16xf32, #tpu.memory_space<vmem>>, vector<1x2x16xf32>,
    return
  }
  func.func @transform_0(%arg0: i32, %arg1: i32) -> (i32, i32, i32) {
    %c0_i32 = arith.constant 0 : i32
    %c0_i32_0 = arith.constant 0 : i32
    return %arg0, %c0_i32, %arg1 : i32, i32, i32
  }
  func.func @transform_1(%arg0: i32, %arg1: i32) -> (i32, i32) {
    %c0_i32 = arith.constant 0 : i32
    %c0_i32_0 = arith.constant 0 : i32
    %c0_i32_1 = arith.constant 0 : i32
    return %c0_i32, %c0_i32_0 : i32, i32
  }
  func.func @transform_2(%arg0: i32, %arg1: i32) -> (i32, i32) {
    %c0_i32 = arith.constant 0 : i32
    %c0_i32_0 = arith.constant 0 : i32
    %c0_i32_1 = arith.constant 0 : i32
    return %c0_i32, %c0_i32_0 : i32, i32
  }
  func.func @transform_3(%arg0: i32, %arg1: i32) -> (i32, i32) {
    %c0_i32 = arith.constant 0 : i32
    %c0_i32_0 = arith.constant 0 : i32
    %c0_i32_1 = arith.constant 0 : i32
    return %c0_i32, %c0_i32_0 : i32, i32
  }
  func.func @transform_4(%arg0: i32, %arg1: i32) -> (i32, i32, i32) {
    %c0_i32 = arith.constant 0 : i32
    %c0_i32_0 = arith.constant 0 : i32
    return %arg0, %c0_i32, %arg1 : i32, i32, i32
  }
  func.func @transform_5(%arg0: i32, %arg1: i32) -> (i32, i32, i32) {
    %c0_i32 = arith.constant 0 : i32
    %c0_i32_0 = arith.constant 0 : i32
    return %arg0, %c0_i32, %arg1 : i32, i32, i32
  }
}

module attributes {stable_mosaic.version = 11 : i64} {
  func.func @_coupling_kernel(%arg0: i32, %arg1: i32, %arg2: memref<1x48x16xf32, #tpu.memory_space<vmem>>, %arg3: memref<1x2x16xf32, #tpu.memory_space<vmem>>, %arg4: memref<256x48xf32, #tpu.memory_space<vmem>>, %arg5: memref<256x1xf32, #tpu.memory_space<vmem>>, %arg6: memref<256x256xf32, #tpu.memory_space<vmem>>, %arg7: memref<256x1xf32, #tpu.memory_space<vmem>>, %arg8: memref<16x256xf32, #tpu.memory_space<vmem>>, %arg9: memref<16x1xf32, #tpu.memory_space<vmem>>, %arg10: memref<256x48xf32, #tpu.memory_space<vmem>>, %arg11: memref<256x1xf32, #tpu.memory_space<vmem>>, %arg12: memref<256x256xf32, #tpu.memory_space<vmem>>, %arg13: memref<256x1xf32, #tpu.memory_space<vmem>>, %arg14: memref<16x256xf32, #tpu.memory_space<vmem>>, %arg15: memref<16x1xf32, #tpu.memory_space<vmem>>, %arg16: memref<1x2x16xf32, #tpu.memory_space<vmem>>, %arg17: memref<1x1x8x128xf32, #tpu.memory_space<vmem>>) attributes {dimension_semantics = [#tpu.dimension_semantics<parallel>, #tpu.dimension_semantics<parallel>], iteration_bounds = array<i64: 2, 1>, scalar_prefetch = 0 : i64, scratch_operands = 0 : i64, tpu.core_type = #tpu.core_type<tc>, window_params = [{transform_indices = @transform_0, window_bounds = array<i64: 1, 48, 16>}, {transform_indices = @transform_1, window_bounds = array<i64: 1, 2, 16>}, {pipeline_mode = #tpu.pipeline_mode<synchronous>, transform_indices = @transform_2, window_bounds = array<i64: 256, 48>}, {pipeline_mode = #tpu.pipeline_mode<synchronous>, transform_indices = @transform_3, window_bounds = array<i64: 256, 1>}, {pipeline_mode = #tpu.pipeline_mode<synchronous>, transform_indices = @transform_4, window_bounds = array<i64: 256, 256>}, {pipeline_mode = #tpu.pipeline_mode<synchronous>, transform_indices = @transform_5, window_bounds = array<i64: 256, 1>}, {pipeline_mode = #tpu.pipeline_mode<synchronous>, transform_indices = @transform_6, window_bounds = array<i64: 16, 256>}, {pipeline_mode = #tpu.pipeline_mode<synchronous>, transform_indices = @transform_7, window_bounds = array<i64: 16, 1>}, {pipeline_mode = #tpu.pipeline_mode<synchronous>, transform_indices = @transform_8, window_bounds = array<i64: 256, 48>}, {pipeline_mode = #tpu.pipeline_mode<synchronous>, transform_indices = @transform_9, window_bounds = array<i64: 256, 1>}, {pipeline_mode = #tpu.pipeline_mode<synchronous>, transform_indices = @transform_10, window_bounds = array<i64: 256, 256>}, {pipeline_mode = #tpu.pipeline_mode<synchronous>, transform_indices = @transform_11, window_bounds = array<i64: 256, 1>}, {pipeline_mode = #tpu.pipeline_mode<synchronous>, transform_indices = @transform_12, window_bounds = array<i64: 16, 256>}, {pipeline_mode = #tpu.pipeline_mode<synchronous>, transform_indices = @transform_13, window_bounds = array<i64: 16, 1>}, {transform_indices = @transform_14, window_bounds = array<i64: 1, 2, 16>}, {transform_indices = @transform_15, window_bounds = array<i64: 1, 1, 8, 128>}]} {
    %c0 = arith.constant 0 : index
    %c0_0 = arith.constant 0 : index
    %c0_1 = arith.constant 0 : index
    %0 = vector.load %arg2[%c0, %c0_0, %c0_1] : memref<1x48x16xf32, #tpu.memory_space<vmem>>, vector<1x48x16xf32>
    %1 = vector.shape_cast %0 : vector<1x48x16xf32> to vector<48x16xf32>
    %c0_2 = arith.constant 0 : index
    %c0_3 = arith.constant 0 : index
    %c0_4 = arith.constant 0 : index
    %2 = vector.load %arg3[%c0_2, %c0_3, %c0_4] : memref<1x2x16xf32, #tpu.memory_space<vmem>>, vector<1x2x16xf32>
    %3 = vector.shape_cast %2 : vector<1x2x16xf32> to vector<2x16xf32>
    %c0_5 = arith.constant 0 : index
    %c0_6 = arith.constant 0 : index
    %4 = vector.load %arg4[%c0_5, %c0_6] : memref<256x48xf32, #tpu.memory_space<vmem>>, vector<256x48xf32>
    %cst = arith.constant dense<0.000000e+00> : vector<256x16xf32>
    %5 = tpu.matmul %4, %1, %cst {dimension_numbers = #tpu.dot_dimension_numbers<[1], [0], [0], [1], [0, 0, 1, 1], [], []>} : vector<256x48xf32>, vector<48x16xf32>, vector<256x16xf32> -> vector<256x16xf32>
    %c0_7 = arith.constant 0 : index
    %c0_8 = arith.constant 0 : index
    %6 = vector.load %arg5[%c0_7, %c0_8] : memref<256x1xf32, #tpu.memory_space<vmem>>, vector<256x1xf32>
    %7 = vector.broadcast %6 : vector<256x1xf32> to vector<256x16xf32>
    %8 = arith.addf %5, %7 : vector<256x16xf32>
    %cst_9 = arith.constant 0.000000e+00 : f32
    %9 = vector.broadcast %cst_9 : f32 to vector<256x16xf32>
    %10 = arith.maximumf %8, %9 : vector<256x16xf32>
    %c0_10 = arith.constant 0 : index
    %c0_11 = arith.constant 0 : index
    %11 = vector.load %arg6[%c0_10, %c0_11] : memref<256x256xf32, #tpu.memory_space<vmem>>, vector<256x256xf32>
    %cst_12 = arith.constant dense<0.000000e+00> : vector<256x16xf32>
    %12 = tpu.matmul %11, %10, %cst_12 {dimension_numbers = #tpu.dot_dimension_numbers<[1], [0], [0], [1], [0, 0, 1, 1], [], []>} : vector<256x256xf32>, vector<256x16xf32>, vector<256x16xf32> -> vector<256x16xf32>
    %c0_13 = arith.constant 0 : index
    %c0_14 = arith.constant 0 : index
    %13 = vector.load %arg7[%c0_13, %c0_14] : memref<256x1xf32, #tpu.memory_space<vmem>>, vector<256x1xf32>
    %14 = vector.broadcast %13 : vector<256x1xf32> to vector<256x16xf32>
    %15 = arith.addf %12, %14 : vector<256x16xf32>
    %cst_15 = arith.constant 0.000000e+00 : f32
    %16 = vector.broadcast %cst_15 : f32 to vector<256x16xf32>
    %17 = arith.maximumf %15, %16 : vector<256x16xf32>
    %c0_16 = arith.constant 0 : index
    %c0_17 = arith.constant 0 : index
    %18 = vector.load %arg8[%c0_16, %c0_17] : memref<16x256xf32, #tpu.memory_space<vmem>>, vector<16x256xf32>
    %cst_18 = arith.constant dense<0.000000e+00> : vector<16x16xf32>
    %19 = tpu.matmul %18, %17, %cst_18 {dimension_numbers = #tpu.dot_dimension_numbers<[1], [0], [0], [1], [0, 0, 1, 1], [], []>} : vector<16x256xf32>, vector<256x16xf32>, vector<16x16xf32> -> vector<16x16xf32>
    %c0_19 = arith.constant 0 : index
    %c0_20 = arith.constant 0 : index
    %20 = vector.load %arg9[%c0_19, %c0_20] : memref<16x1xf32, #tpu.memory_space<vmem>>, vector<16x1xf32>
    %21 = vector.broadcast %20 : vector<16x1xf32> to vector<16x16xf32>
    %22 = arith.addf %19, %21 : vector<16x16xf32>
    %23 = vector.extract_strided_slice %22 {offsets = [0, 0], sizes = [8, 16], strides = [1, 1]} : vector<16x16xf32> to vector<8x16xf32>
    %cst_21 = arith.constant dense<0xFF800000> : vector<16xf32>
    %24 = vector.multi_reduction <maximumf>, %23, %cst_21 [0] : vector<8x16xf32> to vector<16xf32>
    %25 = vector.shape_cast %24 : vector<16xf32> to vector<1x16xf32>
    %26 = vector.extract_strided_slice %22 {offsets = [8, 0], sizes = [8, 16], strides = [1, 1]} : vector<16x16xf32> to vector<8x16xf32>
    %cst_22 = arith.constant dense<0xFF800000> : vector<16xf32>
    %27 = vector.multi_reduction <maximumf>, %26, %cst_22 [0] : vector<8x16xf32> to vector<16xf32>
    %28 = vector.shape_cast %27 : vector<16xf32> to vector<1x16xf32>
    %29 = tpu.concatenate %25, %28 in 0 : vector<1x16xf32>, vector<1x16xf32> -> vector<2x16xf32>
    %c0_23 = arith.constant 0 : index
    %c0_24 = arith.constant 0 : index
    %30 = vector.load %arg10[%c0_23, %c0_24] : memref<256x48xf32, #tpu.memory_space<vmem>>, vector<256x48xf32>
    %cst_25 = arith.constant dense<0.000000e+00> : vector<256x16xf32>
    %31 = tpu.matmul %30, %1, %cst_25 {dimension_numbers = #tpu.dot_dimension_numbers<[1], [0], [0], [1], [0, 0, 1, 1], [], []>} : vector<256x48xf32>, vector<48x16xf32>, vector<256x16xf32> -> vector<256x16xf32>
    %c0_26 = arith.constant 0 : index
    %c0_27 = arith.constant 0 : index
    %32 = vector.load %arg11[%c0_26, %c0_27] : memref<256x1xf32, #tpu.memory_space<vmem>>, vector<256x1xf32>
    %33 = vector.broadcast %32 : vector<256x1xf32> to vector<256x16xf32>
    %34 = arith.addf %31, %33 : vector<256x16xf32>
    %cst_28 = arith.constant 0.000000e+00 : f32
    %35 = vector.broadcast %cst_28 : f32 to vector<256x16xf32>
    %36 = arith.maximumf %34, %35 : vector<256x16xf32>
    %c0_29 = arith.constant 0 : index
    %c0_30 = arith.constant 0 : index
    %37 = vector.load %arg12[%c0_29, %c0_30] : memref<256x256xf32, #tpu.memory_space<vmem>>, vector<256x256xf32>
    %cst_31 = arith.constant dense<0.000000e+00> : vector<256x16xf32>
    %38 = tpu.matmul %37, %36, %cst_31 {dimension_numbers = #tpu.dot_dimension_numbers<[1], [0], [0], [1], [0, 0, 1, 1], [], []>} : vector<256x256xf32>, vector<256x16xf32>, vector<256x16xf32> -> vector<256x16xf32>
    %c0_32 = arith.constant 0 : index
    %c0_33 = arith.constant 0 : index
    %39 = vector.load %arg13[%c0_32, %c0_33] : memref<256x1xf32, #tpu.memory_space<vmem>>, vector<256x1xf32>
    %40 = vector.broadcast %39 : vector<256x1xf32> to vector<256x16xf32>
    %41 = arith.addf %38, %40 : vector<256x16xf32>
    %cst_34 = arith.constant 0.000000e+00 : f32
    %42 = vector.broadcast %cst_34 : f32 to vector<256x16xf32>
    %43 = arith.maximumf %41, %42 : vector<256x16xf32>
    %c0_35 = arith.constant 0 : index
    %c0_36 = arith.constant 0 : index
    %44 = vector.load %arg14[%c0_35, %c0_36] : memref<16x256xf32, #tpu.memory_space<vmem>>, vector<16x256xf32>
    %cst_37 = arith.constant dense<0.000000e+00> : vector<16x16xf32>
    %45 = tpu.matmul %44, %43, %cst_37 {dimension_numbers = #tpu.dot_dimension_numbers<[1], [0], [0], [1], [0, 0, 1, 1], [], []>} : vector<16x256xf32>, vector<256x16xf32>, vector<16x16xf32> -> vector<16x16xf32>
    %c0_38 = arith.constant 0 : index
    %c0_39 = arith.constant 0 : index
    %46 = vector.load %arg15[%c0_38, %c0_39] : memref<16x1xf32, #tpu.memory_space<vmem>>, vector<16x1xf32>
    %47 = vector.broadcast %46 : vector<16x1xf32> to vector<16x16xf32>
    %48 = arith.addf %45, %47 : vector<16x16xf32>
    %49 = vector.extract_strided_slice %48 {offsets = [0, 0], sizes = [8, 16], strides = [1, 1]} : vector<16x16xf32> to vector<8x16xf32>
    %cst_40 = arith.constant dense<0xFF800000> : vector<16xf32>
    %50 = vector.multi_reduction <maximumf>, %49, %cst_40 [0] : vector<8x16xf32> to vector<16xf32>
    %51 = vector.shape_cast %50 : vector<16xf32> to vector<1x16xf32>
    %52 = vector.extract_strided_slice %48 {offsets = [8, 0], sizes = [8, 16], strides = [1, 1]} : vector<16x16xf32> to vector<8x16xf32>
    %cst_41 = arith.constant dense<0xFF800000> : vector<16xf32>
    %53 = vector.multi_reduction <maximumf>, %52, %cst_41 [0] : vector<8x16xf32> to vector<16xf32>
    %54 = vector.shape_cast %53 : vector<16xf32> to vector<1x16xf32>
    %55 = tpu.concatenate %51, %54 in 0 : vector<1x16xf32>, vector<1x16xf32> -> vector<2x16xf32>
    %cst_42 = arith.constant 0.526315808 : f32
    %56 = vector.broadcast %cst_42 : f32 to vector<2x16xf32>
    %57 = arith.mulf %29, %56 : vector<2x16xf32>
    %58 = math.absf %57 : vector<2x16xf32>
    %cst_43 = arith.constant 2.41421366 : f32
    %59 = vector.broadcast %cst_43 : f32 to vector<2x16xf32>
    %60 = arith.cmpf ogt, %58, %59 : vector<2x16xf32>
    %cst_44 = arith.constant 0.414213568 : f32
    %61 = vector.broadcast %cst_44 : f32 to vector<2x16xf32>
    %62 = arith.cmpf ogt, %58, %61 : vector<2x16xf32>
    %cst_45 = arith.constant 1.000000e-30 : f32
    %63 = vector.broadcast %cst_45 : f32 to vector<2x16xf32>
    %64 = arith.maximumf %58, %63 : vector<2x16xf32>
    %cst_46 = arith.constant -1.000000e+00 : f32
    %65 = vector.broadcast %cst_46 : f32 to vector<2x16xf32>
    %66 = arith.divf %65, %64 : vector<2x16xf32>
    %cst_47 = arith.constant 1.000000e+00 : f32
    %67 = vector.broadcast %cst_47 : f32 to vector<2x16xf32>
    %68 = arith.subf %58, %67 : vector<2x16xf32>
    %cst_48 = arith.constant 1.000000e+00 : f32
    %69 = vector.broadcast %cst_48 : f32 to vector<2x16xf32>
    %70 = arith.addf %58, %69 : vector<2x16xf32>
    %71 = arith.divf %68, %70 : vector<2x16xf32>
    %72 = arith.select %62, %71, %58 : vector<2x16xi1>, vector<2x16xf32>
    %73 = arith.select %60, %66, %72 : vector<2x16xi1>, vector<2x16xf32>
    %cst_49 = arith.constant 0.785398185 : f32
    %cst_50 = arith.constant 0.000000e+00 : f32
    %74 = vector.broadcast %cst_49 : f32 to vector<2x16xf32>
    %75 = vector.broadcast %cst_50 : f32 to vector<2x16xf32>
    %76 = arith.select %62, %74, %75 : vector<2x16xi1>, vector<2x16xf32>
    %cst_51 = arith.constant 1.57079637 : f32
    %77 = vector.broadcast %cst_51 : f32 to vector<2x16xf32>
    %78 = arith.select %60, %77, %76 : vector<2x16xi1>, vector<2x16xf32>
    %79 = arith.mulf %73, %73 : vector<2x16xf32>
    %cst_52 = arith.constant 0.0805374458 : f32
    %80 = vector.broadcast %cst_52 : f32 to vector<2x16xf32>
    %81 = arith.mulf %80, %79 : vector<2x16xf32>
    %cst_53 = arith.constant 0.138776854 : f32
    %82 = vector.broadcast %cst_53 : f32 to vector<2x16xf32>
    %83 = arith.subf %81, %82 : vector<2x16xf32>
    %84 = arith.mulf %83, %79 : vector<2x16xf32>
    %cst_54 = arith.constant 0.199777111 : f32
    %85 = vector.broadcast %cst_54 : f32 to vector<2x16xf32>
    %86 = arith.addf %84, %85 : vector<2x16xf32>
    %87 = arith.mulf %86, %79 : vector<2x16xf32>
    %cst_55 = arith.constant 0.333329499 : f32
    %88 = vector.broadcast %cst_55 : f32 to vector<2x16xf32>
    %89 = arith.subf %87, %88 : vector<2x16xf32>
    %90 = arith.mulf %73, %79 : vector<2x16xf32>
    %91 = arith.mulf %90, %89 : vector<2x16xf32>
    %92 = arith.addf %73, %91 : vector<2x16xf32>
    %93 = arith.addf %78, %92 : vector<2x16xf32>
    %cst_56 = arith.constant 0.000000e+00 : f32
    %94 = vector.broadcast %cst_56 : f32 to vector<2x16xf32>
    %95 = arith.cmpf olt, %57, %94 : vector<2x16xf32>
    %cst_57 = arith.constant 0.000000e+00 : f32
    %96 = vector.broadcast %cst_57 : f32 to vector<2x16xf32>
    %97 = arith.subf %96, %93 : vector<2x16xf32>
    %98 = arith.select %95, %97, %93 : vector<2x16xi1>, vector<2x16xf32>
    %cst_58 = arith.constant 1.20957756 : f32
    %99 = vector.broadcast %cst_58 : f32 to vector<2x16xf32>
    %100 = arith.mulf %99, %98 : vector<2x16xf32>
    %101 = arith.addf %3, %55 : vector<2x16xf32>
    %102 = math.exp %100 : vector<2x16xf32>
    %103 = arith.mulf %101, %102 : vector<2x16xf32>
    %c0_59 = arith.constant 0 : index
    %c0_60 = arith.constant 0 : index
    %c0_61 = arith.constant 0 : index
    %104 = vector.load %arg16[%c0_59, %c0_60, %c0_61] : memref<1x2x16xf32, #tpu.memory_space<vmem>>, vector<1x2x16xf32>
    %105 = vector.shape_cast %104 : vector<1x2x16xf32> to vector<2x16xf32>
    %106 = vector.shape_cast %103 : vector<2x16xf32> to vector<1x2x16xf32>
    tpu.vector_store %arg16[%c0_59, %c0_60, %c0_61], %106 {strides = array<i32>} : memref<1x2x16xf32, #tpu.memory_space<vmem>>, vector<1x2x16xf32>,
    %cst_62 = arith.constant dense<0.000000e+00> : vector<2xf32>
    %107 = vector.multi_reduction <add>, %100, %cst_62 [1] : vector<2x16xf32> to vector<2xf32>
    %108 = vector.shape_cast %107 : vector<2xf32> to vector<2x1xf32>
    %cst_63 = arith.constant dense<0.000000e+00> : vector<1xf32>
    %109 = vector.multi_reduction <add>, %108, %cst_63 [0] : vector<2x1xf32> to vector<1xf32>
    %110 = vector.shape_cast %109 : vector<1xf32> to vector<1x1xf32>
    %111 = vector.shape_cast %110 : vector<1x1xf32> to vector<1x1x1x1xf32>
    %112 = vector.shape_cast %111 : vector<1x1x1x1xf32> to vector<1x1x1x1xf32>
    %113 = vector.broadcast %112 : vector<1x1x1x1xf32> to vector<1x1x8x128xf32>
    %c0_64 = arith.constant 0 : index
    %c0_65 = arith.constant 0 : index
    %c0_66 = arith.constant 0 : index
    %c0_67 = arith.constant 0 : index
    %114 = vector.load %arg17[%c0_64, %c0_65, %c0_66, %c0_67] : memref<1x1x8x128xf32, #tpu.memory_space<vmem>>, vector<1x1x8x128xf32>
    tpu.vector_store %arg17[%c0_64, %c0_65, %c0_66, %c0_67], %113 {strides = array<i32>} : memref<1x1x8x128xf32, #tpu.memory_space<vmem>>, vector<1x1x8x128xf32>,
    return
  }
  func.func @transform_0(%arg0: i32, %arg1: i32) -> (i32, i32, i32) {
    %c0_i32 = arith.constant 0 : i32
    %c0_i32_0 = arith.constant 0 : i32
    return %arg0, %c0_i32, %arg1 : i32, i32, i32
  }
  func.func @transform_1(%arg0: i32, %arg1: i32) -> (i32, i32, i32) {
    %c0_i32 = arith.constant 0 : i32
    %c0_i32_0 = arith.constant 0 : i32
    return %arg0, %c0_i32, %arg1 : i32, i32, i32
  }
  func.func @transform_2(%arg0: i32, %arg1: i32) -> (i32, i32) {
    %c0_i32 = arith.constant 0 : i32
    %c0_i32_0 = arith.constant 0 : i32
    %c0_i32_1 = arith.constant 0 : i32
    return %c0_i32, %c0_i32_0 : i32, i32
  }
  func.func @transform_3(%arg0: i32, %arg1: i32) -> (i32, i32) {
    %c0_i32 = arith.constant 0 : i32
    %c0_i32_0 = arith.constant 0 : i32
    %c0_i32_1 = arith.constant 0 : i32
    return %c0_i32, %c0_i32_0 : i32, i32
  }
  func.func @transform_4(%arg0: i32, %arg1: i32) -> (i32, i32) {
    %c0_i32 = arith.constant 0 : i32
    %c0_i32_0 = arith.constant 0 : i32
    %c0_i32_1 = arith.constant 0 : i32
    return %c0_i32, %c0_i32_0 : i32, i32
  }
  func.func @transform_5(%arg0: i32, %arg1: i32) -> (i32, i32) {
    %c0_i32 = arith.constant 0 : i32
    %c0_i32_0 = arith.constant 0 : i32
    %c0_i32_1 = arith.constant 0 : i32
    return %c0_i32, %c0_i32_0 : i32, i32
  }
  func.func @transform_6(%arg0: i32, %arg1: i32) -> (i32, i32) {
    %c0_i32 = arith.constant 0 : i32
    %c0_i32_0 = arith.constant 0 : i32
    %c0_i32_1 = arith.constant 0 : i32
    return %c0_i32, %c0_i32_0 : i32, i32
  }
  func.func @transform_7(%arg0: i32, %arg1: i32) -> (i32, i32) {
    %c0_i32 = arith.constant 0 : i32
    %c0_i32_0 = arith.constant 0 : i32
    %c0_i32_1 = arith.constant 0 : i32
    return %c0_i32, %c0_i32_0 : i32, i32
  }
  func.func @transform_8(%arg0: i32, %arg1: i32) -> (i32, i32) {
    %c0_i32 = arith.constant 0 : i32
    %c0_i32_0 = arith.constant 0 : i32
    %c0_i32_1 = arith.constant 0 : i32
    return %c0_i32, %c0_i32_0 : i32, i32
  }
  func.func @transform_9(%arg0: i32, %arg1: i32) -> (i32, i32) {
    %c0_i32 = arith.constant 0 : i32
    %c0_i32_0 = arith.constant 0 : i32
    %c0_i32_1 = arith.constant 0 : i32
    return %c0_i32, %c0_i32_0 : i32, i32
  }
  func.func @transform_10(%arg0: i32, %arg1: i32) -> (i32, i32) {
    %c0_i32 = arith.constant 0 : i32
    %c0_i32_0 = arith.constant 0 : i32
    %c0_i32_1 = arith.constant 0 : i32
    return %c0_i32, %c0_i32_0 : i32, i32
  }
  func.func @transform_11(%arg0: i32, %arg1: i32) -> (i32, i32) {
    %c0_i32 = arith.constant 0 : i32
    %c0_i32_0 = arith.constant 0 : i32
    %c0_i32_1 = arith.constant 0 : i32
    return %c0_i32, %c0_i32_0 : i32, i32
  }
  func.func @transform_12(%arg0: i32, %arg1: i32) -> (i32, i32) {
    %c0_i32 = arith.constant 0 : i32
    %c0_i32_0 = arith.constant 0 : i32
    %c0_i32_1 = arith.constant 0 : i32
    return %c0_i32, %c0_i32_0 : i32, i32
  }
  func.func @transform_13(%arg0: i32, %arg1: i32) -> (i32, i32) {
    %c0_i32 = arith.constant 0 : i32
    %c0_i32_0 = arith.constant 0 : i32
    %c0_i32_1 = arith.constant 0 : i32
    return %c0_i32, %c0_i32_0 : i32, i32
  }
  func.func @transform_14(%arg0: i32, %arg1: i32) -> (i32, i32, i32) {
    %c0_i32 = arith.constant 0 : i32
    %c0_i32_0 = arith.constant 0 : i32
    return %arg0, %c0_i32, %arg1 : i32, i32, i32
  }
  func.func @transform_15(%arg0: i32, %arg1: i32) -> (i32, i32, i32, i32) {
    %c0_i32 = arith.constant 0 : i32
    %c0_i32_0 = arith.constant 0 : i32
    %c0_i32_1 = arith.constant 0 : i32
    return %arg0, %arg1, %c0_i32, %c0_i32_0 : i32, i32, i32, i32
  }
}

module attributes {stable_mosaic.version = 11 : i64} {
  func.func @_coupling_kernel(%arg0: i32, %arg1: i32, %arg2: memref<1x2x16xf32, #tpu.memory_space<vmem>>, %arg3: memref<1x2x16xf32, #tpu.memory_space<vmem>>, %arg4: memref<32x2xf32, #tpu.memory_space<vmem>>, %arg5: memref<32x1xf32, #tpu.memory_space<vmem>>, %arg6: memref<32x32xf32, #tpu.memory_space<vmem>>, %arg7: memref<32x1xf32, #tpu.memory_space<vmem>>, %arg8: memref<2x32xf32, #tpu.memory_space<vmem>>, %arg9: memref<2x1xf32, #tpu.memory_space<vmem>>, %arg10: memref<32x2xf32, #tpu.memory_space<vmem>>, %arg11: memref<32x1xf32, #tpu.memory_space<vmem>>, %arg12: memref<32x32xf32, #tpu.memory_space<vmem>>, %arg13: memref<32x1xf32, #tpu.memory_space<vmem>>, %arg14: memref<2x32xf32, #tpu.memory_space<vmem>>, %arg15: memref<2x1xf32, #tpu.memory_space<vmem>>, %arg16: memref<1x2x16xf32, #tpu.memory_space<vmem>>, %arg17: memref<1x1x8x128xf32, #tpu.memory_space<vmem>>) attributes {dimension_semantics = [#tpu.dimension_semantics<parallel>, #tpu.dimension_semantics<parallel>], iteration_bounds = array<i64: 2, 1>, scalar_prefetch = 0 : i64, scratch_operands = 0 : i64, tpu.core_type = #tpu.core_type<tc>, window_params = [{transform_indices = @transform_0, window_bounds = array<i64: 1, 2, 16>}, {transform_indices = @transform_1, window_bounds = array<i64: 1, 2, 16>}, {pipeline_mode = #tpu.pipeline_mode<synchronous>, transform_indices = @transform_2, window_bounds = array<i64: 32, 2>}, {pipeline_mode = #tpu.pipeline_mode<synchronous>, transform_indices = @transform_3, window_bounds = array<i64: 32, 1>}, {pipeline_mode = #tpu.pipeline_mode<synchronous>, transform_indices = @transform_4, window_bounds = array<i64: 32, 32>}, {pipeline_mode = #tpu.pipeline_mode<synchronous>, transform_indices = @transform_5, window_bounds = array<i64: 32, 1>}, {pipeline_mode = #tpu.pipeline_mode<synchronous>, transform_indices = @transform_6, window_bounds = array<i64: 2, 32>}, {pipeline_mode = #tpu.pipeline_mode<synchronous>, transform_indices = @transform_7, window_bounds = array<i64: 2, 1>}, {pipeline_mode = #tpu.pipeline_mode<synchronous>, transform_indices = @transform_8, window_bounds = array<i64: 32, 2>}, {pipeline_mode = #tpu.pipeline_mode<synchronous>, transform_indices = @transform_9, window_bounds = array<i64: 32, 1>}, {pipeline_mode = #tpu.pipeline_mode<synchronous>, transform_indices = @transform_10, window_bounds = array<i64: 32, 32>}, {pipeline_mode = #tpu.pipeline_mode<synchronous>, transform_indices = @transform_11, window_bounds = array<i64: 32, 1>}, {pipeline_mode = #tpu.pipeline_mode<synchronous>, transform_indices = @transform_12, window_bounds = array<i64: 2, 32>}, {pipeline_mode = #tpu.pipeline_mode<synchronous>, transform_indices = @transform_13, window_bounds = array<i64: 2, 1>}, {transform_indices = @transform_14, window_bounds = array<i64: 1, 2, 16>}, {transform_indices = @transform_15, window_bounds = array<i64: 1, 1, 8, 128>}]} {
    %c0 = arith.constant 0 : index
    %c0_0 = arith.constant 0 : index
    %c0_1 = arith.constant 0 : index
    %0 = vector.load %arg2[%c0, %c0_0, %c0_1] : memref<1x2x16xf32, #tpu.memory_space<vmem>>, vector<1x2x16xf32>
    %1 = vector.shape_cast %0 : vector<1x2x16xf32> to vector<2x16xf32>
    %c0_2 = arith.constant 0 : index
    %c0_3 = arith.constant 0 : index
    %c0_4 = arith.constant 0 : index
    %2 = vector.load %arg3[%c0_2, %c0_3, %c0_4] : memref<1x2x16xf32, #tpu.memory_space<vmem>>, vector<1x2x16xf32>
    %3 = vector.shape_cast %2 : vector<1x2x16xf32> to vector<2x16xf32>
    %c0_5 = arith.constant 0 : index
    %c0_6 = arith.constant 0 : index
    %4 = vector.load %arg4[%c0_5, %c0_6] : memref<32x2xf32, #tpu.memory_space<vmem>>, vector<32x2xf32>
    %cst = arith.constant dense<0.000000e+00> : vector<32x16xf32>
    %5 = tpu.matmul %4, %1, %cst {dimension_numbers = #tpu.dot_dimension_numbers<[1], [0], [0], [1], [0, 0, 1, 1], [], []>} : vector<32x2xf32>, vector<2x16xf32>, vector<32x16xf32> -> vector<32x16xf32>
    %c0_7 = arith.constant 0 : index
    %c0_8 = arith.constant 0 : index
    %6 = vector.load %arg5[%c0_7, %c0_8] : memref<32x1xf32, #tpu.memory_space<vmem>>, vector<32x1xf32>
    %7 = vector.broadcast %6 : vector<32x1xf32> to vector<32x16xf32>
    %8 = arith.addf %5, %7 : vector<32x16xf32>
    %cst_9 = arith.constant 0.000000e+00 : f32
    %9 = vector.broadcast %cst_9 : f32 to vector<32x16xf32>
    %10 = arith.maximumf %8, %9 : vector<32x16xf32>
    %c0_10 = arith.constant 0 : index
    %c0_11 = arith.constant 0 : index
    %11 = vector.load %arg6[%c0_10, %c0_11] : memref<32x32xf32, #tpu.memory_space<vmem>>, vector<32x32xf32>
    %cst_12 = arith.constant dense<0.000000e+00> : vector<32x16xf32>
    %12 = tpu.matmul %11, %10, %cst_12 {dimension_numbers = #tpu.dot_dimension_numbers<[1], [0], [0], [1], [0, 0, 1, 1], [], []>} : vector<32x32xf32>, vector<32x16xf32>, vector<32x16xf32> -> vector<32x16xf32>
    %c0_13 = arith.constant 0 : index
    %c0_14 = arith.constant 0 : index
    %13 = vector.load %arg7[%c0_13, %c0_14] : memref<32x1xf32, #tpu.memory_space<vmem>>, vector<32x1xf32>
    %14 = vector.broadcast %13 : vector<32x1xf32> to vector<32x16xf32>
    %15 = arith.addf %12, %14 : vector<32x16xf32>
    %cst_15 = arith.constant 0.000000e+00 : f32
    %16 = vector.broadcast %cst_15 : f32 to vector<32x16xf32>
    %17 = arith.maximumf %15, %16 : vector<32x16xf32>
    %c0_16 = arith.constant 0 : index
    %c0_17 = arith.constant 0 : index
    %18 = vector.load %arg8[%c0_16, %c0_17] : memref<2x32xf32, #tpu.memory_space<vmem>>, vector<2x32xf32>
    %cst_18 = arith.constant dense<0.000000e+00> : vector<2x16xf32>
    %19 = tpu.matmul %18, %17, %cst_18 {dimension_numbers = #tpu.dot_dimension_numbers<[1], [0], [0], [1], [0, 0, 1, 1], [], []>} : vector<2x32xf32>, vector<32x16xf32>, vector<2x16xf32> -> vector<2x16xf32>
    %c0_19 = arith.constant 0 : index
    %c0_20 = arith.constant 0 : index
    %20 = vector.load %arg9[%c0_19, %c0_20] : memref<2x1xf32, #tpu.memory_space<vmem>>, vector<2x1xf32>
    %21 = vector.broadcast %20 : vector<2x1xf32> to vector<2x16xf32>
    %22 = arith.addf %19, %21 : vector<2x16xf32>
    %c0_21 = arith.constant 0 : index
    %c0_22 = arith.constant 0 : index
    %23 = vector.load %arg10[%c0_21, %c0_22] : memref<32x2xf32, #tpu.memory_space<vmem>>, vector<32x2xf32>
    %cst_23 = arith.constant dense<0.000000e+00> : vector<32x16xf32>
    %24 = tpu.matmul %23, %1, %cst_23 {dimension_numbers = #tpu.dot_dimension_numbers<[1], [0], [0], [1], [0, 0, 1, 1], [], []>} : vector<32x2xf32>, vector<2x16xf32>, vector<32x16xf32> -> vector<32x16xf32>
    %c0_24 = arith.constant 0 : index
    %c0_25 = arith.constant 0 : index
    %25 = vector.load %arg11[%c0_24, %c0_25] : memref<32x1xf32, #tpu.memory_space<vmem>>, vector<32x1xf32>
    %26 = vector.broadcast %25 : vector<32x1xf32> to vector<32x16xf32>
    %27 = arith.addf %24, %26 : vector<32x16xf32>
    %cst_26 = arith.constant 0.000000e+00 : f32
    %28 = vector.broadcast %cst_26 : f32 to vector<32x16xf32>
    %29 = arith.maximumf %27, %28 : vector<32x16xf32>
    %c0_27 = arith.constant 0 : index
    %c0_28 = arith.constant 0 : index
    %30 = vector.load %arg12[%c0_27, %c0_28] : memref<32x32xf32, #tpu.memory_space<vmem>>, vector<32x32xf32>
    %cst_29 = arith.constant dense<0.000000e+00> : vector<32x16xf32>
    %31 = tpu.matmul %30, %29, %cst_29 {dimension_numbers = #tpu.dot_dimension_numbers<[1], [0], [0], [1], [0, 0, 1, 1], [], []>} : vector<32x32xf32>, vector<32x16xf32>, vector<32x16xf32> -> vector<32x16xf32>
    %c0_30 = arith.constant 0 : index
    %c0_31 = arith.constant 0 : index
    %32 = vector.load %arg13[%c0_30, %c0_31] : memref<32x1xf32, #tpu.memory_space<vmem>>, vector<32x1xf32>
    %33 = vector.broadcast %32 : vector<32x1xf32> to vector<32x16xf32>
    %34 = arith.addf %31, %33 : vector<32x16xf32>
    %cst_32 = arith.constant 0.000000e+00 : f32
    %35 = vector.broadcast %cst_32 : f32 to vector<32x16xf32>
    %36 = arith.maximumf %34, %35 : vector<32x16xf32>
    %c0_33 = arith.constant 0 : index
    %c0_34 = arith.constant 0 : index
    %37 = vector.load %arg14[%c0_33, %c0_34] : memref<2x32xf32, #tpu.memory_space<vmem>>, vector<2x32xf32>
    %cst_35 = arith.constant dense<0.000000e+00> : vector<2x16xf32>
    %38 = tpu.matmul %37, %36, %cst_35 {dimension_numbers = #tpu.dot_dimension_numbers<[1], [0], [0], [1], [0, 0, 1, 1], [], []>} : vector<2x32xf32>, vector<32x16xf32>, vector<2x16xf32> -> vector<2x16xf32>
    %c0_36 = arith.constant 0 : index
    %c0_37 = arith.constant 0 : index
    %39 = vector.load %arg15[%c0_36, %c0_37] : memref<2x1xf32, #tpu.memory_space<vmem>>, vector<2x1xf32>
    %40 = vector.broadcast %39 : vector<2x1xf32> to vector<2x16xf32>
    %41 = arith.addf %38, %40 : vector<2x16xf32>
    %cst_38 = arith.constant 0.526315808 : f32
    %42 = vector.broadcast %cst_38 : f32 to vector<2x16xf32>
    %43 = arith.mulf %22, %42 : vector<2x16xf32>
    %44 = math.absf %43 : vector<2x16xf32>
    %cst_39 = arith.constant 2.41421366 : f32
    %45 = vector.broadcast %cst_39 : f32 to vector<2x16xf32>
    %46 = arith.cmpf ogt, %44, %45 : vector<2x16xf32>
    %cst_40 = arith.constant 0.414213568 : f32
    %47 = vector.broadcast %cst_40 : f32 to vector<2x16xf32>
    %48 = arith.cmpf ogt, %44, %47 : vector<2x16xf32>
    %cst_41 = arith.constant 1.000000e-30 : f32
    %49 = vector.broadcast %cst_41 : f32 to vector<2x16xf32>
    %50 = arith.maximumf %44, %49 : vector<2x16xf32>
    %cst_42 = arith.constant -1.000000e+00 : f32
    %51 = vector.broadcast %cst_42 : f32 to vector<2x16xf32>
    %52 = arith.divf %51, %50 : vector<2x16xf32>
    %cst_43 = arith.constant 1.000000e+00 : f32
    %53 = vector.broadcast %cst_43 : f32 to vector<2x16xf32>
    %54 = arith.subf %44, %53 : vector<2x16xf32>
    %cst_44 = arith.constant 1.000000e+00 : f32
    %55 = vector.broadcast %cst_44 : f32 to vector<2x16xf32>
    %56 = arith.addf %44, %55 : vector<2x16xf32>
    %57 = arith.divf %54, %56 : vector<2x16xf32>
    %58 = arith.select %48, %57, %44 : vector<2x16xi1>, vector<2x16xf32>
    %59 = arith.select %46, %52, %58 : vector<2x16xi1>, vector<2x16xf32>
    %cst_45 = arith.constant 0.785398185 : f32
    %cst_46 = arith.constant 0.000000e+00 : f32
    %60 = vector.broadcast %cst_45 : f32 to vector<2x16xf32>
    %61 = vector.broadcast %cst_46 : f32 to vector<2x16xf32>
    %62 = arith.select %48, %60, %61 : vector<2x16xi1>, vector<2x16xf32>
    %cst_47 = arith.constant 1.57079637 : f32
    %63 = vector.broadcast %cst_47 : f32 to vector<2x16xf32>
    %64 = arith.select %46, %63, %62 : vector<2x16xi1>, vector<2x16xf32>
    %65 = arith.mulf %59, %59 : vector<2x16xf32>
    %cst_48 = arith.constant 0.0805374458 : f32
    %66 = vector.broadcast %cst_48 : f32 to vector<2x16xf32>
    %67 = arith.mulf %66, %65 : vector<2x16xf32>
    %cst_49 = arith.constant 0.138776854 : f32
    %68 = vector.broadcast %cst_49 : f32 to vector<2x16xf32>
    %69 = arith.subf %67, %68 : vector<2x16xf32>
    %70 = arith.mulf %69, %65 : vector<2x16xf32>
    %cst_50 = arith.constant 0.199777111 : f32
    %71 = vector.broadcast %cst_50 : f32 to vector<2x16xf32>
    %72 = arith.addf %70, %71 : vector<2x16xf32>
    %73 = arith.mulf %72, %65 : vector<2x16xf32>
    %cst_51 = arith.constant 0.333329499 : f32
    %74 = vector.broadcast %cst_51 : f32 to vector<2x16xf32>
    %75 = arith.subf %73, %74 : vector<2x16xf32>
    %76 = arith.mulf %59, %65 : vector<2x16xf32>
    %77 = arith.mulf %76, %75 : vector<2x16xf32>
    %78 = arith.addf %59, %77 : vector<2x16xf32>
    %79 = arith.addf %64, %78 : vector<2x16xf32>
    %cst_52 = arith.constant 0.000000e+00 : f32
    %80 = vector.broadcast %cst_52 : f32 to vector<2x16xf32>
    %81 = arith.cmpf olt, %43, %80 : vector<2x16xf32>
    %cst_53 = arith.constant 0.000000e+00 : f32
    %82 = vector.broadcast %cst_53 : f32 to vector<2x16xf32>
    %83 = arith.subf %82, %79 : vector<2x16xf32>
    %84 = arith.select %81, %83, %79 : vector<2x16xi1>, vector<2x16xf32>
    %cst_54 = arith.constant 1.20957756 : f32
    %85 = vector.broadcast %cst_54 : f32 to vector<2x16xf32>
    %86 = arith.mulf %85, %84 : vector<2x16xf32>
    %87 = arith.addf %3, %41 : vector<2x16xf32>
    %88 = math.exp %86 : vector<2x16xf32>
    %89 = arith.mulf %87, %88 : vector<2x16xf32>
    %c0_55 = arith.constant 0 : index
    %c0_56 = arith.constant 0 : index
    %c0_57 = arith.constant 0 : index
    %90 = vector.load %arg16[%c0_55, %c0_56, %c0_57] : memref<1x2x16xf32, #tpu.memory_space<vmem>>, vector<1x2x16xf32>
    %91 = vector.shape_cast %90 : vector<1x2x16xf32> to vector<2x16xf32>
    %92 = vector.shape_cast %89 : vector<2x16xf32> to vector<1x2x16xf32>
    tpu.vector_store %arg16[%c0_55, %c0_56, %c0_57], %92 {strides = array<i32>} : memref<1x2x16xf32, #tpu.memory_space<vmem>>, vector<1x2x16xf32>,
    %cst_58 = arith.constant dense<0.000000e+00> : vector<2xf32>
    %93 = vector.multi_reduction <add>, %86, %cst_58 [1] : vector<2x16xf32> to vector<2xf32>
    %94 = vector.shape_cast %93 : vector<2xf32> to vector<2x1xf32>
    %cst_59 = arith.constant dense<0.000000e+00> : vector<1xf32>
    %95 = vector.multi_reduction <add>, %94, %cst_59 [0] : vector<2x1xf32> to vector<1xf32>
    %96 = vector.shape_cast %95 : vector<1xf32> to vector<1x1xf32>
    %97 = vector.shape_cast %96 : vector<1x1xf32> to vector<1x1x1x1xf32>
    %98 = vector.shape_cast %97 : vector<1x1x1x1xf32> to vector<1x1x1x1xf32>
    %99 = vector.broadcast %98 : vector<1x1x1x1xf32> to vector<1x1x8x128xf32>
    %c0_60 = arith.constant 0 : index
    %c0_61 = arith.constant 0 : index
    %c0_62 = arith.constant 0 : index
    %c0_63 = arith.constant 0 : index
    %100 = vector.load %arg17[%c0_60, %c0_61, %c0_62, %c0_63] : memref<1x1x8x128xf32, #tpu.memory_space<vmem>>, vector<1x1x8x128xf32>
    tpu.vector_store %arg17[%c0_60, %c0_61, %c0_62, %c0_63], %99 {strides = array<i32>} : memref<1x1x8x128xf32, #tpu.memory_space<vmem>>, vector<1x1x8x128xf32>,
    return
  }
  func.func @transform_0(%arg0: i32, %arg1: i32) -> (i32, i32, i32) {
    %c0_i32 = arith.constant 0 : i32
    %c0_i32_0 = arith.constant 0 : i32
    return %arg0, %c0_i32, %arg1 : i32, i32, i32
  }
  func.func @transform_1(%arg0: i32, %arg1: i32) -> (i32, i32, i32) {
    %c0_i32 = arith.constant 0 : i32
    %c0_i32_0 = arith.constant 0 : i32
    return %arg0, %c0_i32, %arg1 : i32, i32, i32
  }
  func.func @transform_2(%arg0: i32, %arg1: i32) -> (i32, i32) {
    %c0_i32 = arith.constant 0 : i32
    %c0_i32_0 = arith.constant 0 : i32
    %c0_i32_1 = arith.constant 0 : i32
    return %c0_i32, %c0_i32_0 : i32, i32
  }
  func.func @transform_3(%arg0: i32, %arg1: i32) -> (i32, i32) {
    %c0_i32 = arith.constant 0 : i32
    %c0_i32_0 = arith.constant 0 : i32
    %c0_i32_1 = arith.constant 0 : i32
    return %c0_i32, %c0_i32_0 : i32, i32
  }
  func.func @transform_4(%arg0: i32, %arg1: i32) -> (i32, i32) {
    %c0_i32 = arith.constant 0 : i32
    %c0_i32_0 = arith.constant 0 : i32
    %c0_i32_1 = arith.constant 0 : i32
    return %c0_i32, %c0_i32_0 : i32, i32
  }
  func.func @transform_5(%arg0: i32, %arg1: i32) -> (i32, i32) {
    %c0_i32 = arith.constant 0 : i32
    %c0_i32_0 = arith.constant 0 : i32
    %c0_i32_1 = arith.constant 0 : i32
    return %c0_i32, %c0_i32_0 : i32, i32
  }
  func.func @transform_6(%arg0: i32, %arg1: i32) -> (i32, i32) {
    %c0_i32 = arith.constant 0 : i32
    %c0_i32_0 = arith.constant 0 : i32
    %c0_i32_1 = arith.constant 0 : i32
    return %c0_i32, %c0_i32_0 : i32, i32
  }
  func.func @transform_7(%arg0: i32, %arg1: i32) -> (i32, i32) {
    %c0_i32 = arith.constant 0 : i32
    %c0_i32_0 = arith.constant 0 : i32
    %c0_i32_1 = arith.constant 0 : i32
    return %c0_i32, %c0_i32_0 : i32, i32
  }
  func.func @transform_8(%arg0: i32, %arg1: i32) -> (i32, i32) {
    %c0_i32 = arith.constant 0 : i32
    %c0_i32_0 = arith.constant 0 : i32
    %c0_i32_1 = arith.constant 0 : i32
    return %c0_i32, %c0_i32_0 : i32, i32
  }
  func.func @transform_9(%arg0: i32, %arg1: i32) -> (i32, i32) {
    %c0_i32 = arith.constant 0 : i32
    %c0_i32_0 = arith.constant 0 : i32
    %c0_i32_1 = arith.constant 0 : i32
    return %c0_i32, %c0_i32_0 : i32, i32
  }
  func.func @transform_10(%arg0: i32, %arg1: i32) -> (i32, i32) {
    %c0_i32 = arith.constant 0 : i32
    %c0_i32_0 = arith.constant 0 : i32
    %c0_i32_1 = arith.constant 0 : i32
    return %c0_i32, %c0_i32_0 : i32, i32
  }
  func.func @transform_11(%arg0: i32, %arg1: i32) -> (i32, i32) {
    %c0_i32 = arith.constant 0 : i32
    %c0_i32_0 = arith.constant 0 : i32
    %c0_i32_1 = arith.constant 0 : i32
    return %c0_i32, %c0_i32_0 : i32, i32
  }
  func.func @transform_12(%arg0: i32, %arg1: i32) -> (i32, i32) {
    %c0_i32 = arith.constant 0 : i32
    %c0_i32_0 = arith.constant 0 : i32
    %c0_i32_1 = arith.constant 0 : i32
    return %c0_i32, %c0_i32_0 : i32, i32
  }
  func.func @transform_13(%arg0: i32, %arg1: i32) -> (i32, i32) {
    %c0_i32 = arith.constant 0 : i32
    %c0_i32_0 = arith.constant 0 : i32
    %c0_i32_1 = arith.constant 0 : i32
    return %c0_i32, %c0_i32_0 : i32, i32
  }
  func.func @transform_14(%arg0: i32, %arg1: i32) -> (i32, i32, i32) {
    %c0_i32 = arith.constant 0 : i32
    %c0_i32_0 = arith.constant 0 : i32
    return %arg0, %c0_i32, %arg1 : i32, i32, i32
  }
  func.func @transform_15(%arg0: i32, %arg1: i32) -> (i32, i32, i32, i32) {
    %c0_i32 = arith.constant 0 : i32
    %c0_i32_0 = arith.constant 0 : i32
    %c0_i32_1 = arith.constant 0 : i32
    return %arg0, %arg1, %c0_i32, %c0_i32_0 : i32, i32, i32, i32
  }
}

</mosaic_0001>

<llo_original>
// kernel: flow_assembly_forward.3
$region0: #{flow_assembly_forward.3}
  #allocation0 [shape = 'u32[]', space=smem, size = 0x4, offset = 0x4, fixed_abs, tag = 'smem constant byte address 0x4 - core index']
  #allocation1 [shape = 'u32[72,128]{1,0:T(1,128)}', space=vmem, size = 0x9000, scoped, tag = 'internal scratch']
  %s0 = inlined_call_operand.hbm [shape: f32[2,4,16], index: 0, kind: input, shape index: {}]
  %s1 = inlined_call_operand.hbm [shape: f32[4,4], index: 1, kind: input, shape index: {}]
  %s2 = inlined_call_operand.vmem [shape: f32[4,1], index: 2, kind: input, shape index: {}]
  %s3 = inlined_call_operand.vmem [shape: f32[4,1], index: 3, kind: input, shape index: {}]
  %s4 = inlined_call_operand.vmem [shape: f32[2,2,16], index: 4, kind: output, shape index: {0}]
  %s5 = inlined_call_operand.vmem [shape: f32[2,2,16], index: 5, kind: output, shape index: {1}]
  %6 = xla_tuple %s4, %s5
  %s7 = sld [smem:[#allocation0]]
  $region65: #{flow_assembly_forward.3} parent=0
    _
  %s9 = ssub.s32 1, %s7
  %s10 = scalar_select 0, %s9, %s7
  $region1: #{flow_assembly_forward.3} parent=0
    #allocation2 [shape = 'u8[4096]{0}', space=vmem, size = 0x1000, scoped, tag = 'input window, operand 0']
    #allocation3 [shape = 's32[2]{0}', space=sflag, size = 0x8, scoped, tag = 'scoped memory for flow_assembly_forward.3']
    #allocation4 [shape = 'u8[2048]{0}', space=vmem, size = 0x800, scoped, tag = 'input window, operand 1, single buffered']
    #allocation5 [shape = 's32[1]{0}', space=sflag, size = 0x4, scoped, tag = 'scoped memory for flow_assembly_forward.3']
    %11 = vsyncpa [#allocation3], 0
    %s12 = scalar_lea.sflag [#allocation3], 1
    %13 = vsyncpa %s12, 0
    %14 = vsyncpa [#allocation5], 0
    loop: start=0, step=1, limit=4
    $region2: #{flow_assembly_forward.3} parent=1 // loop_pre_header
      _
    $region3: #{flow_assembly_forward.3} parent=1 // loop_header
      %s16 = sphi 0, %s20
      %p17 = scmp.ge.s32.totalorder %s16, 4
      %s23 = sphi 0, %s35
      %s24 = sphi 0, %s31
      %s25 = sphi 0, %s23
      %s26 = sphi 0, %s24
      %s27 = sphi 0, %s25
      %s28 = sphi 0, %s26
      %s40 = sphi 0, %s42
      %s43 = sphi 0, %s40
      %s44 = sphi 0, %s43
      %s60 = sphi 0, %s44
      %s64 = sphi 0, %s64
      %s66 = sphi 0, %s64
      %s67 = sphi 0, %s66
      %s81 = sphi 0, %s67
      %s85 = sphi 0, %s85
      %s87 = sphi 0, %s85
      %s88 = sphi 0, %s87
      %s102 = sphi 0, %s88
      %s106 = sphi 0, %s106
      %s108 = sphi 0, %s106
      %s109 = sphi 0, %s108
      %s123 = sphi 0, %s109
      %s131 = sphi 0, %s133
      %s134 = sphi 0, %s131
      %s135 = sphi 0, %s134
      %s151 = sphi 0, %s135
      %s159 = sphi 0, %s161
      %s162 = sphi 0, %s159
      %s163 = sphi 0, %s162
      %s179 = sphi 0, %s163
    $region4: #{flow_assembly_forward.3} parent=1 // loop_header_branch
      %19 = sbr.rel (%p17) target = $region8
    $region5: #{flow_assembly_forward.3} parent=1 // loop_body
      %s21 = ssub.s32 %s16, 1
      %s22 = ssub.s32 %s16, 2
      %s29 = sadd.s32 1, %s24
      %p30 = scmp.ge.s32.totalorder %s29, 1
      %s31 = scalar_select %p30, 0, %s29
      %s32 = sadd.s32 1, %s23
      %s33 = scalar_select %p30, %s32, %s23
      %p34 = scmp.ge.s32.totalorder %s33, 2
      %s35 = scalar_select %p34, 0, %s33
      %s36 = ssub.s32 %s23, %s35
      %s37 = ssub.s32 %s24, %s31
      %s38 = sor.u32 %s36, %s37
      %p39 = scmp.eq.s32.totalorder %s38, 0
      %s41 = sadd.s32 %s40, 1
      %s42 = scalar_select %p39, %s40, %s41
      %p45 = pneg %p39
      %p46 = scmp.eq.s32.totalorder %s16, 1
      %p47 = por %p45, %p46
      %p48 = scmp.ne.s32.totalorder %s40, %s43
      %p49 = scmp.eq.s32.totalorder %s16, 0
      %p50 = por %p48, %p49
      %p51 = scmp.ne.s32.totalorder %s40, %s43
      %p52 = scmp.eq.s32.totalorder %s21, 1
      %p53 = por %p51, %p52
      %p54 = scmp.ne.s32.totalorder %s43, %s44
      %p55 = scmp.eq.s32.totalorder %s21, 0
      %p56 = por %p54, %p55
      %p57 = scmp.ne.s32.totalorder %s43, %s44
      %p58 = scmp.eq.s32.totalorder %s22, 1
      %p59 = por %p57, %p58
      %p61 = scmp.ne.s32.totalorder %s44, %s60
      %p62 = scmp.eq.s32.totalorder %s22, 0
      %p63 = por %p61, %p62
      %s65 = sadd.s32 %s64, 1
      %p68 = scmp.eq.s32.totalorder %s16, 1
      %p69 = scmp.ne.s32.totalorder %s64, %s66
      %p70 = scmp.eq.s32.totalorder %s16, 0
      %p71 = por %p69, %p70
      %p72 = scmp.ne.s32.totalorder %s64, %s66
      %p73 = scmp.eq.s32.totalorder %s21, 1
      %p74 = por %p72, %p73
      %p75 = scmp.ne.s32.totalorder %s66, %s67
      %p76 = scmp.eq.s32.totalorder %s21, 0
      %p77 = por %p75, %p76
      %p78 = scmp.ne.s32.totalorder %s66, %s67
      %p79 = scmp.eq.s32.totalorder %s22, 1
      %p80 = por %p78, %p79
      %p82 = scmp.ne.s32.totalorder %s67, %s81
      %p83 = scmp.eq.s32.totalorder %s22, 0
      %p84 = por %p82, %p83
      %s86 = sadd.s32 %s85, 1
      %p89 = scmp.eq.s32.totalorder %s16, 1
      %p90 = scmp.ne.s32.totalorder %s85, %s87
      %p91 = scmp.eq.s32.totalorder %s16, 0
      %p92 = por %p90, %p91
      %p93 = scmp.ne.s32.totalorder %s85, %s87
      %p94 = scmp.eq.s32.totalorder %s21, 1
      %p95 = por %p93, %p94
      %p96 = scmp.ne.s32.totalorder %s87, %s88
      %p97 = scmp.eq.s32.totalorder %s21, 0
      %p98 = por %p96, %p97
      %p99 = scmp.ne.s32.totalorder %s87, %s88
      %p100 = scmp.eq.s32.totalorder %s22, 1
      %p101 = por %p99, %p100
      %p103 = scmp.ne.s32.totalorder %s88, %s102
      %p104 = scmp.eq.s32.totalorder %s22, 0
      %p105 = por %p103, %p104
      %s107 = sadd.s32 %s106, 1
      %p110 = scmp.eq.s32.totalorder %s16, 1
      %p111 = scmp.ne.s32.totalorder %s106, %s108
      %p112 = scmp.eq.s32.totalorder %s16, 0
      %p113 = por %p111, %p112
      %p114 = scmp.ne.s32.totalorder %s106, %s108
      %p115 = scmp.eq.s32.totalorder %s21, 1
      %p116 = por %p114, %p115
      %p117 = scmp.ne.s32.totalorder %s108, %s109
      %p118 = scmp.eq.s32.totalorder %s21, 0
      %p119 = por %p117, %p118
      %p120 = scmp.ne.s32.totalorder %s108, %s109
      %p121 = scmp.eq.s32.totalorder %s22, 1
      %p122 = por %p120, %p121
      %p124 = scmp.ne.s32.totalorder %s109, %s123
      %p125 = scmp.eq.s32.totalorder %s22, 0
      %p126 = por %p124, %p125
      %s127 = ssub.s32 %s23, %s35
      %s128 = ssub.s32 %s24, %s31
      %s129 = sor.u32 %s127, %s128
      %p130 = scmp.eq.s32.totalorder %s129, 0
      %s132 = sadd.s32 %s131, 1
      %s133 = scalar_select %p130, %s131, %s132
      %p136 = pneg %p130
      %p137 = scmp.eq.s32.totalorder %s16, 1
      %p138 = por %p136, %p137
      %p139 = scmp.ne.s32.totalorder %s131, %s134
      %p140 = scmp.eq.s32.totalorder %s16, 0
      %p141 = por %p139, %p140
      %p142 = scmp.ne.s32.totalorder %s131, %s134
      %p143 = scmp.eq.s32.totalorder %s21, 1
      %p144 = por %p142, %p143
      %p145 = scmp.ne.s32.totalorder %s134, %s135
      %p146 = scmp.eq.s32.totalorder %s21, 0
      %p147 = por %p145, %p146
      %p148 = scmp.ne.s32.totalorder %s134, %s135
      %p149 = scmp.eq.s32.totalorder %s22, 1
      %p150 = por %p148, %p149
      %p152 = scmp.ne.s32.totalorder %s135, %s151
      %p153 = scmp.eq.s32.totalorder %s22, 0
      %p154 = por %p152, %p153
      %s155 = ssub.s32 %s23, %s35
      %s156 = ssub.s32 %s24, %s31
      %s157 = sor.u32 %s155, %s156
      %p158 = scmp.eq.s32.totalorder %s157, 0
      %s160 = sadd.s32 %s159, 1
      %s161 = scalar_select %p158, %s159, %s160
      %p164 = pneg %p158
      %p165 = scmp.eq.s32.totalorder %s16, 1
      %p166 = por %p164, %p165
      %p167 = scmp.ne.s32.totalorder %s159, %s162
      %p168 = scmp.eq.s32.totalorder %s16, 0
      %p169 = por %p167, %p168
      %p170 = scmp.ne.s32.totalorder %s159, %s162
      %p171 = scmp.eq.s32.totalorder %s21, 1
      %p172 = por %p170, %p171
      %p173 = scmp.ne.s32.totalorder %s162, %s163
      %p174 = scmp.eq.s32.totalorder %s21, 0
      %p175 = por %p173, %p174
      %p176 = scmp.ne.s32.totalorder %s162, %s163
      %p177 = scmp.eq.s32.totalorder %s22, 1
      %p178 = por %p176, %p177
      %p180 = scmp.ne.s32.totalorder %s163, %s179
      %p181 = scmp.eq.s32.totalorder %s22, 0
      %p182 = por %p180, %p181
      %p183 = scmp.le.s32.totalorder 1, %s16
      %p184 = scmp.lt.s32.totalorder %s16, 3
      %p185 = pnand %p183, %p184
      %p186 = pneg %p185
      // Predicated region
      $region9: #{flow_assembly_forward.3} parent=5 // pred_check
        _
      $region10: #{flow_assembly_forward.3} parent=5 // pred_check_branch
        %188 = sbr.rel (%p185) target = $region12
      $region11: #{flow_assembly_forward.3} parent=5 // pred_region
        %s189 = ssub.s32 %s16, 1
        // Predicated region
        $region13: #{flow_assembly_forward.3} parent=11 // pred_check
          %p190 = pneg %p77
        $region14: #{flow_assembly_forward.3} parent=11 // pred_check_branch
          %192 = sbr.rel (%p190) target = $region16
        $region15: #{flow_assembly_forward.3} parent=11 // pred_region
          %194 = vsyncadd [#allocation5], 0
          %s196 = sshll.u32 %s1, 4
          %s197 = int_to_ptr.hbm [resolvable:$true] %s196
          %s198 = sshll.u32 [#allocation4], 4
          %s199 = int_to_ptr.vmem [resolvable:$true] %s198
          %201 = dma.hbm_to_vmem [thread:$0]  %s197, 64, %s199, [#allocation5]
        $region16: #{flow_assembly_forward.3} parent=11 // pred_fallthru
          _
        // Predicated region
        $region17: #{flow_assembly_forward.3} parent=11 // pred_check
          %p202 = pneg %p98
        $region18: #{flow_assembly_forward.3} parent=11 // pred_check_branch
          %204 = sbr.rel (%p202) target = $region20
        $region19: #{flow_assembly_forward.3} parent=11 // pred_region
          _
        $region20: #{flow_assembly_forward.3} parent=11 // pred_fallthru
          _
        // Predicated region
        $region21: #{flow_assembly_forward.3} parent=11 // pred_check
          %p205 = pneg %p119
        $region22: #{flow_assembly_forward.3} parent=11 // pred_check_branch
          %207 = sbr.rel (%p205) target = $region24
        $region23: #{flow_assembly_forward.3} parent=11 // pred_region
          _
        $region24: #{flow_assembly_forward.3} parent=11 // pred_fallthru
          _
      $region12: #{flow_assembly_forward.3} parent=5 // pred_fallthru
        _
      %p208 = scmp.lt.s32.totalorder %s16, 2
      // Predicated region
      $region25: #{flow_assembly_forward.3} parent=5 // pred_check
        %p209 = pneg %p208
      $region26: #{flow_assembly_forward.3} parent=5 // pred_check_branch
        %211 = sbr.rel (%p209) target = $region28
      $region27: #{flow_assembly_forward.3} parent=5 // pred_region
        // Predicated region
        $region29: #{flow_assembly_forward.3} parent=27 // pred_check
          %p212 = pneg %p50
        $region30: #{flow_assembly_forward.3} parent=27 // pred_check_branch
          %214 = sbr.rel (%p212) target = $region32
        $region31: #{flow_assembly_forward.3} parent=27 // pred_region
          %s215 = sand.u32 %s40, 1
          %s216 = scalar_lea.sflag [#allocation3], %s215
          %s217 = sand.u32 %s40, 1
          %s218 = smul.addr %s217, 4
          %s219 = scalar_lea.vmem [#allocation2], %s218
          %221 = vsyncadd %s216, 0
          %s222 = sadd.s32 %s24, %s23
          %s223 = smul.addr %s222, 4
          %s224 = scalar_lea.hbm %s0, %s223
          %s226 = sshll.u32 %s224, 4
          %s227 = int_to_ptr.hbm [resolvable:$true] %s226
          %s228 = sshll.u32 %s219, 4
          %s229 = int_to_ptr.vmem [resolvable:$true] %s228
          %231 = dma.hbm_to_vmem [thread:$0]  %s227, 64, %s229, %s216
        $region32: #{flow_assembly_forward.3} parent=27 // pred_fallthru
          _
      $region28: #{flow_assembly_forward.3} parent=5 // pred_fallthru
        _
      %p232 = scmp.le.s32.totalorder 1, %s16
      %p233 = scmp.lt.s32.totalorder %s16, 3
      %p234 = pnand %p232, %p233
      %p235 = pneg %p234
      // Predicated region
      $region33: #{flow_assembly_forward.3} parent=5 // pred_check
        _
      $region34: #{flow_assembly_forward.3} parent=5 // pred_check_branch
        %237 = sbr.rel (%p234) target = $region36
      $region35: #{flow_assembly_forward.3} parent=5 // pred_region
        %s238 = ssub.s32 %s16, 1
        %s239 = sand.u32 %s43, 1
        %s240 = scalar_lea.sflag [#allocation3], %s239
        %s241 = sand.u32 %s43, 1
        %s242 = smul.addr %s241, 4
        %s243 = scalar_lea.vmem [#allocation2], %s242
        // Predicated region
        $region37: #{flow_assembly_forward.3} parent=35 // pred_check
          %p244 = pneg %p56
        $region38: #{flow_assembly_forward.3} parent=35 // pred_check_branch
          %246 = sbr.rel (%p244) target = $region40
        $region39: #{flow_assembly_forward.3} parent=35 // pred_region
          %248 = dma.done %s240, 64
        $region40: #{flow_assembly_forward.3} parent=35 // pred_fallthru
          _
        // Predicated region
        $region41: #{flow_assembly_forward.3} parent=35 // pred_check
          %p249 = pneg %p77
        $region42: #{flow_assembly_forward.3} parent=35 // pred_check_branch
          %251 = sbr.rel (%p249) target = $region44
        $region43: #{flow_assembly_forward.3} parent=35 // pred_region
          %253 = dma.done [#allocation5], 64
        $region44: #{flow_assembly_forward.3} parent=35 // pred_fallthru
          _
        %s254 = sand.u32 %s43, 1
        %s255 = scalar_lea.sflag [#allocation3], %s254
        %s256 = sand.u32 %s43, 1
        %s257 = smul.addr %s256, 4
        %s258 = scalar_lea.vmem [#allocation2], %s257
        %p259 = pneg %p56
        %p260 = pneg %p53
        %p261 = pneg %p77
        %p262 = pneg %p74
        %p263 = pneg %p98
        %p264 = pneg %p95
        %p265 = pneg %p119
        %p266 = pneg %p116
        %p267 = pneg %p147
        %p268 = pneg %p144
        %p269 = scmp.lt.s32.totalorder %s25, 1
        %s270 = scalar_select %p269, %s25, 1
        %p271 = scmp.lt.s32.totalorder %s26, 0
        %s272 = scalar_select %p271, %s26, 0
        %s273 = sadd.s32 %s272, %s270
        %s274 = smul.addr %s273, 2
        %s275 = scalar_lea.vmem %s4, %s274
        %p276 = pneg %p175
        %p277 = pneg %p172
        %p278 = scmp.lt.s32.totalorder %s25, 1
        %s279 = scalar_select %p278, %s25, 1
        %p280 = scmp.lt.s32.totalorder %s26, 0
        %s281 = scalar_select %p280, %s26, 0
        %s282 = sadd.s32 %s281, %s279
        %s283 = smul.addr %s282, 2
        %s284 = scalar_lea.vmem %s5, %s283
        %p285 = scmp.lt.s32.totalorder %s25, 1
        %s286 = scalar_select %p285, %s25, 1
        %p287 = scmp.lt.s32.totalorder %s26, 0
        %s288 = scalar_select %p287, %s26, 0
        %s289 = sadd.s32 %s288, %s286
        %s290 = smul.addr %s289, 2
        %s291 = scalar_lea.vmem %s4, %s290
        %p292 = scmp.lt.s32.totalorder %s25, 1
        %s293 = scalar_select %p292, %s25, 1
        %p294 = scmp.lt.s32.totalorder %s26, 0
        %s295 = scalar_select %p294, %s26, 0
        %s296 = sadd.s32 %s295, %s293
        %s297 = smul.addr %s296, 2
        %s298 = scalar_lea.vmem %s5, %s297
        %v299 = vld [vmem:[%s243] sm:$0xf]
        %v300 = vld [vmem:[#allocation4] sm:$0xf]
        %302 = vset.pattern.permute.xlu0 0
        %303 = vperm.xlu0 %302, %v300
        %v304 = vpop.permute.xlu0 %303
        %v306 = vperm.slane %v299, 0
        %v307 = vmul.f32 %v304, %v306
        %308 = vset.pattern.permute.xlu0 1
        %309 = vperm.xlu0 %308, %v300
        %v310 = vpop.permute.xlu0 %309
        %v312 = vperm.slane %v299, 1
        %v313 = vmul.f32 %v310, %v312
        %v314 = vadd.f32 %v307, %v313
        %315 = vset.pattern.permute.xlu0 2
        %316 = vperm.xlu0 %315, %v300
        %v317 = vpop.permute.xlu0 %316
        %v319 = vperm.slane %v299, 2
        %v320 = vmul.f32 %v317, %v319
        %v321 = vadd.f32 %v314, %v320
        %322 = vset.pattern.permute.xlu0 3
        %323 = vperm.xlu0 %322, %v300
        %v324 = vpop.permute.xlu0 %323
        %v326 = vperm.slane %v299, 3
        %v327 = vmul.f32 %v324, %v326
        %v328 = vadd.f32 %v321, %v327
        %v329 = vld [vmem:[%s2] sm:$0xf]
        %v330 = vmul.f32 %v329, 1.442695
        %v331 = vpow.pop %v330
        %333 = vset.pattern.permute.xlu0 0
        %334 = vperm.xlu0 %333, %v331
        %v335 = vpop.permute.xlu0 %334
        %v337 = vmul.f32 %v328, %v335
        %v338 = vld [vmem:[%s3] sm:$0xf]
        %340 = vset.pattern.permute.xlu0 0
        %341 = vperm.xlu0 %340, %v338
        %v342 = vpop.permute.xlu0 %341
        %v344 = vadd.f32 %v337, %v342
        %vm345 = vcmask 123904
        %346 = vst.msk [vmem:[%s291] sm:$0x3] %vm345, %v344
        %vm347 = vcmask 125954
        %348 = vst.msk [vmem:[%s298 - $0x2] sm:$0xc] %vm347, %v344
        %p349 = scmp.lt.s32.totalorder %s25, 1
        %s350 = scalar_select %p349, %s25, 1
        %p351 = scmp.lt.s32.totalorder %s26, 0
        %s352 = scalar_select %p351, %s26, 0
        %s353 = sadd.s32 %s352, %s350
        %s354 = smul.addr %s353, 2
        %s355 = scalar_lea.vmem %s4, %s354
        %p356 = scmp.lt.s32.totalorder %s25, 1
        %s357 = scalar_select %p356, %s25, 1
        %p358 = scmp.lt.s32.totalorder %s26, 0
        %s359 = scalar_select %p358, %s26, 0
        %s360 = sadd.s32 %s359, %s357
        %s361 = smul.addr %s360, 2
        %s362 = scalar_lea.vmem %s5, %s361
        // Predicated region
        $region45: #{flow_assembly_forward.3} parent=35 // pred_check
          %p363 = pneg %p144
        $region46: #{flow_assembly_forward.3} parent=35 // pred_check_branch
          %365 = sbr.rel (%p363) target = $region48
        $region47: #{flow_assembly_forward.3} parent=35 // pred_region
          _
        $region48: #{flow_assembly_forward.3} parent=35 // pred_fallthru
          _
        // Predicated region
        $region49: #{flow_assembly_forward.3} parent=35 // pred_check
          %p366 = pneg %p172
        $region50: #{flow_assembly_forward.3} parent=35 // pred_check_branch
          %368 = sbr.rel (%p366) target = $region52
        $region51: #{flow_assembly_forward.3} parent=35 // pred_region
          _
        $region52: #{flow_assembly_forward.3} parent=35 // pred_fallthru
          _
      $region36: #{flow_assembly_forward.3} parent=5 // pred_fallthru
        _
      %p369 = scmp.le.s32.totalorder 2, %s16
      // Predicated region
      $region53: #{flow_assembly_forward.3} parent=5 // pred_check
        %p370 = pneg %p369
      $region54: #{flow_assembly_forward.3} parent=5 // pred_check_branch
        %372 = sbr.rel (%p370) target = $region56
      $region55: #{flow_assembly_forward.3} parent=5 // pred_region
        %s373 = ssub.s32 %s16, 2
        // Predicated region
        $region57: #{flow_assembly_forward.3} parent=55 // pred_check
          %p374 = pneg %p150
        $region58: #{flow_assembly_forward.3} parent=55 // pred_check_branch
          %376 = sbr.rel (%p374) target = $region60
        $region59: #{flow_assembly_forward.3} parent=55 // pred_region
          %p377 = scmp.lt.s32.totalorder %s27, 1
          %s378 = scalar_select %p377, %s27, 1
          %p379 = scmp.lt.s32.totalorder %s28, 0
          %s380 = scalar_select %p379, %s28, 0
          %s381 = sadd.s32 %s380, %s378
          %s382 = smul.addr %s381, 2
          %s383 = scalar_lea.vmem %s4, %s382
        $region60: #{flow_assembly_forward.3} parent=55 // pred_fallthru
          _
        // Predicated region
        $region61: #{flow_assembly_forward.3} parent=55 // pred_check
          %p384 = pneg %p178
        $region62: #{flow_assembly_forward.3} parent=55 // pred_check_branch
          %386 = sbr.rel (%p384) target = $region64
        $region63: #{flow_assembly_forward.3} parent=55 // pred_region
          %p387 = scmp.lt.s32.totalorder %s27, 1
          %s388 = scalar_select %p387, %s27, 1
          %p389 = scmp.lt.s32.totalorder %s28, 0
          %s390 = scalar_select %p389, %s28, 0
          %s391 = sadd.s32 %s390, %s388
          %s392 = smul.addr %s391, 2
          %s393 = scalar_lea.vmem %s5, %s392
        $region64: #{flow_assembly_forward.3} parent=55 // pred_fallthru
          _
      $region56: #{flow_assembly_forward.3} parent=5 // pred_fallthru
        _
    $region6: #{flow_assembly_forward.3} parent=1 // loop_footer
      %s20 = sadd.s32 1, %s16
    $region7: #{flow_assembly_forward.3} parent=1 // loop_footer_branch
      %15 = sbr.rel target = $region3
    $region8: #{flow_assembly_forward.3} parent=1 // loop_exit
      _
    %394 = vsyncpa [#allocation3], 1
    %s395 = scalar_lea.sflag [#allocation3], 1
    %396 = vsyncpa %s395, 1
    %397 = vsyncpa [#allocation5], 1

// kernel: reverse
$region0: #{reverse}
  %s0 = inlined_call_operand.vmem [shape: f32[2,2,16], index: 0, kind: input, shape index: {}]
  %s1 = inlined_call_operand.vmem [shape: f32[2,2,16], index: 1, kind: output, shape index: {}]
  $region1: #{reverse} parent=0
    #allocation0 [shape = 'u8[16384]{0}', space=vmem, size = 0x4000, scoped, tag = 'operand span for operand 0']
    #allocation1 [shape = 'u8[4096]{0}', space=vmem, size = 0x1000, scoped, tag = 'packed  for operand 0']
    #allocation2 [shape = 'u8[8192]{0}', space=vmem, size = 0x2000, scoped, tag = 'operand span for operand 1']
    #allocation3 [shape = 'u8[2048]{0}', space=vmem, size = 0x800, scoped, tag = 'packed  for operand 1']
    %s2 = scalar_lea.vmem [#allocation1], 2
    // Predicated region
    $region2: #{reverse} parent=1 // pred_check
      _
    $region3: #{reverse} parent=1 // pred_check_branch
      %4 = sbr.rel (0) target = $region5
    $region4: #{reverse} parent=1 // pred_region
      // Predicated region
      $region6: #{reverse} parent=4 // pred_check
        _
      $region7: #{reverse} parent=4 // pred_check_branch
        %6 = sbr.rel target = $region9
      $region8: #{reverse} parent=4 // pred_region
        // Predicated region
        $region21: #{reverse} parent=8 // pred_check
          _
        $region22: #{reverse} parent=8 // pred_check_branch
          %24 = sbr.rel (0) target = $region24
        $region23: #{reverse} parent=8 // pred_region
          %s26 = ssub.s32 4, 1
          loop: start=0, step=1, limit=1
          $region25: #{reverse} parent=23 // loop_pre_header
            _
          $region26: #{reverse} parent=23 // loop_header
            %s28 = sphi 0, %s32
            %p29 = scmp.ge.s32.totalorder %s28, 1
            %s33 = sphi %s0, %s0
            %s34 = sphi %s2, %s2
          $region27: #{reverse} parent=23 // loop_header_branch
            %31 = sbr.rel (%p29) target = $region31
          $region28: #{reverse} parent=23 // loop_body
            %v35 = vld [vmem:[%s33] sm:%s26]
            %36 = vst [vmem:[%s34] sm:%s26] %v35
            %v37 = vld [vmem:[%s33 + $0x2] sm:%s26]
            %38 = vst [vmem:[%s34 + $0x4] sm:%s26] %v37
          $region29: #{reverse} parent=23 // loop_footer
            %s32 = sadd.s32 1, %s28
          $region30: #{reverse} parent=23 // loop_footer_branch
            %27 = sbr.rel target = $region26
          $region31: #{reverse} parent=23 // loop_exit
            _
        $region24: #{reverse} parent=8 // pred_fallthru
          _
      $region9: #{reverse} parent=4 // pred_fallthru
        _
      // Predicated region
      $region10: #{reverse} parent=4 // pred_check
        _
      $region11: #{reverse} parent=4 // pred_check_branch
        %8 = sbr.rel (0) target = $region13
      $region12: #{reverse} parent=4 // pred_region
        %s10 = ssub.s32 4, 1
        loop: start=0, step=1, limit=1
        $region14: #{reverse} parent=12 // loop_pre_header
          _
        $region15: #{reverse} parent=12 // loop_header
          %s12 = sphi 0, %s16
          %p13 = scmp.ge.s32.totalorder %s12, 1
          %s17 = sphi %s0, %s0
          %s18 = sphi %s2, %s2
        $region16: #{reverse} parent=12 // loop_header_branch
          %15 = sbr.rel (%p13) target = $region20
        $region17: #{reverse} parent=12 // loop_body
          %v19 = vld [vmem:[%s17] sm:%s10]
          %20 = vst [vmem:[%s18] sm:%s10] %v19
          %v21 = vld [vmem:[%s17 + $0x2] sm:%s10]
          %22 = vst [vmem:[%s18 + $0x4] sm:%s10] %v21
        $region18: #{reverse} parent=12 // loop_footer
          %s16 = sadd.s32 1, %s12
        $region19: #{reverse} parent=12 // loop_footer_branch
          %11 = sbr.rel target = $region15
        $region20: #{reverse} parent=12 // loop_exit
          _
      $region13: #{reverse} parent=4 // pred_fallthru
        _
    $region5: #{reverse} parent=1 // pred_fallthru
      _
    %39 = vnop
    %s41 = ssub.s32 4, 1
    %s42 = scalar_lea.vmem [#allocation1], 6
    %v43 = vld [vmem:[%s42] sm:%s41]
    %s44 = scalar_lea.vmem [#allocation0], 24
    %45 = vst [vmem:[%s44] sm:%s41] %v43
    %s46 = scalar_lea.vmem [#allocation1], 4
    %v47 = vld [vmem:[%s46] sm:%s41]
    %s48 = scalar_lea.vmem [#allocation0], 16
    %49 = vst [vmem:[%s48] sm:%s41] %v47
    %s50 = scalar_lea.vmem [#allocation1], 2
    %v51 = vld [vmem:[%s50] sm:%s41]
    %s52 = scalar_lea.vmem [#allocation0], 8
    %53 = vst [vmem:[%s52] sm:%s41] %v51
    %v54 = vld [vmem:[#allocation1] sm:%s41]
    %55 = vst [vmem:[#allocation0] sm:%s41] %v54
    %s56 = scalar_lea.vmem [#allocation0], 7
    %v57 = vld [vmem:[%s56] ss:$-1 sm:$0xff]
    %v58 = vrot.slane %v57, 6
    %59 = vst [vmem:[#allocation2] sm:$0xff] %v58
    %s60 = scalar_lea.vmem [#allocation0], 8
    %s61 = scalar_lea.vmem %s60, 7 [#allocation0]
    %v62 = vld [vmem:[%s61] ss:$-1 sm:$0xff]
    %v63 = vrot.slane %v62, 6
    %v64 = vlaneseq
    %v65 = vshrl.u32 %v64, 7
    %vm66 = vcmp.lt.s32.totalorder %v65, 2
    %67 = vst.msk [vmem:[#allocation2] sm:$0xff] %vm66, %v63
    %s68 = scalar_lea.vmem [#allocation2], 8
    %s69 = scalar_lea.vmem [#allocation0], 16
    %s70 = scalar_lea.vmem %s69, 7 [#allocation0]
    %v71 = vld [vmem:[%s70] ss:$-1 sm:$0xff]
    %v72 = vrot.slane %v71, 6
    %73 = vst [vmem:[%s68] sm:$0xff] %v72
    %s74 = scalar_lea.vmem %s69, 8 [#allocation0]
    %s75 = scalar_lea.vmem %s74, 7 [#allocation0]
    %v76 = vld [vmem:[%s75] ss:$-1 sm:$0xff]
    %v77 = vrot.slane %v76, 6
    %v78 = vlaneseq
    %v79 = vshrl.u32 %v78, 7
    %vm80 = vcmp.lt.s32.totalorder %v79, 2
    %81 = vst.msk [vmem:[%s68] sm:$0xff] %vm80, %v77
    %s83 = ssub.s32 4, 1
    %v84 = vld [vmem:[#allocation2] sm:%s83]
    %s86 = ssub.s32 4, 1
    %87 = vst [vmem:[#allocation3] sm:%s86] %v84
    %s88 = scalar_lea.vmem [#allocation2], 8
    %v89 = vld [vmem:[%s88] sm:%s83]
    %s91 = ssub.s32 4, 1
    %s92 = scalar_lea.vmem [#allocation3], 2
    %93 = vst [vmem:[%s92] sm:%s91] %v89
    // Predicated region
    $region32: #{reverse} parent=1 // pred_check
      _
    $region33: #{reverse} parent=1 // pred_check_branch
      %95 = sbr.rel (0) target = $region35
    $region34: #{reverse} parent=1 // pred_region
      // Predicated region
      $region36: #{reverse} parent=34 // pred_check
        _
      $region37: #{reverse} parent=34 // pred_check_branch
        %97 = sbr.rel target = $region39
      $region38: #{reverse} parent=34 // pred_region
        // Predicated region
        $region51: #{reverse} parent=38 // pred_check
          _
        $region52: #{reverse} parent=38 // pred_check_branch
          %115 = sbr.rel (0) target = $region54
        $region53: #{reverse} parent=38 // pred_region
          %s117 = ssub.s32 4, 1
          loop: start=0, step=1, limit=1
          $region55: #{reverse} parent=53 // loop_pre_header
            _
          $region56: #{reverse} parent=53 // loop_header
            %s119 = sphi 0, %s123
            %p120 = scmp.ge.s32.totalorder %s119, 1
            %s124 = sphi [#allocation3], [#allocation3]
            %s125 = sphi %s1, %s1
          $region57: #{reverse} parent=53 // loop_header_branch
            %122 = sbr.rel (%p120) target = $region61
          $region58: #{reverse} parent=53 // loop_body
            %v126 = vld [vmem:[%s124] sm:%s117]
            %127 = vst [vmem:[%s125] sm:%s117] %v126
            %v128 = vld [vmem:[%s124 + $0x2] sm:%s117]
            %129 = vst [vmem:[%s125 + $0x2] sm:%s117] %v128
          $region59: #{reverse} parent=53 // loop_footer
            %s123 = sadd.s32 1, %s119
          $region60: #{reverse} parent=53 // loop_footer_branch
            %118 = sbr.rel target = $region56
          $region61: #{reverse} parent=53 // loop_exit
            _
        $region54: #{reverse} parent=38 // pred_fallthru
          _
      $region39: #{reverse} parent=34 // pred_fallthru
        _
      // Predicated region
      $region40: #{reverse} parent=34 // pred_check
        _
      $region41: #{reverse} parent=34 // pred_check_branch
        %99 = sbr.rel (0) target = $region43
      $region42: #{reverse} parent=34 // pred_region
        %s101 = ssub.s32 4, 1
        loop: start=0, step=1, limit=1
        $region44: #{reverse} parent=42 // loop_pre_header
          _
        $region45: #{reverse} parent=42 // loop_header
          %s103 = sphi 0, %s107
          %p104 = scmp.ge.s32.totalorder %s103, 1
          %s108 = sphi [#allocation3], [#allocation3]
          %s109 = sphi %s1, %s1
        $region46: #{reverse} parent=42 // loop_header_branch
          %106 = sbr.rel (%p104) target = $region50
        $region47: #{reverse} parent=42 // loop_body
          %v110 = vld [vmem:[%s108] sm:%s101]
          %111 = vst [vmem:[%s109] sm:%s101] %v110
          %v112 = vld [vmem:[%s108 + $0x2] sm:%s101]
          %113 = vst [vmem:[%s109 + $0x2] sm:%s101] %v112
        $region48: #{reverse} parent=42 // loop_footer
          %s107 = sadd.s32 1, %s103
        $region49: #{reverse} parent=42 // loop_footer_branch
          %102 = sbr.rel target = $region45
        $region50: #{reverse} parent=42 // loop_exit
          _
      $region43: #{reverse} parent=34 // pred_fallthru
        _
    $region35: #{reverse} parent=1 // pred_fallthru
      _
    %130 = vnop

// kernel: custom-call.2
$region0: #{custom-call.2}
  %s0 = inlined_call_operand.hbm [shape: f32[4,4], index: 0, kind: input, shape index: {}]
  %s1 = inlined_call_operand.vmem [shape: f32[4,4], index: 1, kind: output, shape index: {0}]
  %s2 = inlined_call_operand.hbm [shape: s32[4], index: 2, kind: output, shape index: {1}]
  %s3 = inlined_call_operand.hbm [shape: s32[4], index: 3, kind: output, shape index: {2}]
  %4 = xla_tuple %s1, %s2, %s3
  $region1: #{custom-call.2} parent=0
    #allocation0 [shape = 'u8[4096]{0}', space=vmem, size = 0x1000, scoped, tag = 'operand span for operand 0']
    #allocation1 [shape = 'u8[2048]{0}', space=vmem, size = 0x800, scoped, tag = 'packed  for operand 0']
    #allocation2 [shape = 's32[1]{0}', space=sflag, size = 0x4, scoped, tag = 'scoped memory for custom-call.2']
    #allocation3 [shape = 's32[1]{0}', space=sflag, size = 0x4, scoped, tag = 'scoped memory for custom-call.2']
    #allocation4 [shape = 'u8[4096]{0}', space=vmem, size = 0x1000, scoped, tag = 'operand span for operand 1']
    #allocation5 [shape = 'u8[2048]{0}', space=vmem, size = 0x800, scoped, tag = 'packed  for operand 1']
    #allocation6 [shape = 'u8[4096]{0}', space=vmem, size = 0x1000, scoped, tag = 'operand span for operand 2']
    #allocation7 [shape = 'u8[512]{0}', space=vmem, size = 0x400, scoped, tag = 'packed  for operand 2']
    #allocation8 [shape = 'u8[4096]{0}', space=vmem, size = 0x1000, scoped, tag = 'operand span for operand 3']
    #allocation9 [shape = 'u8[512]{0}', space=vmem, size = 0x400, scoped, tag = 'packed  for operand 3']
    #allocation10 [shape = 's32[1]{0}', space=sflag, size = 0x4, scoped, tag = 'scoped memory for custom-call.2']
    #allocation11 [shape = 's32[4,128]{1,0}', space=vmem, size = 0x1000, scoped, tag = 'scratch for permutations']
    %5 = vsyncpa [#allocation2], 0
    %6 = vsyncpa [#allocation3], 0
    %7 = vsyncpa [#allocation10], 0
    %9 = vsyncadd [#allocation2], 0
    %s11 = sshll.u32 %s0, 4
    %s12 = int_to_ptr.hbm [resolvable:$true] %s11
    %s13 = sshll.u32 [#allocation1], 4
    %s14 = int_to_ptr.vmem [resolvable:$true] %s13
    %16 = dma.hbm_to_vmem [thread:$0]  %s12, 64, %s14, [#allocation2]
    %18 = dma.done [#allocation2], 64
    %s20 = ssub.s32 16, 1
    %v21 = vld [vmem:[#allocation1] sm:%s20]
    %22 = vst [vmem:[#allocation0] sm:%s20] %v21
    %v23 = vld [vmem:[#allocation0] sm:$0xff]
    %24 = vst [vmem:[#allocation4] sm:$0xff] %v23
    %25 = vst [vmem:[#allocation6] sm:$0x1] 0
    %v26 = vlaneseq
    %v27 = vshrl.u32 %v26, 7
    %v28 = vmov %v27
    %30 = vst [vmem:[#allocation11] sm:$0xff] %v28
    loop: start=0, step=1, limit=4
    $region3: #{custom-call.2} parent=1 // loop_pre_header
      _
    $region4: #{custom-call.2} parent=1 // loop_header
      %s32 = sphi 0, %s36
      %p33 = scmp.ge.s32.totalorder %s32, 4
    $region5: #{custom-call.2} parent=1 // loop_header_branch
      %35 = sbr.rel (%p33) target = $region9
    $region6: #{custom-call.2} parent=1 // loop_body
      %v37 = vstv %s32
      %v38 = vlaneseq
      %v39 = vshrl.u32 %v38, 7
      %v40 = vmov %v39
      %v41 = vld [vmem:[#allocation4] sm:$0xff]
      %v42 = vand.u32 2147483647, %v41
      %v44 = vstv %s32
      %vm45 = vcmp.ge.s32.totalorder %v40, %v44
      %vm46 = vcmp.lt.s32.totalorder %v40, 4
      %vm47 = vmand %vm45, %vm46
      %vm48 = vcmp.lt.f32.partialorder -inf, %v42
      %vm49 = vmand %vm47, %vm48
      %v50 = vsel %vm49, %v40, %v37
      %v51 = vsel %vm49, %v42, -inf
      %v52 = vrot.slane %v51, 1
      %v53 = vrot.slane %v50, 1
      %vm54 = vcmp.ge.f32.partialorder %v52, %v51
      %v55 = vsel %vm54, %v52, %v51
      %v56 = vsel %vm54, %v53, %v50
      %v57 = vrot.slane %v52, 1
      %v58 = vrot.slane %v53, 1
      %vm59 = vcmp.ge.f32.partialorder %v57, %v55
      %v60 = vsel %vm59, %v57, %v55
      %v61 = vsel %vm59, %v58, %v56
      %v62 = vrot.slane %v57, 1
      %v63 = vrot.slane %v58, 1
      %vm64 = vcmp.ge.f32.partialorder %v62, %v60
      %v65 = vsel %vm64, %v62, %v60
      %v66 = vsel %vm64, %v63, %v61
      %v67 = vrot.slane %v62, 1
      %v68 = vrot.slane %v63, 1
      %vm69 = vcmp.ge.f32.partialorder %v67, %v65
      %v70 = vsel %vm69, %v67, %v65
      %v71 = vsel %vm69, %v68, %v66
      %v72 = vrot.slane %v67, 1
      %v73 = vrot.slane %v68, 1
      %vm74 = vcmp.ge.f32.partialorder %v72, %v70
      %v75 = vsel %vm74, %v72, %v70
      %v76 = vsel %vm74, %v73, %v71
      %v77 = vrot.slane %v72, 1
      %v78 = vrot.slane %v73, 1
      %vm79 = vcmp.ge.f32.partialorder %v77, %v75
      %v80 = vsel %vm79, %v77, %v75
      %v81 = vsel %vm79, %v78, %v76
      %v82 = vrot.slane %v77, 1
      %v83 = vrot.slane %v78, 1
      %vm84 = vcmp.ge.f32.partialorder %v82, %v80
      %v85 = vsel %vm84, %v82, %v80
      %v86 = vsel %vm84, %v83, %v81
      %s87 = ssub.s32 128, %s32
      %88 = vrot.lane.b32.xlu0 %v86, %s87
      %v89 = vpop.permute.xlu0 %88
      %s90 = vtos %v89
      %v91 = vstv %s32
      %v92 = vlaneseq
      %v93 = vand.u32 %v92, 127
      %vm94 = vcmp.eq.s32.totalorder %v93, %v91
      %v95 = vstv %s90
      %v96 = vld [vmem:[#allocation6] ss:$0 sm:$0xff]
      %v97 = vsel %vm94, %v95, %v96
      %98 = vst [vmem:[#allocation6] sm:$0x1] %v97
      %s99 = scalar_lea.vmem [#allocation4], %s32
      %s100 = scalar_lea.vmem [#allocation4], %s90
      %v101 = vld [vmem:[%s99] ss:$0 sm:$0xff]
      %v102 = vld [vmem:[%s100] ss:$0 sm:$0xff]
      %103 = vst [vmem:[%s100] sm:$0x1] %v101
      %104 = vst [vmem:[%s99] sm:$0x1] %v102
      %s105 = scalar_lea.vmem [#allocation11], %s32
      %s106 = scalar_lea.vmem [#allocation11], %s90
      %v107 = vld [vmem:[%s105] ss:$0 sm:$0xff]
      %v108 = vld [vmem:[%s106] ss:$0 sm:$0xff]
      %109 = vst [vmem:[%s106] sm:$0x1] %v107
      %110 = vst [vmem:[%s105] sm:$0x1] %v108
      %vm111 = vcmp.ne.f32.partialorder %v102, 0.0
      %vm112 = vmand %vm94, %vm111
      %v113 = vsel %vm112, %v102, 1.0
      %v114 = vlaneseq
      %v115 = vand.u32 %v114, 127
      %v116 = vstv %s32
      %vm117 = vcmp.gt.s32.totalorder %v115, %v116
      %v118 = vsel %vm117, %v102, 0.0
      %v119 = vlaneseq
      %v120 = vshrl.u32 %v119, 7
      %v121 = vmov %v120
      %v122 = vld [vmem:[#allocation4] sm:$0xff]
      %v124 = vstv %s32
      %vm125 = vcmp.gt.s32.totalorder %v121, %v124
      %v126 = vsel %vm125, %v113, 1.0
      %v127 = vrcp.pop %v126
      %v128 = vmul.f32 %v126, %v127
      %v129 = vsub.f32 1.0, %v128
      %v130 = vmul.f32 %v127, %v129
      %v131 = vadd.f32 %v127, %v130
      %vm132 = vweird.f32 %v126
      %vm133 = vweird.f32 %v127
      %vm134 = vmor %vm132, %vm133
      %v135 = vsel %vm134, %v127, %v131
      %v136 = vand.u32 2147483647, %v126
      %vm137 = vcmp.eq.f32.partialorder %v136, 8.507059e+37
      %v138 = vand.u32 %v126, 2147483648
      %v139 = vor.u32 1.1754944e-38, %v138
      %v140 = vsel %vm137, %v139, %v135
      %v141 = vmul.f32 %v122, %v140
      %vm142 = vmand %vm125, %vm94
      %v143 = vsel %vm142, %v141, 0.0
      %144 = vadd.xlane.f32.xlu0 %v143
      %v145 = vpop.xlane.xlu0 %144
      %v146 = vmul.f32 %v145, %v118
      %v147 = vsub.f32 %v141, %v146
      %148 = vst [vmem:[#allocation4] sm:$0xff] %v147
    $region7: #{custom-call.2} parent=1 // loop_footer
      %s36 = sadd.s32 1, %s32
    $region8: #{custom-call.2} parent=1 // loop_footer_branch
      %31 = sbr.rel target = $region4
    $region9: #{custom-call.2} parent=1 // loop_exit
      _
    %v149 = vld [vmem:[#allocation11] sm:$0xff]
    %s150 = scalar_lea.vmem [#allocation11], 8
    %s151 = scalar_lea.vmem [#allocation11], 16
    %s152 = scalar_lea.vmem [#allocation11], 24
    %s153 = scalar_lea.vmem [#allocation11], 32
    %s154 = scalar_lea.vmem [#allocation11], 40
    %s155 = scalar_lea.vmem [#allocation11], 48
    %s156 = scalar_lea.vmem [#allocation11], 56
    %s157 = scalar_lea.vmem [#allocation11], 64
    %s158 = scalar_lea.vmem [#allocation11], 72
    %s159 = scalar_lea.vmem [#allocation11], 80
    %s160 = scalar_lea.vmem [#allocation11], 88
    %s161 = scalar_lea.vmem [#allocation11], 96
    %s162 = scalar_lea.vmem [#allocation11], 104
    %s163 = scalar_lea.vmem [#allocation11], 112
    %s164 = scalar_lea.vmem [#allocation11], 120
    %165 = vxpose.xlu0.b32.start [1/16] %v149, 128
    %166 = vxpose.xlu0.b32.cont [2/16] 0, 128
    %167 = vxpose.xlu0.b32.cont [3/16] 0, 128
    %168 = vxpose.xlu0.b32.cont [4/16] 0, 128
    %169 = vxpose.xlu0.b32.cont [5/16] 0, 128
    %170 = vxpose.xlu0.b32.cont [6/16] 0, 128
    %171 = vxpose.xlu0.b32.cont [7/16] 0, 128
    %172 = vxpose.xlu0.b32.cont [8/16] 0, 128
    %173 = vxpose.xlu0.b32.cont [9/16] 0, 128
    %174 = vxpose.xlu0.b32.cont [10/16] 0, 128
    %175 = vxpose.xlu0.b32.cont [11/16] 0, 128
    %176 = vxpose.xlu0.b32.cont [12/16] 0, 128
    %177 = vxpose.xlu0.b32.cont [13/16] 0, 128
    %178 = vxpose.xlu0.b32.cont [14/16] 0, 128
    %179 = vxpose.xlu0.b32.cont [15/16] 0, 128
    %180 = vxpose.xlu0.b32.end [16/16] 0, 128
    %v181 = vpop.trf.xlu0
    %v182 = vpop.trf.xlu0
    %v183 = vpop.trf.xlu0
    %v184 = vpop.trf.xlu0
    %v185 = vpop.trf.xlu0
    %v186 = vpop.trf.xlu0
    %v187 = vpop.trf.xlu0
    %v188 = vpop.trf.xlu0
    %v189 = vpop.trf.xlu0
    %v190 = vpop.trf.xlu0
    %v191 = vpop.trf.xlu0
    %v192 = vpop.trf.xlu0
    %v193 = vpop.trf.xlu0
    %v194 = vpop.trf.xlu0
    %v195 = vpop.trf.xlu0
    %v196 = vpop.trf.xlu0
    %197 = vst [vmem:[#allocation8] sm:$0x1] %v181
    %s199 = ssub.s32 16, 1
    %v200 = vld [vmem:[#allocation4] sm:%s199]
    %s202 = ssub.s32 16, 1
    %203 = vst [vmem:[#allocation5] sm:%s202] %v200
    %s205 = ssub.s32 2, 1
    %v206 = vld [vmem:[#allocation6] sm:%s205]
    %s208 = ssub.s32 2, 1
    %209 = vst [vmem:[#allocation7] sm:%s208] %v206
    %s211 = ssub.s32 2, 1
    %v212 = vld [vmem:[#allocation8] sm:%s211]
    %s214 = ssub.s32 2, 1
    %215 = vst [vmem:[#allocation9] sm:%s214] %v212
    // Predicated region
    $region10: #{custom-call.2} parent=1 // pred_check
      _
    $region11: #{custom-call.2} parent=1 // pred_check_branch
      %217 = sbr.rel (0) target = $region13
    $region12: #{custom-call.2} parent=1 // pred_region
      %p219 = scmp.gt.s32.totalorder 0, 0
      // Predicated region
      $region14: #{custom-call.2} parent=12 // pred_check
        %p220 = pneg %p219
      $region15: #{custom-call.2} parent=12 // pred_check_branch
        %222 = sbr.rel (%p220) target = $region17
      $region16: #{custom-call.2} parent=12 // pred_region
        %s223 = ssub.s32 0, 1
        %s224 = smul.u32 %s223, 8
        %s225 = scalar_lea.vmem [#allocation5], %s224
        %v226 = vld [vmem:[#allocation5] sm:$0xff]
        // While loop
        $region18: #{custom-call.2} parent=16 // loop_pre_header
          _
        $region19: #{custom-call.2} parent=16 // loop_header
          %s227 = sphi [#allocation5], %s249
          %s228 = sphi %s1, %s250
          %v229 = vphi %v226, %v251
          %s230 = ssub.s32 %s225, 64
          %p231 = scmp.gt.s32.totalorder %s227, %s230
        $region20: #{custom-call.2} parent=16 // loop_header_branch
          %233 = sbr.rel (%p231) target = $region24
        $region21: #{custom-call.2} parent=16 // loop_body
          %234 = vst [vmem:[%s228] sm:$0xff] %v229
          %v235 = vld [vmem:[%s227 + $0x8] sm:$0xff]
          %236 = vst [vmem:[%s228 + $0x8] sm:$0xff] %v235
          %v237 = vld [vmem:[%s227 + $0x10] sm:$0xff]
          %238 = vst [vmem:[%s228 + $0x10] sm:$0xff] %v237
          %v239 = vld [vmem:[%s227 + $0x18] sm:$0xff]
          %240 = vst [vmem:[%s228 + $0x18] sm:$0xff] %v239
          %v241 = vld [vmem:[%s227 + $0x20] sm:$0xff]
          %242 = vst [vmem:[%s228 + $0x20] sm:$0xff] %v241
          %v243 = vld [vmem:[%s227 + $0x28] sm:$0xff]
          %244 = vst [vmem:[%s228 + $0x28] sm:$0xff] %v243
          %v245 = vld [vmem:[%s227 + $0x30] sm:$0xff]
          %246 = vst [vmem:[%s228 + $0x30] sm:$0xff] %v245
          %v247 = vld [vmem:[%s227 + $0x38] sm:$0xff]
          %248 = vst [vmem:[%s228 + $0x38] sm:$0xff] %v247
        $region22: #{custom-call.2} parent=16 // loop_footer
          %s249 = scalar_lea.vmem %s227, 64
          %s250 = scalar_lea.vmem %s228, 64
          %v251 = vld [vmem:[%s227 + $0x40] sm:$0xff]
        $region23: #{custom-call.2} parent=16 // loop_footer_branch
          %252 = sbr.rel target = $region19
        $region24: #{custom-call.2} parent=16 // loop_exit
          _
        // While loop
        $region25: #{custom-call.2} parent=16 // loop_pre_header
          _
        $region26: #{custom-call.2} parent=16 // loop_header
          %s253 = sphi %s227, %s261
          %s254 = sphi %s228, %s262
          %v255 = vphi %v229, %v255
          %p256 = scmp.gt.s32.totalorder %s253, %s225
        $region27: #{custom-call.2} parent=16 // loop_header_branch
          %258 = sbr.rel (%p256) target = $region31
        $region28: #{custom-call.2} parent=16 // loop_body
          %v259 = vld [vmem:[%s253] sm:$0xff]
          %260 = vst [vmem:[%s254] sm:$0xff] %v259
        $region29: #{custom-call.2} parent=16 // loop_footer
          %s261 = scalar_lea.vmem %s253, 8
          %s262 = scalar_lea.vmem %s254, 8
        $region30: #{custom-call.2} parent=16 // loop_footer_branch
          %263 = sbr.rel target = $region26
        $region31: #{custom-call.2} parent=16 // loop_exit
          _
      $region17: #{custom-call.2} parent=12 // pred_fallthru
        _
      %s265 = ssub.s32 16, 1
      %s266 = smul.u32 0, 8
      %s267 = scalar_lea.vmem %s1, %s266
      %s268 = smul.u32 0, 8
      %s269 = scalar_lea.vmem [#allocation5], %s268
      %v270 = vld [vmem:[%s269] sm:%s265]
      %271 = vst [vmem:[%s267] sm:%s265] %v270
    $region13: #{custom-call.2} parent=1 // pred_fallthru
      _
    // Predicated region
    $region32: #{custom-call.2} parent=1 // pred_check
      _
    $region33: #{custom-call.2} parent=1 // pred_check_branch
      %273 = sbr.rel (0) target = $region35
    $region34: #{custom-call.2} parent=1 // pred_region
      %275 = vsyncadd [#allocation3], 0
      %s277 = sshll.u32 [#allocation7], 4
      %s278 = int_to_ptr.vmem [resolvable:$true] %s277
      %s279 = sshll.u32 %s2, 4
      %s280 = int_to_ptr.hbm [resolvable:$true] %s279
      %282 = dma.vmem_to_hbm [thread:$0]  %s278, 16, %s280, [#allocation3]
    $region35: #{custom-call.2} parent=1 // pred_fallthru
      _
    // Predicated region
    $region36: #{custom-call.2} parent=1 // pred_check
      _
    $region37: #{custom-call.2} parent=1 // pred_check_branch
      %284 = sbr.rel (0) target = $region39
    $region38: #{custom-call.2} parent=1 // pred_region
      %286 = vsyncadd [#allocation10], 0
      %s288 = sshll.u32 [#allocation9], 4
      %s289 = int_to_ptr.vmem [resolvable:$true] %s288
      %s290 = sshll.u32 %s3, 4
      %s291 = int_to_ptr.hbm [resolvable:$true] %s290
      %293 = dma.vmem_to_hbm [thread:$0]  %s289, 16, %s291, [#allocation10]
    $region39: #{custom-call.2} parent=1 // pred_fallthru
      _
    // Predicated region
    $region40: #{custom-call.2} parent=1 // pred_check
      _
    $region41: #{custom-call.2} parent=1 // pred_check_branch
      %295 = sbr.rel (0) target = $region43
    $region42: #{custom-call.2} parent=1 // pred_region
      %297 = dma.done [#allocation3], 16
    $region43: #{custom-call.2} parent=1 // pred_fallthru
      _
    // Predicated region
    $region44: #{custom-call.2} parent=1 // pred_check
      _
    $region45: #{custom-call.2} parent=1 // pred_check_branch
      %299 = sbr.rel (0) target = $region47
    $region46: #{custom-call.2} parent=1 // pred_region
      %301 = dma.done [#allocation10], 16
    $region47: #{custom-call.2} parent=1 // pred_fallthru
      _
    %302 = vsyncpa [#allocation2], 1
    %303 = vsyncpa [#allocation3], 1
    %304 = vsyncpa [#allocation10], 1

// kernel: flow_assembly_forward.5
$region0: #{flow_assembly_forward.5}
  #allocation0 [shape = 'u32[]', space=smem, size = 0x4, offset = 0x4, fixed_abs, tag = 'smem constant byte address 0x4 - core index']
  #allocation1 [shape = 'u32[72,128]{1,0:T(1,128)}', space=vmem, size = 0x9000, scoped, tag = 'internal scratch']
  %s0 = inlined_call_operand.vmem [shape: f32[2,2,16], index: 0, kind: input, shape index: {}]
  %s1 = inlined_call_operand.vmem [shape: f32[2,2,16], index: 1, kind: input, shape index: {}]
  %s2 = inlined_call_operand.vmem [shape: f32[32,2], index: 2, kind: input, shape index: {}]
  %s3 = inlined_call_operand.vmem [shape: f32[32,1], index: 3, kind: input, shape index: {}]
  %s4 = inlined_call_operand.vmem [shape: f32[32,32], index: 4, kind: input, shape index: {}]
  %s5 = inlined_call_operand.vmem [shape: f32[32,1], index: 5, kind: input, shape index: {}]
  %s6 = inlined_call_operand.vmem [shape: f32[2,32], index: 6, kind: input, shape index: {}]
  %s7 = inlined_call_operand.vmem [shape: f32[2,1], index: 7, kind: input, shape index: {}]
  %s8 = inlined_call_operand.vmem [shape: f32[32,2], index: 8, kind: input, shape index: {}]
  %s9 = inlined_call_operand.vmem [shape: f32[32,1], index: 9, kind: input, shape index: {}]
  %s10 = inlined_call_operand.vmem [shape: f32[32,32], index: 10, kind: input, shape index: {}]
  %s11 = inlined_call_operand.vmem [shape: f32[32,1], index: 11, kind: input, shape index: {}]
  %s12 = inlined_call_operand.vmem [shape: f32[2,32], index: 12, kind: input, shape index: {}]
  %s13 = inlined_call_operand.vmem [shape: f32[2,1], index: 13, kind: input, shape index: {}]
  %s14 = inlined_call_operand.vmem [shape: f32[2,2,16], index: 14, kind: output, shape index: {0}]
  %s15 = inlined_call_operand.vmem [shape: f32[2,1,8,128], index: 15, kind: output, shape index: {1}]
  %16 = xla_tuple %s14, %s15
  %s17 = sld [smem:[#allocation0]]
  $region97: #{flow_assembly_forward.5} parent=0
    _
  %s19 = ssub.s32 1, %s17
  %s20 = scalar_select 0, %s19, %s17
  loop: start=0, step=1, limit=4
  $region2: #{flow_assembly_forward.5} parent=0 // loop_pre_header
    _
  $region3: #{flow_assembly_forward.5} parent=0 // loop_header
    %s22 = sphi 0, %s26
    %p23 = scmp.ge.s32.totalorder %s22, 4
    %s29 = sphi 0, %s41
    %s30 = sphi 0, %s37
    %s31 = sphi 0, %s29
    %s32 = sphi 0, %s30
    %s33 = sphi 0, %s31
    %s34 = sphi 0, %s32
    %s46 = sphi 0, %s48
    %s49 = sphi 0, %s46
    %s50 = sphi 0, %s49
    %s66 = sphi 0, %s50
    %s74 = sphi 0, %s76
    %s77 = sphi 0, %s74
    %s78 = sphi 0, %s77
    %s94 = sphi 0, %s78
    %s98 = sphi 0, %s98
    %s100 = sphi 0, %s98
    %s101 = sphi 0, %s100
    %s115 = sphi 0, %s101
    %s119 = sphi 0, %s119
    %s121 = sphi 0, %s119
    %s122 = sphi 0, %s121
    %s136 = sphi 0, %s122
    %s140 = sphi 0, %s140
    %s142 = sphi 0, %s140
    %s143 = sphi 0, %s142
    %s157 = sphi 0, %s143
    %s161 = sphi 0, %s161
    %s163 = sphi 0, %s161
    %s164 = sphi 0, %s163
    %s178 = sphi 0, %s164
    %s182 = sphi 0, %s182
    %s184 = sphi 0, %s182
    %s185 = sphi 0, %s184
    %s199 = sphi 0, %s185
    %s203 = sphi 0, %s203
    %s205 = sphi 0, %s203
    %s206 = sphi 0, %s205
    %s220 = sphi 0, %s206
    %s224 = sphi 0, %s224
    %s226 = sphi 0, %s224
    %s227 = sphi 0, %s226
    %s241 = sphi 0, %s227
    %s245 = sphi 0, %s245
    %s247 = sphi 0, %s245
    %s248 = sphi 0, %s247
    %s262 = sphi 0, %s248
    %s266 = sphi 0, %s266
    %s268 = sphi 0, %s266
    %s269 = sphi 0, %s268
    %s283 = sphi 0, %s269
    %s287 = sphi 0, %s287
    %s289 = sphi 0, %s287
    %s290 = sphi 0, %s289
    %s304 = sphi 0, %s290
    %s308 = sphi 0, %s308
    %s310 = sphi 0, %s308
    %s311 = sphi 0, %s310
    %s325 = sphi 0, %s311
    %s329 = sphi 0, %s329
    %s331 = sphi 0, %s329
    %s332 = sphi 0, %s331
    %s346 = sphi 0, %s332
    %s354 = sphi 0, %s356
    %s357 = sphi 0, %s354
    %s358 = sphi 0, %s357
    %s374 = sphi 0, %s358
    %s382 = sphi 0, %s384
    %s385 = sphi 0, %s382
    %s386 = sphi 0, %s385
    %s402 = sphi 0, %s386
  $region4: #{flow_assembly_forward.5} parent=0 // loop_header_branch
    %25 = sbr.rel (%p23) target = $region8
  $region5: #{flow_assembly_forward.5} parent=0 // loop_body
    %s27 = ssub.s32 %s22, 1
    %s28 = ssub.s32 %s22, 2
    %s35 = sadd.s32 1, %s30
    %p36 = scmp.ge.s32.totalorder %s35, 1
    %s37 = scalar_select %p36, 0, %s35
    %s38 = sadd.s32 1, %s29
    %s39 = scalar_select %p36, %s38, %s29
    %p40 = scmp.ge.s32.totalorder %s39, 2
    %s41 = scalar_select %p40, 0, %s39
    %s42 = ssub.s32 %s29, %s41
    %s43 = ssub.s32 %s30, %s37
    %s44 = sor.u32 %s42, %s43
    %p45 = scmp.eq.s32.totalorder %s44, 0
    %s47 = sadd.s32 %s46, 1
    %s48 = scalar_select %p45, %s46, %s47
    %p51 = pneg %p45
    %p52 = scmp.eq.s32.totalorder %s22, 1
    %p53 = por %p51, %p52
    %p54 = scmp.ne.s32.totalorder %s46, %s49
    %p55 = scmp.eq.s32.totalorder %s22, 0
    %p56 = por %p54, %p55
    %p57 = scmp.ne.s32.totalorder %s46, %s49
    %p58 = scmp.eq.s32.totalorder %s27, 1
    %p59 = por %p57, %p58
    %p60 = scmp.ne.s32.totalorder %s49, %s50
    %p61 = scmp.eq.s32.totalorder %s27, 0
    %p62 = por %p60, %p61
    %p63 = scmp.ne.s32.totalorder %s49, %s50
    %p64 = scmp.eq.s32.totalorder %s28, 1
    %p65 = por %p63, %p64
    %p67 = scmp.ne.s32.totalorder %s50, %s66
    %p68 = scmp.eq.s32.totalorder %s28, 0
    %p69 = por %p67, %p68
    %s70 = ssub.s32 %s29, %s41
    %s71 = ssub.s32 %s30, %s37
    %s72 = sor.u32 %s70, %s71
    %p73 = scmp.eq.s32.totalorder %s72, 0
    %s75 = sadd.s32 %s74, 1
    %s76 = scalar_select %p73, %s74, %s75
    %p79 = pneg %p73
    %p80 = scmp.eq.s32.totalorder %s22, 1
    %p81 = por %p79, %p80
    %p82 = scmp.ne.s32.totalorder %s74, %s77
    %p83 = scmp.eq.s32.totalorder %s22, 0
    %p84 = por %p82, %p83
    %p85 = scmp.ne.s32.totalorder %s74, %s77
    %p86 = scmp.eq.s32.totalorder %s27, 1
    %p87 = por %p85, %p86
    %p88 = scmp.ne.s32.totalorder %s77, %s78
    %p89 = scmp.eq.s32.totalorder %s27, 0
    %p90 = por %p88, %p89
    %p91 = scmp.ne.s32.totalorder %s77, %s78
    %p92 = scmp.eq.s32.totalorder %s28, 1
    %p93 = por %p91, %p92
    %p95 = scmp.ne.s32.totalorder %s78, %s94
    %p96 = scmp.eq.s32.totalorder %s28, 0
    %p97 = por %p95, %p96
    %s99 = sadd.s32 %s98, 1
    %p102 = scmp.eq.s32.totalorder %s22, 1
    %p103 = scmp.ne.s32.totalorder %s98, %s100
    %p104 = scmp.eq.s32.totalorder %s22, 0
    %p105 = por %p103, %p104
    %p106 = scmp.ne.s32.totalorder %s98, %s100
    %p107 = scmp.eq.s32.totalorder %s27, 1
    %p108 = por %p106, %p107
    %p109 = scmp.ne.s32.totalorder %s100, %s101
    %p110 = scmp.eq.s32.totalorder %s27, 0
    %p111 = por %p109, %p110
    %p112 = scmp.ne.s32.totalorder %s100, %s101
    %p113 = scmp.eq.s32.totalorder %s28, 1
    %p114 = por %p112, %p113
    %p116 = scmp.ne.s32.totalorder %s101, %s115
    %p117 = scmp.eq.s32.totalorder %s28, 0
    %p118 = por %p116, %p117
    %s120 = sadd.s32 %s119, 1
    %p123 = scmp.eq.s32.totalorder %s22, 1
    %p124 = scmp.ne.s32.totalorder %s119, %s121
    %p125 = scmp.eq.s32.totalorder %s22, 0
    %p126 = por %p124, %p125
    %p127 = scmp.ne.s32.totalorder %s119, %s121
    %p128 = scmp.eq.s32.totalorder %s27, 1
    %p129 = por %p127, %p128
    %p130 = scmp.ne.s32.totalorder %s121, %s122
    %p131 = scmp.eq.s32.totalorder %s27, 0
    %p132 = por %p130, %p131
    %p133 = scmp.ne.s32.totalorder %s121, %s122
    %p134 = scmp.eq.s32.totalorder %s28, 1
    %p135 = por %p133, %p134
    %p137 = scmp.ne.s32.totalorder %s122, %s136
    %p138 = scmp.eq.s32.totalorder %s28, 0
    %p139 = por %p137, %p138
    %s141 = sadd.s32 %s140, 1
    %p144 = scmp.eq.s32.totalorder %s22, 1
    %p145 = scmp.ne.s32.totalorder %s140, %s142
    %p146 = scmp.eq.s32.totalorder %s22, 0
    %p147 = por %p145, %p146
    %p148 = scmp.ne.s32.totalorder %s140, %s142
    %p149 = scmp.eq.s32.totalorder %s27, 1
    %p150 = por %p148, %p149
    %p151 = scmp.ne.s32.totalorder %s142, %s143
    %p152 = scmp.eq.s32.totalorder %s27, 0
    %p153 = por %p151, %p152
    %p154 = scmp.ne.s32.totalorder %s142, %s143
    %p155 = scmp.eq.s32.totalorder %s28, 1
    %p156 = por %p154, %p155
    %p158 = scmp.ne.s32.totalorder %s143, %s157
    %p159 = scmp.eq.s32.totalorder %s28, 0
    %p160 = por %p158, %p159
    %s162 = sadd.s32 %s161, 1
    %p165 = scmp.eq.s32.totalorder %s22, 1
    %p166 = scmp.ne.s32.totalorder %s161, %s163
    %p167 = scmp.eq.s32.totalorder %s22, 0
    %p168 = por %p166, %p167
    %p169 = scmp.ne.s32.totalorder %s161, %s163
    %p170 = scmp.eq.s32.totalorder %s27, 1
    %p171 = por %p169, %p170
    %p172 = scmp.ne.s32.totalorder %s163, %s164
    %p173 = scmp.eq.s32.totalorder %s27, 0
    %p174 = por %p172, %p173
    %p175 = scmp.ne.s32.totalorder %s163, %s164
    %p176 = scmp.eq.s32.totalorder %s28, 1
    %p177 = por %p175, %p176
    %p179 = scmp.ne.s32.totalorder %s164, %s178
    %p180 = scmp.eq.s32.totalorder %s28, 0
    %p181 = por %p179, %p180
    %s183 = sadd.s32 %s182, 1
    %p186 = scmp.eq.s32.totalorder %s22, 1
    %p187 = scmp.ne.s32.totalorder %s182, %s184
    %p188 = scmp.eq.s32.totalorder %s22, 0
    %p189 = por %p187, %p188
    %p190 = scmp.ne.s32.totalorder %s182, %s184
    %p191 = scmp.eq.s32.totalorder %s27, 1
    %p192 = por %p190, %p191
    %p193 = scmp.ne.s32.totalorder %s184, %s185
    %p194 = scmp.eq.s32.totalorder %s27, 0
    %p195 = por %p193, %p194
    %p196 = scmp.ne.s32.totalorder %s184, %s185
    %p197 = scmp.eq.s32.totalorder %s28, 1
    %p198 = por %p196, %p197
    %p200 = scmp.ne.s32.totalorder %s185, %s199
    %p201 = scmp.eq.s32.totalorder %s28, 0
    %p202 = por %p200, %p201
    %s204 = sadd.s32 %s203, 1
    %p207 = scmp.eq.s32.totalorder %s22, 1
    %p208 = scmp.ne.s32.totalorder %s203, %s205
    %p209 = scmp.eq.s32.totalorder %s22, 0
    %p210 = por %p208, %p209
    %p211 = scmp.ne.s32.totalorder %s203, %s205
    %p212 = scmp.eq.s32.totalorder %s27, 1
    %p213 = por %p211, %p212
    %p214 = scmp.ne.s32.totalorder %s205, %s206
    %p215 = scmp.eq.s32.totalorder %s27, 0
    %p216 = por %p214, %p215
    %p217 = scmp.ne.s32.totalorder %s205, %s206
    %p218 = scmp.eq.s32.totalorder %s28, 1
    %p219 = por %p217, %p218
    %p221 = scmp.ne.s32.totalorder %s206, %s220
    %p222 = scmp.eq.s32.totalorder %s28, 0
    %p223 = por %p221, %p222
    %s225 = sadd.s32 %s224, 1
    %p228 = scmp.eq.s32.totalorder %s22, 1
    %p229 = scmp.ne.s32.totalorder %s224, %s226
    %p230 = scmp.eq.s32.totalorder %s22, 0
    %p231 = por %p229, %p230
    %p232 = scmp.ne.s32.totalorder %s224, %s226
    %p233 = scmp.eq.s32.totalorder %s27, 1
    %p234 = por %p232, %p233
    %p235 = scmp.ne.s32.totalorder %s226, %s227
    %p236 = scmp.eq.s32.totalorder %s27, 0
    %p237 = por %p235, %p236
    %p238 = scmp.ne.s32.totalorder %s226, %s227
    %p239 = scmp.eq.s32.totalorder %s28, 1
    %p240 = por %p238, %p239
    %p242 = scmp.ne.s32.totalorder %s227, %s241
    %p243 = scmp.eq.s32.totalorder %s28, 0
    %p244 = por %p242, %p243
    %s246 = sadd.s32 %s245, 1
    %p249 = scmp.eq.s32.totalorder %s22, 1
    %p250 = scmp.ne.s32.totalorder %s245, %s247
    %p251 = scmp.eq.s32.totalorder %s22, 0
    %p252 = por %p250, %p251
    %p253 = scmp.ne.s32.totalorder %s245, %s247
    %p254 = scmp.eq.s32.totalorder %s27, 1
    %p255 = por %p253, %p254
    %p256 = scmp.ne.s32.totalorder %s247, %s248
    %p257 = scmp.eq.s32.totalorder %s27, 0
    %p258 = por %p256, %p257
    %p259 = scmp.ne.s32.totalorder %s247, %s248
    %p260 = scmp.eq.s32.totalorder %s28, 1
    %p261 = por %p259, %p260
    %p263 = scmp.ne.s32.totalorder %s248, %s262
    %p264 = scmp.eq.s32.totalorder %s28, 0
    %p265 = por %p263, %p264
    %s267 = sadd.s32 %s266, 1
    %p270 = scmp.eq.s32.totalorder %s22, 1
    %p271 = scmp.ne.s32.totalorder %s266, %s268
    %p272 = scmp.eq.s32.totalorder %s22, 0
    %p273 = por %p271, %p272
    %p274 = scmp.ne.s32.totalorder %s266, %s268
    %p275 = scmp.eq.s32.totalorder %s27, 1
    %p276 = por %p274, %p275
    %p277 = scmp.ne.s32.totalorder %s268, %s269
    %p278 = scmp.eq.s32.totalorder %s27, 0
    %p279 = por %p277, %p278
    %p280 = scmp.ne.s32.totalorder %s268, %s269
    %p281 = scmp.eq.s32.totalorder %s28, 1
    %p282 = por %p280, %p281
    %p284 = scmp.ne.s32.totalorder %s269, %s283
    %p285 = scmp.eq.s32.totalorder %s28, 0
    %p286 = por %p284, %p285
    %s288 = sadd.s32 %s287, 1
    %p291 = scmp.eq.s32.totalorder %s22, 1
    %p292 = scmp.ne.s32.totalorder %s287, %s289
    %p293 = scmp.eq.s32.totalorder %s22, 0
    %p294 = por %p292, %p293
    %p295 = scmp.ne.s32.totalorder %s287, %s289
    %p296 = scmp.eq.s32.totalorder %s27, 1
    %p297 = por %p295, %p296
    %p298 = scmp.ne.s32.totalorder %s289, %s290
    %p299 = scmp.eq.s32.totalorder %s27, 0
    %p300 = por %p298, %p299
    %p301 = scmp.ne.s32.totalorder %s289, %s290
    %p302 = scmp.eq.s32.totalorder %s28, 1
    %p303 = por %p301, %p302
    %p305 = scmp.ne.s32.totalorder %s290, %s304
    %p306 = scmp.eq.s32.totalorder %s28, 0
    %p307 = por %p305, %p306
    %s309 = sadd.s32 %s308, 1
    %p312 = scmp.eq.s32.totalorder %s22, 1
    %p313 = scmp.ne.s32.totalorder %s308, %s310
    %p314 = scmp.eq.s32.totalorder %s22, 0
    %p315 = por %p313, %p314
    %p316 = scmp.ne.s32.totalorder %s308, %s310
    %p317 = scmp.eq.s32.totalorder %s27, 1
    %p318 = por %p316, %p317
    %p319 = scmp.ne.s32.totalorder %s310, %s311
    %p320 = scmp.eq.s32.totalorder %s27, 0
    %p321 = por %p319, %p320
    %p322 = scmp.ne.s32.totalorder %s310, %s311
    %p323 = scmp.eq.s32.totalorder %s28, 1
    %p324 = por %p322, %p323
    %p326 = scmp.ne.s32.totalorder %s311, %s325
    %p327 = scmp.eq.s32.totalorder %s28, 0
    %p328 = por %p326, %p327
    %s330 = sadd.s32 %s329, 1
    %p333 = scmp.eq.s32.totalorder %s22, 1
    %p334 = scmp.ne.s32.totalorder %s329, %s331
    %p335 = scmp.eq.s32.totalorder %s22, 0
    %p336 = por %p334, %p335
    %p337 = scmp.ne.s32.totalorder %s329, %s331
    %p338 = scmp.eq.s32.totalorder %s27, 1
    %p339 = por %p337, %p338
    %p340 = scmp.ne.s32.totalorder %s331, %s332
    %p341 = scmp.eq.s32.totalorder %s27, 0
    %p342 = por %p340, %p341
    %p343 = scmp.ne.s32.totalorder %s331, %s332
    %p344 = scmp.eq.s32.totalorder %s28, 1
    %p345 = por %p343, %p344
    %p347 = scmp.ne.s32.totalorder %s332, %s346
    %p348 = scmp.eq.s32.totalorder %s28, 0
    %p349 = por %p347, %p348
    %s350 = ssub.s32 %s29, %s41
    %s351 = ssub.s32 %s30, %s37
    %s352 = sor.u32 %s350, %s351
    %p353 = scmp.eq.s32.totalorder %s352, 0
    %s355 = sadd.s32 %s354, 1
    %s356 = scalar_select %p353, %s354, %s355
    %p359 = pneg %p353
    %p360 = scmp.eq.s32.totalorder %s22, 1
    %p361 = por %p359, %p360
    %p362 = scmp.ne.s32.totalorder %s354, %s357
    %p363 = scmp.eq.s32.totalorder %s22, 0
    %p364 = por %p362, %p363
    %p365 = scmp.ne.s32.totalorder %s354, %s357
    %p366 = scmp.eq.s32.totalorder %s27, 1
    %p367 = por %p365, %p366
    %p368 = scmp.ne.s32.totalorder %s357, %s358
    %p369 = scmp.eq.s32.totalorder %s27, 0
    %p370 = por %p368, %p369
    %p371 = scmp.ne.s32.totalorder %s357, %s358
    %p372 = scmp.eq.s32.totalorder %s28, 1
    %p373 = por %p371, %p372
    %p375 = scmp.ne.s32.totalorder %s358, %s374
    %p376 = scmp.eq.s32.totalorder %s28, 0
    %p377 = por %p375, %p376
    %s378 = ssub.s32 %s29, %s41
    %s379 = ssub.s32 %s30, %s37
    %s380 = sor.u32 %s378, %s379
    %p381 = scmp.eq.s32.totalorder %s380, 0
    %s383 = sadd.s32 %s382, 1
    %s384 = scalar_select %p381, %s382, %s383
    %p387 = pneg %p381
    %p388 = scmp.eq.s32.totalorder %s22, 1
    %p389 = por %p387, %p388
    %p390 = scmp.ne.s32.totalorder %s382, %s385
    %p391 = scmp.eq.s32.totalorder %s22, 0
    %p392 = por %p390, %p391
    %p393 = scmp.ne.s32.totalorder %s382, %s385
    %p394 = scmp.eq.s32.totalorder %s27, 1
    %p395 = por %p393, %p394
    %p396 = scmp.ne.s32.totalorder %s385, %s386
    %p397 = scmp.eq.s32.totalorder %s27, 0
    %p398 = por %p396, %p397
    %p399 = scmp.ne.s32.totalorder %s385, %s386
    %p400 = scmp.eq.s32.totalorder %s28, 1
    %p401 = por %p399, %p400
    %p403 = scmp.ne.s32.totalorder %s386, %s402
    %p404 = scmp.eq.s32.totalorder %s28, 0
    %p405 = por %p403, %p404
    %p406 = scmp.le.s32.totalorder 1, %s22
    %p407 = scmp.lt.s32.totalorder %s22, 3
    %p408 = pnand %p406, %p407
    %p409 = pneg %p408
    // Predicated region
    $region9: #{flow_assembly_forward.5} parent=5 // pred_check
      _
    $region10: #{flow_assembly_forward.5} parent=5 // pred_check_branch
      %411 = sbr.rel (%p408) target = $region12
    $region11: #{flow_assembly_forward.5} parent=5 // pred_region
      %s412 = ssub.s32 %s22, 1
      // Predicated region
      $region13: #{flow_assembly_forward.5} parent=11 // pred_check
        %p413 = pneg %p111
      $region14: #{flow_assembly_forward.5} parent=11 // pred_check_branch
        %415 = sbr.rel (%p413) target = $region16
      $region15: #{flow_assembly_forward.5} parent=11 // pred_region
        _
      $region16: #{flow_assembly_forward.5} parent=11 // pred_fallthru
        _
      // Predicated region
      $region17: #{flow_assembly_forward.5} parent=11 // pred_check
        %p416 = pneg %p132
      $region18: #{flow_assembly_forward.5} parent=11 // pred_check_branch
        %418 = sbr.rel (%p416) target = $region20
      $region19: #{flow_assembly_forward.5} parent=11 // pred_region
        _
      $region20: #{flow_assembly_forward.5} parent=11 // pred_fallthru
        _
      // Predicated region
      $region21: #{flow_assembly_forward.5} parent=11 // pred_check
        %p419 = pneg %p153
      $region22: #{flow_assembly_forward.5} parent=11 // pred_check_branch
        %421 = sbr.rel (%p419) target = $region24
      $region23: #{flow_assembly_forward.5} parent=11 // pred_region
        _
      $region24: #{flow_assembly_forward.5} parent=11 // pred_fallthru
        _
      // Predicated region
      $region25: #{flow_assembly_forward.5} parent=11 // pred_check
        %p422 = pneg %p174
      $region26: #{flow_assembly_forward.5} parent=11 // pred_check_branch
        %424 = sbr.rel (%p422) target = $region28
      $region27: #{flow_assembly_forward.5} parent=11 // pred_region
        _
      $region28: #{flow_assembly_forward.5} parent=11 // pred_fallthru
        _
      // Predicated region
      $region29: #{flow_assembly_forward.5} parent=11 // pred_check
        %p425 = pneg %p195
      $region30: #{flow_assembly_forward.5} parent=11 // pred_check_branch
        %427 = sbr.rel (%p425) target = $region32
      $region31: #{flow_assembly_forward.5} parent=11 // pred_region
        _
      $region32: #{flow_assembly_forward.5} parent=11 // pred_fallthru
        _
      // Predicated region
      $region33: #{flow_assembly_forward.5} parent=11 // pred_check
        %p428 = pneg %p216
      $region34: #{flow_assembly_forward.5} parent=11 // pred_check_branch
        %430 = sbr.rel (%p428) target = $region36
      $region35: #{flow_assembly_forward.5} parent=11 // pred_region
        _
      $region36: #{flow_assembly_forward.5} parent=11 // pred_fallthru
        _
      // Predicated region
      $region37: #{flow_assembly_forward.5} parent=11 // pred_check
        %p431 = pneg %p237
      $region38: #{flow_assembly_forward.5} parent=11 // pred_check_branch
        %433 = sbr.rel (%p431) target = $region40
      $region39: #{flow_assembly_forward.5} parent=11 // pred_region
        _
      $region40: #{flow_assembly_forward.5} parent=11 // pred_fallthru
        _
      // Predicated region
      $region41: #{flow_assembly_forward.5} parent=11 // pred_check
        %p434 = pneg %p258
      $region42: #{flow_assembly_forward.5} parent=11 // pred_check_branch
        %436 = sbr.rel (%p434) target = $region44
      $region43: #{flow_assembly_forward.5} parent=11 // pred_region
        _
      $region44: #{flow_assembly_forward.5} parent=11 // pred_fallthru
        _
      // Predicated region
      $region45: #{flow_assembly_forward.5} parent=11 // pred_check
        %p437 = pneg %p279
      $region46: #{flow_assembly_forward.5} parent=11 // pred_check_branch
        %439 = sbr.rel (%p437) target = $region48
      $region47: #{flow_assembly_forward.5} parent=11 // pred_region
        _
      $region48: #{flow_assembly_forward.5} parent=11 // pred_fallthru
        _
      // Predicated region
      $region49: #{flow_assembly_forward.5} parent=11 // pred_check
        %p440 = pneg %p300
      $region50: #{flow_assembly_forward.5} parent=11 // pred_check_branch
        %442 = sbr.rel (%p440) target = $region52
      $region51: #{flow_assembly_forward.5} parent=11 // pred_region
        _
      $region52: #{flow_assembly_forward.5} parent=11 // pred_fallthru
        _
      // Predicated region
      $region53: #{flow_assembly_forward.5} parent=11 // pred_check
        %p443 = pneg %p321
      $region54: #{flow_assembly_forward.5} parent=11 // pred_check_branch
        %445 = sbr.rel (%p443) target = $region56
      $region55: #{flow_assembly_forward.5} parent=11 // pred_region
        _
      $region56: #{flow_assembly_forward.5} parent=11 // pred_fallthru
        _
      // Predicated region
      $region57: #{flow_assembly_forward.5} parent=11 // pred_check
        %p446 = pneg %p342
      $region58: #{flow_assembly_forward.5} parent=11 // pred_check_branch
        %448 = sbr.rel (%p446) target = $region60
      $region59: #{flow_assembly_forward.5} parent=11 // pred_region
        _
      $region60: #{flow_assembly_forward.5} parent=11 // pred_fallthru
        _
    $region12: #{flow_assembly_forward.5} parent=5 // pred_fallthru
      _
    %p449 = scmp.lt.s32.totalorder %s22, 2
    // Predicated region
    $region61: #{flow_assembly_forward.5} parent=5 // pred_check
      %p450 = pneg %p449
    $region62: #{flow_assembly_forward.5} parent=5 // pred_check_branch
      %452 = sbr.rel (%p450) target = $region64
    $region63: #{flow_assembly_forward.5} parent=5 // pred_region
      // Predicated region
      $region65: #{flow_assembly_forward.5} parent=63 // pred_check
        %p453 = pneg %p56
      $region66: #{flow_assembly_forward.5} parent=63 // pred_check_branch
        %455 = sbr.rel (%p453) target = $region68
      $region67: #{flow_assembly_forward.5} parent=63 // pred_region
        %p456 = scmp.lt.s32.totalorder %s29, 1
        %s457 = scalar_select %p456, %s29, 1
        %p458 = scmp.lt.s32.totalorder %s30, 0
        %s459 = scalar_select %p458, %s30, 0
        %s460 = sadd.s32 %s459, %s457
        %s461 = smul.addr %s460, 2
        %s462 = scalar_lea.vmem %s0, %s461
      $region68: #{flow_assembly_forward.5} parent=63 // pred_fallthru
        _
      // Predicated region
      $region69: #{flow_assembly_forward.5} parent=63 // pred_check
        %p463 = pneg %p84
      $region70: #{flow_assembly_forward.5} parent=63 // pred_check_branch
        %465 = sbr.rel (%p463) target = $region72
      $region71: #{flow_assembly_forward.5} parent=63 // pred_region
        %p466 = scmp.lt.s32.totalorder %s29, 1
        %s467 = scalar_select %p466, %s29, 1
        %p468 = scmp.lt.s32.totalorder %s30, 0
        %s469 = scalar_select %p468, %s30, 0
        %s470 = sadd.s32 %s469, %s467
        %s471 = smul.addr %s470, 2
        %s472 = scalar_lea.vmem %s1, %s471
      $region72: #{flow_assembly_forward.5} parent=63 // pred_fallthru
        _
    $region64: #{flow_assembly_forward.5} parent=5 // pred_fallthru
      _
    %p473 = scmp.le.s32.totalorder 1, %s22
    %p474 = scmp.lt.s32.totalorder %s22, 3
    %p475 = pnand %p473, %p474
    %p476 = pneg %p475
    // Predicated region
    $region73: #{flow_assembly_forward.5} parent=5 // pred_check
      _
    $region74: #{flow_assembly_forward.5} parent=5 // pred_check_branch
      %478 = sbr.rel (%p475) target = $region76
    $region75: #{flow_assembly_forward.5} parent=5 // pred_region
      %s479 = ssub.s32 %s22, 1
      %p480 = scmp.lt.s32.totalorder %s31, 1
      %s481 = scalar_select %p480, %s31, 1
      %p482 = scmp.lt.s32.totalorder %s32, 0
      %s483 = scalar_select %p482, %s32, 0
      %s484 = sadd.s32 %s483, %s481
      %s485 = smul.addr %s484, 2
      %s486 = scalar_lea.vmem %s0, %s485
      %p487 = pneg %p62
      %p488 = pneg %p59
      %p489 = scmp.lt.s32.totalorder %s31, 1
      %s490 = scalar_select %p489, %s31, 1
      %p491 = scmp.lt.s32.totalorder %s32, 0
      %s492 = scalar_select %p491, %s32, 0
      %s493 = sadd.s32 %s492, %s490
      %s494 = smul.addr %s493, 2
      %s495 = scalar_lea.vmem %s1, %s494
      %p496 = pneg %p90
      %p497 = pneg %p87
      %p498 = pneg %p111
      %p499 = pneg %p108
      %p500 = pneg %p132
      %p501 = pneg %p129
      %p502 = pneg %p153
      %p503 = pneg %p150
      %p504 = pneg %p174
      %p505 = pneg %p171
      %p506 = pneg %p195
      %p507 = pneg %p192
      %p508 = pneg %p216
      %p509 = pneg %p213
      %p510 = pneg %p237
      %p511 = pneg %p234
      %p512 = pneg %p258
      %p513 = pneg %p255
      %p514 = pneg %p279
      %p515 = pneg %p276
      %p516 = pneg %p300
      %p517 = pneg %p297
      %p518 = pneg %p321
      %p519 = pneg %p318
      %p520 = pneg %p342
      %p521 = pneg %p339
      %p522 = pneg %p370
      %p523 = pneg %p367
      %p524 = scmp.lt.s32.totalorder %s31, 1
      %s525 = scalar_select %p524, %s31, 1
      %p526 = scmp.lt.s32.totalorder %s32, 0
      %s527 = scalar_select %p526, %s32, 0
      %s528 = sadd.s32 %s527, %s525
      %s529 = smul.addr %s528, 2
      %s530 = scalar_lea.vmem %s14, %s529
      %p531 = pneg %p398
      %p532 = pneg %p395
      %p533 = scmp.lt.s32.totalorder %s31, 1
      %s534 = scalar_select %p533, %s31, 1
      %p535 = scmp.lt.s32.totalorder %s32, 0
      %s536 = scalar_select %p535, %s32, 0
      %s537 = sadd.s32 %s536, %s534
      %s538 = smul.addr %s537, 8
      %s539 = scalar_lea.vmem %s15, %s538
      %p540 = scmp.lt.s32.totalorder %s31, 1
      %s541 = scalar_select %p540, %s31, 1
      %p542 = scmp.lt.s32.totalorder %s32, 0
      %s543 = scalar_select %p542, %s32, 0
      %s544 = sadd.s32 %s543, %s541
      %s545 = smul.addr %s544, 2
      %s546 = scalar_lea.vmem %s0, %s545
      %p547 = scmp.lt.s32.totalorder %s31, 1
      %s548 = scalar_select %p547, %s31, 1
      %p549 = scmp.lt.s32.totalorder %s32, 0
      %s550 = scalar_select %p549, %s32, 0
      %s551 = sadd.s32 %s550, %s548
      %s552 = smul.addr %s551, 2
      %s553 = scalar_lea.vmem %s1, %s552
      %p554 = scmp.lt.s32.totalorder %s31, 1
      %s555 = scalar_select %p554, %s31, 1
      %p556 = scmp.lt.s32.totalorder %s32, 0
      %s557 = scalar_select %p556, %s32, 0
      %s558 = sadd.s32 %s557, %s555
      %s559 = smul.addr %s558, 2
      %s560 = scalar_lea.vmem %s14, %s559
      %p561 = scmp.lt.s32.totalorder %s31, 1
      %s562 = scalar_select %p561, %s31, 1
      %p563 = scmp.lt.s32.totalorder %s32, 0
      %s564 = scalar_select %p563, %s32, 0
      %s565 = sadd.s32 %s564, %s562
      %s566 = smul.addr %s565, 8
      %s567 = scalar_lea.vmem %s15, %s566
      %v568 = vld [vmem:[%s546] sm:$0x3]
      %v569 = vld [vmem:[%s553] sm:$0x3]
      %v570 = vld [vmem:[%s2] sm:$0xff]
      %v571 = vld [vmem:[%s2 + $0x8] sm:$0xff]
      %v572 = vld [vmem:[%s2 + $0x10] sm:$0xff]
      %v573 = vld [vmem:[%s2 + $0x18] sm:$0xff]
      %v574 = vld [vmem:[%s3] sm:$0xff]
      %v575 = vld [vmem:[%s3 + $0x8] sm:$0xff]
      %v576 = vld [vmem:[%s3 + $0x10] sm:$0xff]
      %v577 = vld [vmem:[%s3 + $0x18] sm:$0xff]
      %579 = vset.pattern.permute.xlu0 0
      %580 = vperm.xlu0 %579, %v574
      %v581 = vpop.permute.xlu0 %580
      %584 = vset.pattern.permute.xlu0 0
      %585 = vperm.xlu0 %584, %v575
      %v586 = vpop.permute.xlu0 %585
      %589 = vset.pattern.permute.xlu0 0
      %590 = vperm.xlu0 %589, %v576
      %v591 = vpop.permute.xlu0 %590
      %594 = vset.pattern.permute.xlu0 0
      %595 = vperm.xlu0 %594, %v577
      %v596 = vpop.permute.xlu0 %595
      %vm598 = vcmask 15360
      %v600 = vsel %vm598, %v570, 0
      %v603 = vsel %vm598, %v571, 0
      %v606 = vsel %vm598, %v572, 0
      %v609 = vsel %vm598, %v573, 0
      %vm611 = vcmask 1041408
      %v613 = vsel %vm611, %v568, 0
      %615 = vmatpush.msra.mxu0 0.0
      %616 = vmatpush.msra.mxu0 0.0
      %617 = vmatpush.msra.mxu0 0.0
      %618 = vmatpush.msra.mxu0 0.0
      %619 = vmatpush.msra.mxu0 0.0
      %620 = vmatpush.msra.mxu0 0.0
      %621 = vmatpush.msra.mxu0 0.0
      %622 = vmatpush.msra.mxu0 0.0
      %623 = vmatpush.msra.mxu0 0.0
      %624 = vmatpush.msra.mxu0 0.0
      %625 = vmatpush.msra.mxu0 0.0
      %626 = vmatpush.msra.mxu0 0.0
      %627 = vmatpush.msra.mxu0 0.0
      %628 = vmatpush.msra.mxu0 0.0
      %629 = vmatpush.msra.mxu0 0.0
      %630 = vmatpush.msra.mxu0 %v613
      %631 = vmatmul.f32.gmra.mxu0 %v600
      %v632 = vpop.f32.mrf.mxu0
      %v633 = vadd.f32 %v581, %v632
      %634 = vmatmul.f32.gmra.mxu0 %v603
      %v635 = vpop.f32.mrf.mxu0
      %v636 = vadd.f32 %v586, %v635
      %637 = vmatmul.f32.gmra.mxu0 %v606
      %v638 = vpop.f32.mrf.mxu0
      %v639 = vadd.f32 %v591, %v638
      %640 = vmatmul.f32.gmra.mxu0 %v609
      %v641 = vpop.f32.mrf.mxu0
      %v642 = vadd.f32 %v596, %v641
      %643 = vdwg.mxu0
      %v644 = vmax.f32 %v633, 0.0
      %v645 = vmax.f32 %v636, 0.0
      %v646 = vmax.f32 %v639, 0.0
      %v647 = vmax.f32 %v642, 0.0
      %v648 = vld [vmem:[%s4] sm:$0xff]
      %v649 = vld [vmem:[%s4 + $0x8] sm:$0xff]
      %v650 = vld [vmem:[%s4 + $0x10] sm:$0xff]
      %v651 = vld [vmem:[%s4 + $0x18] sm:$0xff]
      %v652 = vld [vmem:[%s5] sm:$0xff]
      %v653 = vld [vmem:[%s5 + $0x8] sm:$0xff]
      %v654 = vld [vmem:[%s5 + $0x10] sm:$0xff]
      %v655 = vld [vmem:[%s5 + $0x18] sm:$0xff]
      %657 = vset.pattern.permute.xlu0 0
      %658 = vperm.xlu0 %657, %v652
      %v659 = vpop.permute.xlu0 %658
      %662 = vset.pattern.permute.xlu0 0
      %663 = vperm.xlu0 %662, %v653
      %v664 = vpop.permute.xlu0 %663
      %667 = vset.pattern.permute.xlu0 0
      %668 = vperm.xlu0 %667, %v654
      %v669 = vpop.permute.xlu0 %668
      %672 = vset.pattern.permute.xlu0 0
      %673 = vperm.xlu0 %672, %v655
      %v674 = vpop.permute.xlu0 %673
      %vm676 = vcmask 261120
      %v678 = vsel %vm676, %v648, 0
      %v681 = vsel %vm676, %v649, 0
      %v684 = vsel %vm676, %v650, 0
      %v687 = vsel %vm676, %v651, 0
      %689 = vmatpush.msra.mxu0 0.0
      %690 = vmatpush.msra.mxu0 0.0
      %691 = vmatpush.msra.mxu0 0.0
      %692 = vmatpush.msra.mxu0 0.0
      %693 = vmatpush.msra.mxu0 0.0
      %694 = vmatpush.msra.mxu0 0.0
      %695 = vmatpush.msra.mxu0 0.0
      %696 = vmatpush.msra.mxu0 0.0
      %697 = vmatpush.msra.mxu0 0.0
      %698 = vmatpush.msra.mxu0 0.0
      %699 = vmatpush.msra.mxu0 0.0
      %700 = vmatpush.msra.mxu0 0.0
      %701 = vmatpush.msra.mxu0 %v647
      %702 = vmatpush.msra.mxu0 %v646
      %703 = vmatpush.msra.mxu0 %v645
      %704 = vmatpush.msra.mxu0 %v644
      %705 = vmatmul.f32.gmra.mxu0 %v678
      %v706 = vpop.f32.mrf.mxu0
      %v707 = vadd.f32 %v659, %v706
      %708 = vmatmul.f32.gmra.mxu0 %v681
      %v709 = vpop.f32.mrf.mxu0
      %v710 = vadd.f32 %v664, %v709
      %711 = vmatmul.f32.gmra.mxu0 %v684
      %v712 = vpop.f32.mrf.mxu0
      %v713 = vadd.f32 %v669, %v712
      %714 = vmatmul.f32.gmra.mxu0 %v687
      %v715 = vpop.f32.mrf.mxu0
      %v716 = vadd.f32 %v674, %v715
      %717 = vdwg.mxu0
      %v718 = vmax.f32 %v707, 0.0
      %v719 = vmax.f32 %v710, 0.0
      %v720 = vmax.f32 %v713, 0.0
      %v721 = vmax.f32 %v716, 0.0
      %v722 = vld [vmem:[%s6] sm:$0x3]
      %v723 = vld [vmem:[%s7] sm:$0x3]
      %725 = vset.pattern.permute.xlu0 0
      %726 = vperm.xlu0 %725, %v723
      %v727 = vpop.permute.xlu0 %726
      %v730 = vsel %vm676, %v722, 0
      %732 = vmatpush.msra.mxu0 0.0
      %733 = vmatpush.msra.mxu0 0.0
      %734 = vmatpush.msra.mxu0 0.0
      %735 = vmatpush.msra.mxu0 0.0
      %736 = vmatpush.msra.mxu0 0.0
      %737 = vmatpush.msra.mxu0 0.0
      %738 = vmatpush.msra.mxu0 0.0
      %739 = vmatpush.msra.mxu0 0.0
      %740 = vmatpush.msra.mxu0 0.0
      %741 = vmatpush.msra.mxu0 0.0
      %742 = vmatpush.msra.mxu0 0.0
      %743 = vmatpush.msra.mxu0 0.0
      %744 = vmatpush.msra.mxu0 %v721
      %745 = vmatpush.msra.mxu0 %v720
      %746 = vmatpush.msra.mxu0 %v719
      %747 = vmatpush.msra.mxu0 %v718
      %748 = vmatmul.f32.gmra.mxu0 %v730
      %v749 = vpop.f32.mrf.mxu0
      %v750 = vadd.f32 %v727, %v749
      %751 = vdwg.mxu0
      %v752 = vld [vmem:[%s8] sm:$0xff]
      %v753 = vld [vmem:[%s8 + $0x8] sm:$0xff]
      %v754 = vld [vmem:[%s8 + $0x10] sm:$0xff]
      %v755 = vld [vmem:[%s8 + $0x18] sm:$0xff]
      %v756 = vld [vmem:[%s9] sm:$0xff]
      %v757 = vld [vmem:[%s9 + $0x8] sm:$0xff]
      %v758 = vld [vmem:[%s9 + $0x10] sm:$0xff]
      %v759 = vld [vmem:[%s9 + $0x18] sm:$0xff]
      %761 = vset.pattern.permute.xlu0 0
      %762 = vperm.xlu0 %761, %v756
      %v763 = vpop.permute.xlu0 %762
      %766 = vset.pattern.permute.xlu0 0
      %767 = vperm.xlu0 %766, %v757
      %v768 = vpop.permute.xlu0 %767
      %771 = vset.pattern.permute.xlu0 0
      %772 = vperm.xlu0 %771, %v758
      %v773 = vpop.permute.xlu0 %772
      %776 = vset.pattern.permute.xlu0 0
      %777 = vperm.xlu0 %776, %v759
      %v778 = vpop.permute.xlu0 %777
      %v781 = vsel %vm598, %v752, 0
      %v784 = vsel %vm598, %v753, 0
      %v787 = vsel %vm598, %v754, 0
      %v790 = vsel %vm598, %v755, 0
      %792 = vmatpush.msra.mxu0 0.0
      %793 = vmatpush.msra.mxu0 0.0
      %794 = vmatpush.msra.mxu0 0.0
      %795 = vmatpush.msra.mxu0 0.0
      %796 = vmatpush.msra.mxu0 0.0
      %797 = vmatpush.msra.mxu0 0.0
      %798 = vmatpush.msra.mxu0 0.0
      %799 = vmatpush.msra.mxu0 0.0
      %800 = vmatpush.msra.mxu0 0.0
      %801 = vmatpush.msra.mxu0 0.0
      %802 = vmatpush.msra.mxu0 0.0
      %803 = vmatpush.msra.mxu0 0.0
      %804 = vmatpush.msra.mxu0 0.0
      %805 = vmatpush.msra.mxu0 0.0
      %806 = vmatpush.msra.mxu0 0.0
      %807 = vmatpush.msra.mxu0 %v613
      %808 = vmatmul.f32.gmra.mxu0 %v781
      %v809 = vpop.f32.mrf.mxu0
      %v810 = vadd.f32 %v763, %v809
      %811 = vmatmul.f32.gmra.mxu0 %v784
      %v812 = vpop.f32.mrf.mxu0
      %v813 = vadd.f32 %v768, %v812
      %814 = vmatmul.f32.gmra.mxu0 %v787
      %v815 = vpop.f32.mrf.mxu0
      %v816 = vadd.f32 %v773, %v815
      %817 = vmatmul.f32.gmra.mxu0 %v790
      %v818 = vpop.f32.mrf.mxu0
      %v819 = vadd.f32 %v778, %v818
      %820 = vdwg.mxu0
      %v821 = vmax.f32 %v810, 0.0
      %v822 = vmax.f32 %v813, 0.0
      %v823 = vmax.f32 %v816, 0.0
      %v824 = vmax.f32 %v819, 0.0
      %v825 = vld [vmem:[%s10] sm:$0xff]
      %v826 = vld [vmem:[%s10 + $0x8] sm:$0xff]
      %v827 = vld [vmem:[%s10 + $0x10] sm:$0xff]
      %v828 = vld [vmem:[%s10 + $0x18] sm:$0xff]
      %v829 = vld [vmem:[%s11] sm:$0xff]
      %v830 = vld [vmem:[%s11 + $0x8] sm:$0xff]
      %v831 = vld [vmem:[%s11 + $0x10] sm:$0xff]
      %v832 = vld [vmem:[%s11 + $0x18] sm:$0xff]
      %834 = vset.pattern.permute.xlu0 0
      %835 = vperm.xlu0 %834, %v829
      %v836 = vpop.permute.xlu0 %835
      %839 = vset.pattern.permute.xlu0 0
      %840 = vperm.xlu0 %839, %v830
      %v841 = vpop.permute.xlu0 %840
      %844 = vset.pattern.permute.xlu0 0
      %845 = vperm.xlu0 %844, %v831
      %v846 = vpop.permute.xlu0 %845
      %849 = vset.pattern.permute.xlu0 0
      %850 = vperm.xlu0 %849, %v832
      %v851 = vpop.permute.xlu0 %850
      %v854 = vsel %vm676, %v825, 0
      %v857 = vsel %vm676, %v826, 0
      %v860 = vsel %vm676, %v827, 0
      %v863 = vsel %vm676, %v828, 0
      %865 = vmatpush.msra.mxu0 0.0
      %866 = vmatpush.msra.mxu0 0.0
      %867 = vmatpush.msra.mxu0 0.0
      %868 = vmatpush.msra.mxu0 0.0
      %869 = vmatpush.msra.mxu0 0.0
      %870 = vmatpush.msra.mxu0 0.0
      %871 = vmatpush.msra.mxu0 0.0
      %872 = vmatpush.msra.mxu0 0.0
      %873 = vmatpush.msra.mxu0 0.0
      %874 = vmatpush.msra.mxu0 0.0
      %875 = vmatpush.msra.mxu0 0.0
      %876 = vmatpush.msra.mxu0 0.0
      %877 = vmatpush.msra.mxu0 %v824
      %878 = vmatpush.msra.mxu0 %v823
      %879 = vmatpush.msra.mxu0 %v822
      %880 = vmatpush.msra.mxu0 %v821
      %881 = vmatmul.f32.gmra.mxu0 %v854
      %v882 = vpop.f32.mrf.mxu0
      %v883 = vadd.f32 %v836, %v882
      %884 = vmatmul.f32.gmra.mxu0 %v857
      %v885 = vpop.f32.mrf.mxu0
      %v886 = vadd.f32 %v841, %v885
      %887 = vmatmul.f32.gmra.mxu0 %v860
      %v888 = vpop.f32.mrf.mxu0
      %v889 = vadd.f32 %v846, %v888
      %890 = vmatmul.f32.gmra.mxu0 %v863
      %v891 = vpop.f32.mrf.mxu0
      %v892 = vadd.f32 %v851, %v891
      %893 = vdwg.mxu0
      %v894 = vmax.f32 %v883, 0.0
      %v895 = vmax.f32 %v886, 0.0
      %v896 = vmax.f32 %v889, 0.0
      %v897 = vmax.f32 %v892, 0.0
      %v898 = vld [vmem:[%s12] sm:$0x3]
      %v899 = vld [vmem:[%s13] sm:$0x3]
      %901 = vset.pattern.permute.xlu0 0
      %902 = vperm.xlu0 %901, %v899
      %v903 = vpop.permute.xlu0 %902
      %v906 = vsel %vm676, %v898, 0
      %908 = vmatpush.msra.mxu0 0.0
      %909 = vmatpush.msra.mxu0 0.0
      %910 = vmatpush.msra.mxu0 0.0
      %911 = vmatpush.msra.mxu0 0.0
      %912 = vmatpush.msra.mxu0 0.0
      %913 = vmatpush.msra.mxu0 0.0
      %914 = vmatpush.msra.mxu0 0.0
      %915 = vmatpush.msra.mxu0 0.0
      %916 = vmatpush.msra.mxu0 0.0
      %917 = vmatpush.msra.mxu0 0.0
      %918 = vmatpush.msra.mxu0 0.0
      %919 = vmatpush.msra.mxu0 0.0
      %920 = vmatpush.msra.mxu0 %v897
      %921 = vmatpush.msra.mxu0 %v896
      %922 = vmatpush.msra.mxu0 %v895
      %923 = vmatpush.msra.mxu0 %v894
      %924 = vmatmul.f32.gmra.mxu0 %v906
      %v925 = vpop.f32.mrf.mxu0
      %v926 = vadd.f32 %v903, %v925
      %927 = vdwg.mxu0
      %v928 = vmul.f32 %v750, 0.5263158
      %v929 = vand.u32 2147483647, %v928
      %vm930 = vcmp.gt.f32.partialorder %v929, 2.4142137
      %vm931 = vcmp.gt.f32.partialorder %v929, 0.41421357
      %v932 = vmax.f32 %v929, 1e-30
      %v933 = vrcp.pop %v932
      %v934 = vmul.f32 %v932, %v933
      %v935 = vsub.f32 1.0, %v934
      %v936 = vmul.f32 %v933, %v935
      %v937 = vadd.f32 %v933, %v936
      %vm938 = vweird.f32 %v932
      %vm939 = vweird.f32 %v933
      %vm940 = vmor %vm938, %vm939
      %v941 = vsel %vm940, %v933, %v937
      %v942 = vand.u32 2147483647, %v932
      %vm943 = vcmp.eq.f32.partialorder %v942, 8.507059e+37
      %v944 = vand.u32 %v932, 2147483648
      %v945 = vor.u32 1.1754944e-38, %v944
      %v946 = vsel %vm943, %v945, %v941
      %v947 = vmul.f32 -1.0, %v946
      %v948 = vsub.f32 %v929, 1.0
      %v949 = vadd.f32 %v929, 1.0
      %v950 = vrcp.pop %v949
      %v951 = vmul.f32 %v949, %v950
      %v952 = vsub.f32 1.0, %v951
      %v953 = vmul.f32 %v950, %v952
      %v954 = vadd.f32 %v950, %v953
      %vm955 = vweird.f32 %v949
      %vm956 = vweird.f32 %v950
      %vm957 = vmor %vm955, %vm956
      %v958 = vsel %vm957, %v950, %v954
      %v959 = vand.u32 2147483647, %v949
      %vm960 = vcmp.eq.f32.partialorder %v959, 8.507059e+37
      %v961 = vand.u32 %v949, 2147483648
      %v962 = vor.u32 1.1754944e-38, %v961
      %v963 = vsel %vm960, %v962, %v958
      %v964 = vmul.f32 %v948, %v963
      %v965 = vsel %vm931, %v964, %v929
      %v966 = vsel %vm930, %v947, %v965
      %v967 = vsel %vm931, 0.7853982, 0.0
      %v968 = vsel %vm930, 1.5707964, %v967
      %v969 = vmul.f32 %v966, %v966
      %v970 = vmul.f32 %v969, 0.080537446
      %v971 = vsub.f32 %v970, 0.13877685
      %v972 = vmul.f32 %v971, %v969
      %v973 = vadd.f32 %v972, 0.19977711
      %v974 = vmul.f32 %v973, %v969
      %v975 = vsub.f32 %v974, 0.3333295
      %v976 = vmul.f32 %v966, %v969
      %v977 = vmul.f32 %v976, %v975
      %v978 = vadd.f32 %v966, %v977
      %v979 = vadd.f32 %v968, %v978
      %vm980 = vcmp.lt.f32.partialorder %v928, 0.0
      %v981 = vsub.f32 0.0, %v979
      %v982 = vsel %vm980, %v981, %v979
      %v983 = vmul.f32 %v982, 1.2095776
      %v984 = vadd.f32 %v569, %v926
      %v985 = vmul.f32 %v983, 1.442695
      %v986 = vpow.pop %v985
      %v987 = vmul.f32 %v984, %v986
      %vm988 = vcmask 123904
      %989 = vst.msk [vmem:[%s560] sm:$0x3] %vm988, %v987
      %v990 = vsel %vm988, %v983, 0.0
      %991 = vadd.xlane.f32.xlu0 %v990
      %v992 = vpop.xlane.xlu0 %991
      %v993 = vsel %vm611, %v992, 0.0
      %v994 = vrot.slane %v993, 4
      %v995 = vadd.f32 %v993, %v994
      %v996 = vrot.slane %v995, 2
      %v997 = vadd.f32 %v995, %v996
      %v998 = vrot.slane %v997, 1
      %v999 = vadd.f32 %v997, %v998
      %1000 = vst [vmem:[%s567] sm:$0xff] %v999
      %p1001 = scmp.lt.s32.totalorder %s31, 1
      %s1002 = scalar_select %p1001, %s31, 1
      %p1003 = scmp.lt.s32.totalorder %s32, 0
      %s1004 = scalar_select %p1003, %s32, 0
      %s1005 = sadd.s32 %s1004, %s1002
      %s1006 = smul.addr %s1005, 2
      %s1007 = scalar_lea.vmem %s14, %s1006
      %p1008 = scmp.lt.s32.totalorder %s31, 1
      %s1009 = scalar_select %p1008, %s31, 1
      %p1010 = scmp.lt.s32.totalorder %s32, 0
      %s1011 = scalar_select %p1010, %s32, 0
      %s1012 = sadd.s32 %s1011, %s1009
      %s1013 = smul.addr %s1012, 8
      %s1014 = scalar_lea.vmem %s15, %s1013
      // Predicated region
      $region77: #{flow_assembly_forward.5} parent=75 // pred_check
        %p1015 = pneg %p367
      $region78: #{flow_assembly_forward.5} parent=75 // pred_check_branch
        %1017 = sbr.rel (%p1015) target = $region80
      $region79: #{flow_assembly_forward.5} parent=75 // pred_region
        _
      $region80: #{flow_assembly_forward.5} parent=75 // pred_fallthru
        _
      // Predicated region
      $region81: #{flow_assembly_forward.5} parent=75 // pred_check
        %p1018 = pneg %p395
      $region82: #{flow_assembly_forward.5} parent=75 // pred_check_branch
        %1020 = sbr.rel (%p1018) target = $region84
      $region83: #{flow_assembly_forward.5} parent=75 // pred_region
        _
      $region84: #{flow_assembly_forward.5} parent=75 // pred_fallthru
        _
    $region76: #{flow_assembly_forward.5} parent=5 // pred_fallthru
      _
    %p1021 = scmp.le.s32.totalorder 2, %s22
    // Predicated region
    $region85: #{flow_assembly_forward.5} parent=5 // pred_check
      %p1022 = pneg %p1021
    $region86: #{flow_assembly_forward.5} parent=5 // pred_check_branch
      %1024 = sbr.rel (%p1022) target = $region88
    $region87: #{flow_assembly_forward.5} parent=5 // pred_region
      %s1025 = ssub.s32 %s22, 2
      // Predicated region
      $region89: #{flow_assembly_forward.5} parent=87 // pred_check
        %p1026 = pneg %p373
      $region90: #{flow_assembly_forward.5} parent=87 // pred_check_branch
        %1028 = sbr.rel (%p1026) target = $region92
      $region91: #{flow_assembly_forward.5} parent=87 // pred_region
        %p1029 = scmp.lt.s32.totalorder %s33, 1
        %s1030 = scalar_select %p1029, %s33, 1
        %p1031 = scmp.lt.s32.totalorder %s34, 0
        %s1032 = scalar_select %p1031, %s34, 0
        %s1033 = sadd.s32 %s1032, %s1030
        %s1034 = smul.addr %s1033, 2
        %s1035 = scalar_lea.vmem %s14, %s1034
      $region92: #{flow_assembly_forward.5} parent=87 // pred_fallthru
        _
      // Predicated region
      $region93: #{flow_assembly_forward.5} parent=87 // pred_check
        %p1036 = pneg %p401
      $region94: #{flow_assembly_forward.5} parent=87 // pred_check_branch
        %1038 = sbr.rel (%p1036) target = $region96
      $region95: #{flow_assembly_forward.5} parent=87 // pred_region
        %p1039 = scmp.lt.s32.totalorder %s33, 1
        %s1040 = scalar_select %p1039, %s33, 1
        %p1041 = scmp.lt.s32.totalorder %s34, 0
        %s1042 = scalar_select %p1041, %s34, 0
        %s1043 = sadd.s32 %s1042, %s1040
        %s1044 = smul.addr %s1043, 8
        %s1045 = scalar_lea.vmem %s15, %s1044
      $region96: #{flow_assembly_forward.5} parent=87 // pred_fallthru
        _
    $region88: #{flow_assembly_forward.5} parent=5 // pred_fallthru
      _
  $region6: #{flow_assembly_forward.5} parent=0 // loop_footer
    %s26 = sadd.s32 1, %s22
  $region7: #{flow_assembly_forward.5} parent=0 // loop_footer_branch
    %21 = sbr.rel target = $region3
  $region8: #{flow_assembly_forward.5} parent=0 // loop_exit
    _

// kernel: flow_assembly_forward.4
$region0: #{flow_assembly_forward.4}
  #allocation0 [shape = 'u32[]', space=smem, size = 0x4, offset = 0x4, fixed_abs, tag = 'smem constant byte address 0x4 - core index']
  #allocation1 [shape = 'u32[72,128]{1,0:T(1,128)}', space=vmem, size = 0x9000, scoped, tag = 'internal scratch']
  %s0 = inlined_call_operand.vmem [shape: f32[2,48,16], index: 0, kind: input, shape index: {}]
  %s1 = inlined_call_operand.vmem [shape: f32[2,2,16], index: 1, kind: input, shape index: {}]
  %s2 = inlined_call_operand.vmem [shape: f32[256,48], index: 2, kind: input, shape index: {}]
  %s3 = inlined_call_operand.vmem [shape: f32[256,1], index: 3, kind: input, shape index: {}]
  %s4 = inlined_call_operand.vmem [shape: f32[256,256], index: 4, kind: input, shape index: {}]
  %s5 = inlined_call_operand.vmem [shape: f32[256,1], index: 5, kind: input, shape index: {}]
  %s6 = inlined_call_operand.vmem [shape: f32[16,256], index: 6, kind: input, shape index: {}]
  %s7 = inlined_call_operand.vmem [shape: f32[16,1], index: 7, kind: input, shape index: {}]
  %s8 = inlined_call_operand.vmem [shape: f32[256,48], index: 8, kind: input, shape index: {}]
  %s9 = inlined_call_operand.vmem [shape: f32[256,1], index: 9, kind: input, shape index: {}]
  %s10 = inlined_call_operand.vmem [shape: f32[256,256], index: 10, kind: input, shape index: {}]
  %s11 = inlined_call_operand.vmem [shape: f32[256,1], index: 11, kind: input, shape index: {}]
  %s12 = inlined_call_operand.vmem [shape: f32[16,256], index: 12, kind: input, shape index: {}]
  %s13 = inlined_call_operand.vmem [shape: f32[16,1], index: 13, kind: input, shape index: {}]
  %s14 = inlined_call_operand.vmem [shape: f32[2,2,16], index: 14, kind: output, shape index: {0}]
  %s15 = inlined_call_operand.vmem [shape: f32[2,1,8,128], index: 15, kind: output, shape index: {1}]
  %16 = xla_tuple %s14, %s15
  %s17 = sld [smem:[#allocation0]]
  $region97: #{flow_assembly_forward.4} parent=0
    _
  %s19 = ssub.s32 1, %s17
  %s20 = scalar_select 0, %s19, %s17
  loop: start=0, step=1, limit=4
  $region2: #{flow_assembly_forward.4} parent=0 // loop_pre_header
    _
  $region3: #{flow_assembly_forward.4} parent=0 // loop_header
    %s22 = sphi 0, %s26
    %p23 = scmp.ge.s32.totalorder %s22, 4
    %s29 = sphi 0, %s41
    %s30 = sphi 0, %s37
    %s31 = sphi 0, %s29
    %s32 = sphi 0, %s30
    %s33 = sphi 0, %s31
    %s34 = sphi 0, %s32
    %s46 = sphi 0, %s48
    %s49 = sphi 0, %s46
    %s50 = sphi 0, %s49
    %s66 = sphi 0, %s50
    %s74 = sphi 0, %s76
    %s77 = sphi 0, %s74
    %s78 = sphi 0, %s77
    %s94 = sphi 0, %s78
    %s98 = sphi 0, %s98
    %s100 = sphi 0, %s98
    %s101 = sphi 0, %s100
    %s115 = sphi 0, %s101
    %s119 = sphi 0, %s119
    %s121 = sphi 0, %s119
    %s122 = sphi 0, %s121
    %s136 = sphi 0, %s122
    %s140 = sphi 0, %s140
    %s142 = sphi 0, %s140
    %s143 = sphi 0, %s142
    %s157 = sphi 0, %s143
    %s161 = sphi 0, %s161
    %s163 = sphi 0, %s161
    %s164 = sphi 0, %s163
    %s178 = sphi 0, %s164
    %s182 = sphi 0, %s182
    %s184 = sphi 0, %s182
    %s185 = sphi 0, %s184
    %s199 = sphi 0, %s185
    %s203 = sphi 0, %s203
    %s205 = sphi 0, %s203
    %s206 = sphi 0, %s205
    %s220 = sphi 0, %s206
    %s224 = sphi 0, %s224
    %s226 = sphi 0, %s224
    %s227 = sphi 0, %s226
    %s241 = sphi 0, %s227
    %s245 = sphi 0, %s245
    %s247 = sphi 0, %s245
    %s248 = sphi 0, %s247
    %s262 = sphi 0, %s248
    %s266 = sphi 0, %s266
    %s268 = sphi 0, %s266
    %s269 = sphi 0, %s268
    %s283 = sphi 0, %s269
    %s287 = sphi 0, %s287
    %s289 = sphi 0, %s287
    %s290 = sphi 0, %s289
    %s304 = sphi 0, %s290
    %s308 = sphi 0, %s308
    %s310 = sphi 0, %s308
    %s311 = sphi 0, %s310
    %s325 = sphi 0, %s311
    %s329 = sphi 0, %s329
    %s331 = sphi 0, %s329
    %s332 = sphi 0, %s331
    %s346 = sphi 0, %s332
    %s354 = sphi 0, %s356
    %s357 = sphi 0, %s354
    %s358 = sphi 0, %s357
    %s374 = sphi 0, %s358
    %s382 = sphi 0, %s384
    %s385 = sphi 0, %s382
    %s386 = sphi 0, %s385
    %s402 = sphi 0, %s386
  $region4: #{flow_assembly_forward.4} parent=0 // loop_header_branch
    %25 = sbr.rel (%p23) target = $region8
  $region5: #{flow_assembly_forward.4} parent=0 // loop_body
    %s27 = ssub.s32 %s22, 1
    %s28 = ssub.s32 %s22, 2
    %s35 = sadd.s32 1, %s30
    %p36 = scmp.ge.s32.totalorder %s35, 1
    %s37 = scalar_select %p36, 0, %s35
    %s38 = sadd.s32 1, %s29
    %s39 = scalar_select %p36, %s38, %s29
    %p40 = scmp.ge.s32.totalorder %s39, 2
    %s41 = scalar_select %p40, 0, %s39
    %s42 = ssub.s32 %s29, %s41
    %s43 = ssub.s32 %s30, %s37
    %s44 = sor.u32 %s42, %s43
    %p45 = scmp.eq.s32.totalorder %s44, 0
    %s47 = sadd.s32 %s46, 1
    %s48 = scalar_select %p45, %s46, %s47
    %p51 = pneg %p45
    %p52 = scmp.eq.s32.totalorder %s22, 1
    %p53 = por %p51, %p52
    %p54 = scmp.ne.s32.totalorder %s46, %s49
    %p55 = scmp.eq.s32.totalorder %s22, 0
    %p56 = por %p54, %p55
    %p57 = scmp.ne.s32.totalorder %s46, %s49
    %p58 = scmp.eq.s32.totalorder %s27, 1
    %p59 = por %p57, %p58
    %p60 = scmp.ne.s32.totalorder %s49, %s50
    %p61 = scmp.eq.s32.totalorder %s27, 0
    %p62 = por %p60, %p61
    %p63 = scmp.ne.s32.totalorder %s49, %s50
    %p64 = scmp.eq.s32.totalorder %s28, 1
    %p65 = por %p63, %p64
    %p67 = scmp.ne.s32.totalorder %s50, %s66
    %p68 = scmp.eq.s32.totalorder %s28, 0
    %p69 = por %p67, %p68
    %s70 = ssub.s32 %s29, %s41
    %s71 = ssub.s32 %s30, %s37
    %s72 = sor.u32 %s70, %s71
    %p73 = scmp.eq.s32.totalorder %s72, 0
    %s75 = sadd.s32 %s74, 1
    %s76 = scalar_select %p73, %s74, %s75
    %p79 = pneg %p73
    %p80 = scmp.eq.s32.totalorder %s22, 1
    %p81 = por %p79, %p80
    %p82 = scmp.ne.s32.totalorder %s74, %s77
    %p83 = scmp.eq.s32.totalorder %s22, 0
    %p84 = por %p82, %p83
    %p85 = scmp.ne.s32.totalorder %s74, %s77
    %p86 = scmp.eq.s32.totalorder %s27, 1
    %p87 = por %p85, %p86
    %p88 = scmp.ne.s32.totalorder %s77, %s78
    %p89 = scmp.eq.s32.totalorder %s27, 0
    %p90 = por %p88, %p89
    %p91 = scmp.ne.s32.totalorder %s77, %s78
    %p92 = scmp.eq.s32.totalorder %s28, 1
    %p93 = por %p91, %p92
    %p95 = scmp.ne.s32.totalorder %s78, %s94
    %p96 = scmp.eq.s32.totalorder %s28, 0
    %p97 = por %p95, %p96
    %s99 = sadd.s32 %s98, 1
    %p102 = scmp.eq.s32.totalorder %s22, 1
    %p103 = scmp.ne.s32.totalorder %s98, %s100
    %p104 = scmp.eq.s32.totalorder %s22, 0
    %p105 = por %p103, %p104
    %p106 = scmp.ne.s32.totalorder %s98, %s100
    %p107 = scmp.eq.s32.totalorder %s27, 1
    %p108 = por %p106, %p107
    %p109 = scmp.ne.s32.totalorder %s100, %s101
    %p110 = scmp.eq.s32.totalorder %s27, 0
    %p111 = por %p109, %p110
    %p112 = scmp.ne.s32.totalorder %s100, %s101
    %p113 = scmp.eq.s32.totalorder %s28, 1
    %p114 = por %p112, %p113
    %p116 = scmp.ne.s32.totalorder %s101, %s115
    %p117 = scmp.eq.s32.totalorder %s28, 0
    %p118 = por %p116, %p117
    %s120 = sadd.s32 %s119, 1
    %p123 = scmp.eq.s32.totalorder %s22, 1
    %p124 = scmp.ne.s32.totalorder %s119, %s121
    %p125 = scmp.eq.s32.totalorder %s22, 0
    %p126 = por %p124, %p125
    %p127 = scmp.ne.s32.totalorder %s119, %s121
    %p128 = scmp.eq.s32.totalorder %s27, 1
    %p129 = por %p127, %p128
    %p130 = scmp.ne.s32.totalorder %s121, %s122
    %p131 = scmp.eq.s32.totalorder %s27, 0
    %p132 = por %p130, %p131
    %p133 = scmp.ne.s32.totalorder %s121, %s122
    %p134 = scmp.eq.s32.totalorder %s28, 1
    %p135 = por %p133, %p134
    %p137 = scmp.ne.s32.totalorder %s122, %s136
    %p138 = scmp.eq.s32.totalorder %s28, 0
    %p139 = por %p137, %p138
    %s141 = sadd.s32 %s140, 1
    %p144 = scmp.eq.s32.totalorder %s22, 1
    %p145 = scmp.ne.s32.totalorder %s140, %s142
    %p146 = scmp.eq.s32.totalorder %s22, 0
    %p147 = por %p145, %p146
    %p148 = scmp.ne.s32.totalorder %s140, %s142
    %p149 = scmp.eq.s32.totalorder %s27, 1
    %p150 = por %p148, %p149
    %p151 = scmp.ne.s32.totalorder %s142, %s143
    %p152 = scmp.eq.s32.totalorder %s27, 0
    %p153 = por %p151, %p152
    %p154 = scmp.ne.s32.totalorder %s142, %s143
    %p155 = scmp.eq.s32.totalorder %s28, 1
    %p156 = por %p154, %p155
    %p158 = scmp.ne.s32.totalorder %s143, %s157
    %p159 = scmp.eq.s32.totalorder %s28, 0
    %p160 = por %p158, %p159
    %s162 = sadd.s32 %s161, 1
    %p165 = scmp.eq.s32.totalorder %s22, 1
    %p166 = scmp.ne.s32.totalorder %s161, %s163
    %p167 = scmp.eq.s32.totalorder %s22, 0
    %p168 = por %p166, %p167
    %p169 = scmp.ne.s32.totalorder %s161, %s163
    %p170 = scmp.eq.s32.totalorder %s27, 1
    %p171 = por %p169, %p170
    %p172 = scmp.ne.s32.totalorder %s163, %s164
    %p173 = scmp.eq.s32.totalorder %s27, 0
    %p174 = por %p172, %p173
    %p175 = scmp.ne.s32.totalorder %s163, %s164
    %p176 = scmp.eq.s32.totalorder %s28, 1
    %p177 = por %p175, %p176
    %p179 = scmp.ne.s32.totalorder %s164, %s178
    %p180 = scmp.eq.s32.totalorder %s28, 0
    %p181 = por %p179, %p180
    %s183 = sadd.s32 %s182, 1
    %p186 = scmp.eq.s32.totalorder %s22, 1
    %p187 = scmp.ne.s32.totalorder %s182, %s184
    %p188 = scmp.eq.s32.totalorder %s22, 0
    %p189 = por %p187, %p188
    %p190 = scmp.ne.s32.totalorder %s182, %s184
    %p191 = scmp.eq.s32.totalorder %s27, 1
    %p192 = por %p190, %p191
    %p193 = scmp.ne.s32.totalorder %s184, %s185
    %p194 = scmp.eq.s32.totalorder %s27, 0
    %p195 = por %p193, %p194
    %p196 = scmp.ne.s32.totalorder %s184, %s185
    %p197 = scmp.eq.s32.totalorder %s28, 1
    %p198 = por %p196, %p197
    %p200 = scmp.ne.s32.totalorder %s185, %s199
    %p201 = scmp.eq.s32.totalorder %s28, 0
    %p202 = por %p200, %p201
    %s204 = sadd.s32 %s203, 1
    %p207 = scmp.eq.s32.totalorder %s22, 1
    %p208 = scmp.ne.s32.totalorder %s203, %s205
    %p209 = scmp.eq.s32.totalorder %s22, 0
    %p210 = por %p208, %p209
    %p211 = scmp.ne.s32.totalorder %s203, %s205
    %p212 = scmp.eq.s32.totalorder %s27, 1
    %p213 = por %p211, %p212
    %p214 = scmp.ne.s32.totalorder %s205, %s206
    %p215 = scmp.eq.s32.totalorder %s27, 0
    %p216 = por %p214, %p215
    %p217 = scmp.ne.s32.totalorder %s205, %s206
    %p218 = scmp.eq.s32.totalorder %s28, 1
    %p219 = por %p217, %p218
    %p221 = scmp.ne.s32.totalorder %s206, %s220
    %p222 = scmp.eq.s32.totalorder %s28, 0
    %p223 = por %p221, %p222
    %s225 = sadd.s32 %s224, 1
    %p228 = scmp.eq.s32.totalorder %s22, 1
    %p229 = scmp.ne.s32.totalorder %s224, %s226
    %p230 = scmp.eq.s32.totalorder %s22, 0
    %p231 = por %p229, %p230
    %p232 = scmp.ne.s32.totalorder %s224, %s226
    %p233 = scmp.eq.s32.totalorder %s27, 1
    %p234 = por %p232, %p233
    %p235 = scmp.ne.s32.totalorder %s226, %s227
    %p236 = scmp.eq.s32.totalorder %s27, 0
    %p237 = por %p235, %p236
    %p238 = scmp.ne.s32.totalorder %s226, %s227
    %p239 = scmp.eq.s32.totalorder %s28, 1
    %p240 = por %p238, %p239
    %p242 = scmp.ne.s32.totalorder %s227, %s241
    %p243 = scmp.eq.s32.totalorder %s28, 0
    %p244 = por %p242, %p243
    %s246 = sadd.s32 %s245, 1
    %p249 = scmp.eq.s32.totalorder %s22, 1
    %p250 = scmp.ne.s32.totalorder %s245, %s247
    %p251 = scmp.eq.s32.totalorder %s22, 0
    %p252 = por %p250, %p251
    %p253 = scmp.ne.s32.totalorder %s245, %s247
    %p254 = scmp.eq.s32.totalorder %s27, 1
    %p255 = por %p253, %p254
    %p256 = scmp.ne.s32.totalorder %s247, %s248
    %p257 = scmp.eq.s32.totalorder %s27, 0
    %p258 = por %p256, %p257
    %p259 = scmp.ne.s32.totalorder %s247, %s248
    %p260 = scmp.eq.s32.totalorder %s28, 1
    %p261 = por %p259, %p260
    %p263 = scmp.ne.s32.totalorder %s248, %s262
    %p264 = scmp.eq.s32.totalorder %s28, 0
    %p265 = por %p263, %p264
    %s267 = sadd.s32 %s266, 1
    %p270 = scmp.eq.s32.totalorder %s22, 1
    %p271 = scmp.ne.s32.totalorder %s266, %s268
    %p272 = scmp.eq.s32.totalorder %s22, 0
    %p273 = por %p271, %p272
    %p274 = scmp.ne.s32.totalorder %s266, %s268
    %p275 = scmp.eq.s32.totalorder %s27, 1
    %p276 = por %p274, %p275
    %p277 = scmp.ne.s32.totalorder %s268, %s269
    %p278 = scmp.eq.s32.totalorder %s27, 0
    %p279 = por %p277, %p278
    %p280 = scmp.ne.s32.totalorder %s268, %s269
    %p281 = scmp.eq.s32.totalorder %s28, 1
    %p282 = por %p280, %p281
    %p284 = scmp.ne.s32.totalorder %s269, %s283
    %p285 = scmp.eq.s32.totalorder %s28, 0
    %p286 = por %p284, %p285
    %s288 = sadd.s32 %s287, 1
    %p291 = scmp.eq.s32.totalorder %s22, 1
    %p292 = scmp.ne.s32.totalorder %s287, %s289
    %p293 = scmp.eq.s32.totalorder %s22, 0
    %p294 = por %p292, %p293
    %p295 = scmp.ne.s32.totalorder %s287, %s289
    %p296 = scmp.eq.s32.totalorder %s27, 1
    %p297 = por %p295, %p296
    %p298 = scmp.ne.s32.totalorder %s289, %s290
    %p299 = scmp.eq.s32.totalorder %s27, 0
    %p300 = por %p298, %p299
    %p301 = scmp.ne.s32.totalorder %s289, %s290
    %p302 = scmp.eq.s32.totalorder %s28, 1
    %p303 = por %p301, %p302
    %p305 = scmp.ne.s32.totalorder %s290, %s304
    %p306 = scmp.eq.s32.totalorder %s28, 0
    %p307 = por %p305, %p306
    %s309 = sadd.s32 %s308, 1
    %p312 = scmp.eq.s32.totalorder %s22, 1
    %p313 = scmp.ne.s32.totalorder %s308, %s310
    %p314 = scmp.eq.s32.totalorder %s22, 0
    %p315 = por %p313, %p314
    %p316 = scmp.ne.s32.totalorder %s308, %s310
    %p317 = scmp.eq.s32.totalorder %s27, 1
    %p318 = por %p316, %p317
    %p319 = scmp.ne.s32.totalorder %s310, %s311
    %p320 = scmp.eq.s32.totalorder %s27, 0
    %p321 = por %p319, %p320
    %p322 = scmp.ne.s32.totalorder %s310, %s311
    %p323 = scmp.eq.s32.totalorder %s28, 1
    %p324 = por %p322, %p323
    %p326 = scmp.ne.s32.totalorder %s311, %s325
    %p327 = scmp.eq.s32.totalorder %s28, 0
    %p328 = por %p326, %p327
    %s330 = sadd.s32 %s329, 1
    %p333 = scmp.eq.s32.totalorder %s22, 1
    %p334 = scmp.ne.s32.totalorder %s329, %s331
    %p335 = scmp.eq.s32.totalorder %s22, 0
    %p336 = por %p334, %p335
    %p337 = scmp.ne.s32.totalorder %s329, %s331
    %p338 = scmp.eq.s32.totalorder %s27, 1
    %p339 = por %p337, %p338
    %p340 = scmp.ne.s32.totalorder %s331, %s332
    %p341 = scmp.eq.s32.totalorder %s27, 0
    %p342 = por %p340, %p341
    %p343 = scmp.ne.s32.totalorder %s331, %s332
    %p344 = scmp.eq.s32.totalorder %s28, 1
    %p345 = por %p343, %p344
    %p347 = scmp.ne.s32.totalorder %s332, %s346
    %p348 = scmp.eq.s32.totalorder %s28, 0
    %p349 = por %p347, %p348
    %s350 = ssub.s32 %s29, %s41
    %s351 = ssub.s32 %s30, %s37
    %s352 = sor.u32 %s350, %s351
    %p353 = scmp.eq.s32.totalorder %s352, 0
    %s355 = sadd.s32 %s354, 1
    %s356 = scalar_select %p353, %s354, %s355
    %p359 = pneg %p353
    %p360 = scmp.eq.s32.totalorder %s22, 1
    %p361 = por %p359, %p360
    %p362 = scmp.ne.s32.totalorder %s354, %s357
    %p363 = scmp.eq.s32.totalorder %s22, 0
    %p364 = por %p362, %p363
    %p365 = scmp.ne.s32.totalorder %s354, %s357
    %p366 = scmp.eq.s32.totalorder %s27, 1
    %p367 = por %p365, %p366
    %p368 = scmp.ne.s32.totalorder %s357, %s358
    %p369 = scmp.eq.s32.totalorder %s27, 0
    %p370 = por %p368, %p369
    %p371 = scmp.ne.s32.totalorder %s357, %s358
    %p372 = scmp.eq.s32.totalorder %s28, 1
    %p373 = por %p371, %p372
    %p375 = scmp.ne.s32.totalorder %s358, %s374
    %p376 = scmp.eq.s32.totalorder %s28, 0
    %p377 = por %p375, %p376
    %s378 = ssub.s32 %s29, %s41
    %s379 = ssub.s32 %s30, %s37
    %s380 = sor.u32 %s378, %s379
    %p381 = scmp.eq.s32.totalorder %s380, 0
    %s383 = sadd.s32 %s382, 1
    %s384 = scalar_select %p381, %s382, %s383
    %p387 = pneg %p381
    %p388 = scmp.eq.s32.totalorder %s22, 1
    %p389 = por %p387, %p388
    %p390 = scmp.ne.s32.totalorder %s382, %s385
    %p391 = scmp.eq.s32.totalorder %s22, 0
    %p392 = por %p390, %p391
    %p393 = scmp.ne.s32.totalorder %s382, %s385
    %p394 = scmp.eq.s32.totalorder %s27, 1
    %p395 = por %p393, %p394
    %p396 = scmp.ne.s32.totalorder %s385, %s386
    %p397 = scmp.eq.s32.totalorder %s27, 0
    %p398 = por %p396, %p397
    %p399 = scmp.ne.s32.totalorder %s385, %s386
    %p400 = scmp.eq.s32.totalorder %s28, 1
    %p401 = por %p399, %p400
    %p403 = scmp.ne.s32.totalorder %s386, %s402
    %p404 = scmp.eq.s32.totalorder %s28, 0
    %p405 = por %p403, %p404
    %p406 = scmp.le.s32.totalorder 1, %s22
    %p407 = scmp.lt.s32.totalorder %s22, 3
    %p408 = pnand %p406, %p407
    %p409 = pneg %p408
    // Predicated region
    $region9: #{flow_assembly_forward.4} parent=5 // pred_check
      _
    $region10: #{flow_assembly_forward.4} parent=5 // pred_check_branch
      %411 = sbr.rel (%p408) target = $region12
    $region11: #{flow_assembly_forward.4} parent=5 // pred_region
      %s412 = ssub.s32 %s22, 1
      // Predicated region
      $region13: #{flow_assembly_forward.4} parent=11 // pred_check
        %p413 = pneg %p111
      $region14: #{flow_assembly_forward.4} parent=11 // pred_check_branch
        %415 = sbr.rel (%p413) target = $region16
      $region15: #{flow_assembly_forward.4} parent=11 // pred_region
        _
      $region16: #{flow_assembly_forward.4} parent=11 // pred_fallthru
        _
      // Predicated region
      $region17: #{flow_assembly_forward.4} parent=11 // pred_check
        %p416 = pneg %p132
      $region18: #{flow_assembly_forward.4} parent=11 // pred_check_branch
        %418 = sbr.rel (%p416) target = $region20
      $region19: #{flow_assembly_forward.4} parent=11 // pred_region
        _
      $region20: #{flow_assembly_forward.4} parent=11 // pred_fallthru
        _
      // Predicated region
      $region21: #{flow_assembly_forward.4} parent=11 // pred_check
        %p419 = pneg %p153
      $region22: #{flow_assembly_forward.4} parent=11 // pred_check_branch
        %421 = sbr.rel (%p419) target = $region24
      $region23: #{flow_assembly_forward.4} parent=11 // pred_region
        _
      $region24: #{flow_assembly_forward.4} parent=11 // pred_fallthru
        _
      // Predicated region
      $region25: #{flow_assembly_forward.4} parent=11 // pred_check
        %p422 = pneg %p174
      $region26: #{flow_assembly_forward.4} parent=11 // pred_check_branch
        %424 = sbr.rel (%p422) target = $region28
      $region27: #{flow_assembly_forward.4} parent=11 // pred_region
        _
      $region28: #{flow_assembly_forward.4} parent=11 // pred_fallthru
        _
      // Predicated region
      $region29: #{flow_assembly_forward.4} parent=11 // pred_check
        %p425 = pneg %p195
      $region30: #{flow_assembly_forward.4} parent=11 // pred_check_branch
        %427 = sbr.rel (%p425) target = $region32
      $region31: #{flow_assembly_forward.4} parent=11 // pred_region
        _
      $region32: #{flow_assembly_forward.4} parent=11 // pred_fallthru
        _
      // Predicated region
      $region33: #{flow_assembly_forward.4} parent=11 // pred_check
        %p428 = pneg %p216
      $region34: #{flow_assembly_forward.4} parent=11 // pred_check_branch
        %430 = sbr.rel (%p428) target = $region36
      $region35: #{flow_assembly_forward.4} parent=11 // pred_region
        _
      $region36: #{flow_assembly_forward.4} parent=11 // pred_fallthru
        _
      // Predicated region
      $region37: #{flow_assembly_forward.4} parent=11 // pred_check
        %p431 = pneg %p237
      $region38: #{flow_assembly_forward.4} parent=11 // pred_check_branch
        %433 = sbr.rel (%p431) target = $region40
      $region39: #{flow_assembly_forward.4} parent=11 // pred_region
        _
      $region40: #{flow_assembly_forward.4} parent=11 // pred_fallthru
        _
      // Predicated region
      $region41: #{flow_assembly_forward.4} parent=11 // pred_check
        %p434 = pneg %p258
      $region42: #{flow_assembly_forward.4} parent=11 // pred_check_branch
        %436 = sbr.rel (%p434) target = $region44
      $region43: #{flow_assembly_forward.4} parent=11 // pred_region
        _
      $region44: #{flow_assembly_forward.4} parent=11 // pred_fallthru
        _
      // Predicated region
      $region45: #{flow_assembly_forward.4} parent=11 // pred_check
        %p437 = pneg %p279
      $region46: #{flow_assembly_forward.4} parent=11 // pred_check_branch
        %439 = sbr.rel (%p437) target = $region48
      $region47: #{flow_assembly_forward.4} parent=11 // pred_region
        _
      $region48: #{flow_assembly_forward.4} parent=11 // pred_fallthru
        _
      // Predicated region
      $region49: #{flow_assembly_forward.4} parent=11 // pred_check
        %p440 = pneg %p300
      $region50: #{flow_assembly_forward.4} parent=11 // pred_check_branch
        %442 = sbr.rel (%p440) target = $region52
      $region51: #{flow_assembly_forward.4} parent=11 // pred_region
        _
      $region52: #{flow_assembly_forward.4} parent=11 // pred_fallthru
        _
      // Predicated region
      $region53: #{flow_assembly_forward.4} parent=11 // pred_check
        %p443 = pneg %p321
      $region54: #{flow_assembly_forward.4} parent=11 // pred_check_branch
        %445 = sbr.rel (%p443) target = $region56
      $region55: #{flow_assembly_forward.4} parent=11 // pred_region
        _
      $region56: #{flow_assembly_forward.4} parent=11 // pred_fallthru
        _
      // Predicated region
      $region57: #{flow_assembly_forward.4} parent=11 // pred_check
        %p446 = pneg %p342
      $region58: #{flow_assembly_forward.4} parent=11 // pred_check_branch
        %448 = sbr.rel (%p446) target = $region60
      $region59: #{flow_assembly_forward.4} parent=11 // pred_region
        _
      $region60: #{flow_assembly_forward.4} parent=11 // pred_fallthru
        _
    $region12: #{flow_assembly_forward.4} parent=5 // pred_fallthru
      _
    %p449 = scmp.lt.s32.totalorder %s22, 2
    // Predicated region
    $region61: #{flow_assembly_forward.4} parent=5 // pred_check
      %p450 = pneg %p449
    $region62: #{flow_assembly_forward.4} parent=5 // pred_check_branch
      %452 = sbr.rel (%p450) target = $region64
    $region63: #{flow_assembly_forward.4} parent=5 // pred_region
      // Predicated region
      $region65: #{flow_assembly_forward.4} parent=63 // pred_check
        %p453 = pneg %p56
      $region66: #{flow_assembly_forward.4} parent=63 // pred_check_branch
        %455 = sbr.rel (%p453) target = $region68
      $region67: #{flow_assembly_forward.4} parent=63 // pred_region
        %p456 = scmp.lt.s32.totalorder %s29, 1
        %s457 = scalar_select %p456, %s29, 1
        %p458 = scmp.lt.s32.totalorder %s30, 0
        %s459 = scalar_select %p458, %s30, 0
        %s460 = smul.addr %s457, 6
        %s461 = sadd.s32 %s459, %s460
        %s462 = smul.addr %s461, 8
        %s463 = scalar_lea.vmem %s0, %s462
      $region68: #{flow_assembly_forward.4} parent=63 // pred_fallthru
        _
      // Predicated region
      $region69: #{flow_assembly_forward.4} parent=63 // pred_check
        %p464 = pneg %p84
      $region70: #{flow_assembly_forward.4} parent=63 // pred_check_branch
        %466 = sbr.rel (%p464) target = $region72
      $region71: #{flow_assembly_forward.4} parent=63 // pred_region
        %p467 = scmp.lt.s32.totalorder %s29, 1
        %s468 = scalar_select %p467, %s29, 1
        %p469 = scmp.lt.s32.totalorder %s30, 0
        %s470 = scalar_select %p469, %s30, 0
        %s471 = sadd.s32 %s470, %s468
        %s472 = smul.addr %s471, 2
        %s473 = scalar_lea.vmem %s1, %s472
      $region72: #{flow_assembly_forward.4} parent=63 // pred_fallthru
        _
    $region64: #{flow_assembly_forward.4} parent=5 // pred_fallthru
      _
    %p474 = scmp.le.s32.totalorder 1, %s22
    %p475 = scmp.lt.s32.totalorder %s22, 3
    %p476 = pnand %p474, %p475
    %p477 = pneg %p476
    // Predicated region
    $region73: #{flow_assembly_forward.4} parent=5 // pred_check
      _
    $region74: #{flow_assembly_forward.4} parent=5 // pred_check_branch
      %479 = sbr.rel (%p476) target = $region76
    $region75: #{flow_assembly_forward.4} parent=5 // pred_region
      %s480 = ssub.s32 %s22, 1
      %p481 = scmp.lt.s32.totalorder %s31, 1
      %s482 = scalar_select %p481, %s31, 1
      %p483 = scmp.lt.s32.totalorder %s32, 0
      %s484 = scalar_select %p483, %s32, 0
      %s485 = smul.addr %s482, 6
      %s486 = sadd.s32 %s484, %s485
      %s487 = smul.addr %s486, 8
      %s488 = scalar_lea.vmem %s0, %s487
      %p489 = pneg %p62
      %p490 = pneg %p59
      %p491 = scmp.lt.s32.totalorder %s31, 1
      %s492 = scalar_select %p491, %s31, 1
      %p493 = scmp.lt.s32.totalorder %s32, 0
      %s494 = scalar_select %p493, %s32, 0
      %s495 = sadd.s32 %s494, %s492
      %s496 = smul.addr %s495, 2
      %s497 = scalar_lea.vmem %s1, %s496
      %p498 = pneg %p90
      %p499 = pneg %p87
      %p500 = pneg %p111
      %p501 = pneg %p108
      %p502 = pneg %p132
      %p503 = pneg %p129
      %p504 = pneg %p153
      %p505 = pneg %p150
      %p506 = pneg %p174
      %p507 = pneg %p171
      %p508 = pneg %p195
      %p509 = pneg %p192
      %p510 = pneg %p216
      %p511 = pneg %p213
      %p512 = pneg %p237
      %p513 = pneg %p234
      %p514 = pneg %p258
      %p515 = pneg %p255
      %p516 = pneg %p279
      %p517 = pneg %p276
      %p518 = pneg %p300
      %p519 = pneg %p297
      %p520 = pneg %p321
      %p521 = pneg %p318
      %p522 = pneg %p342
      %p523 = pneg %p339
      %p524 = pneg %p370
      %p525 = pneg %p367
      %p526 = scmp.lt.s32.totalorder %s31, 1
      %s527 = scalar_select %p526, %s31, 1
      %p528 = scmp.lt.s32.totalorder %s32, 0
      %s529 = scalar_select %p528, %s32, 0
      %s530 = sadd.s32 %s529, %s527
      %s531 = smul.addr %s530, 2
      %s532 = scalar_lea.vmem %s14, %s531
      %p533 = pneg %p398
      %p534 = pneg %p395
      %p535 = scmp.lt.s32.totalorder %s31, 1
      %s536 = scalar_select %p535, %s31, 1
      %p537 = scmp.lt.s32.totalorder %s32, 0
      %s538 = scalar_select %p537, %s32, 0
      %s539 = sadd.s32 %s538, %s536
      %s540 = smul.addr %s539, 8
      %s541 = scalar_lea.vmem %s15, %s540
      %p542 = scmp.lt.s32.totalorder %s31, 1
      %s543 = scalar_select %p542, %s31, 1
      %p544 = scmp.lt.s32.totalorder %s32, 0
      %s545 = scalar_select %p544, %s32, 0
      %s546 = smul.addr %s543, 6
      %s547 = sadd.s32 %s545, %s546
      %s548 = smul.addr %s547, 8
      %s549 = scalar_lea.vmem %s0, %s548
      %p550 = scmp.lt.s32.totalorder %s31, 1
      %s551 = scalar_select %p550, %s31, 1
      %p552 = scmp.lt.s32.totalorder %s32, 0
      %s553 = scalar_select %p552, %s32, 0
      %s554 = sadd.s32 %s553, %s551
      %s555 = smul.addr %s554, 2
      %s556 = scalar_lea.vmem %s1, %s555
      %p557 = scmp.lt.s32.totalorder %s31, 1
      %s558 = scalar_select %p557, %s31, 1
      %p559 = scmp.lt.s32.totalorder %s32, 0
      %s560 = scalar_select %p559, %s32, 0
      %s561 = sadd.s32 %s560, %s558
      %s562 = smul.addr %s561, 2
      %s563 = scalar_lea.vmem %s14, %s562
      %p564 = scmp.lt.s32.totalorder %s31, 1
      %s565 = scalar_select %p564, %s31, 1
      %p566 = scmp.lt.s32.totalorder %s32, 0
      %s567 = scalar_select %p566, %s32, 0
      %s568 = sadd.s32 %s567, %s565
      %s569 = smul.addr %s568, 8
      %s570 = scalar_lea.vmem %s15, %s569
      %v571 = vld [vmem:[%s549] sm:$0xff]
      %v572 = vld [vmem:[%s549 + $0x8] sm:$0xff]
      %v573 = vld [vmem:[%s549 + $0x10] sm:$0xff]
      %v574 = vld [vmem:[%s549 + $0x18] sm:$0xff]
      %v575 = vld [vmem:[%s549 + $0x20] sm:$0xff]
      %v576 = vld [vmem:[%s549 + $0x28] sm:$0xff]
      %v577 = vld [vmem:[%s556] sm:$0x3]
      %v578 = vld [vmem:[%s2] sm:$0xff]
      %v579 = vld [vmem:[%s2 + $0x8] sm:$0xff]
      %v580 = vld [vmem:[%s2 + $0x10] sm:$0xff]
      %v581 = vld [vmem:[%s2 + $0x18] sm:$0xff]
      %v582 = vld [vmem:[%s2 + $0x20] sm:$0xff]
      %v583 = vld [vmem:[%s2 + $0x28] sm:$0xff]
      %v584 = vld [vmem:[%s2 + $0x30] sm:$0xff]
      %v585 = vld [vmem:[%s2 + $0x38] sm:$0xff]
      %v586 = vld [vmem:[%s2 + $0x40] sm:$0xff]
      %v587 = vld [vmem:[%s2 + $0x48] sm:$0xff]
      %v588 = vld [vmem:[%s2 + $0x50] sm:$0xff]
      %v589 = vld [vmem:[%s2 + $0x58] sm:$0xff]
      %v590 = vld [vmem:[%s2 + $0x60] sm:$0xff]
      %v591 = vld [vmem:[%s2 + $0x68] sm:$0xff]
      %v592 = vld [vmem:[%s2 + $0x70] sm:$0xff]
      %v593 = vld [vmem:[%s2 + $0x78] sm:$0xff]
      %v594 = vld [vmem:[%s2 + $0x80] sm:$0xff]
      %v595 = vld [vmem:[%s2 + $0x88] sm:$0xff]
      %v596 = vld [vmem:[%s2 + $0x90] sm:$0xff]
      %v597 = vld [vmem:[%s2 + $0x98] sm:$0xff]
      %v598 = vld [vmem:[%s2 + $0xa0] sm:$0xff]
      %v599 = vld [vmem:[%s2 + $0xa8] sm:$0xff]
      %v600 = vld [vmem:[%s2 + $0xb0] sm:$0xff]
      %v601 = vld [vmem:[%s2 + $0xb8] sm:$0xff]
      %v602 = vld [vmem:[%s2 + $0xc0] sm:$0xff]
      %v603 = vld [vmem:[%s2 + $0xc8] sm:$0xff]
      %v604 = vld [vmem:[%s2 + $0xd0] sm:$0xff]
      %v605 = vld [vmem:[%s2 + $0xd8] sm:$0xff]
      %v606 = vld [vmem:[%s2 + $0xe0] sm:$0xff]
      %v607 = vld [vmem:[%s2 + $0xe8] sm:$0xff]
      %v608 = vld [vmem:[%s2 + $0xf0] sm:$0xff]
      %v609 = vld [vmem:[%s2 + $0xf8] sm:$0xff]
      %v610 = vld [vmem:[%s3] sm:$0xff]
      %v611 = vld [vmem:[%s3 + $0x8] sm:$0xff]
      %v612 = vld [vmem:[%s3 + $0x10] sm:$0xff]
      %v613 = vld [vmem:[%s3 + $0x18] sm:$0xff]
      %v614 = vld [vmem:[%s3 + $0x20] sm:$0xff]
      %v615 = vld [vmem:[%s3 + $0x28] sm:$0xff]
      %v616 = vld [vmem:[%s3 + $0x30] sm:$0xff]
      %v617 = vld [vmem:[%s3 + $0x38] sm:$0xff]
      %v618 = vld [vmem:[%s3 + $0x40] sm:$0xff]
      %v619 = vld [vmem:[%s3 + $0x48] sm:$0xff]
      %v620 = vld [vmem:[%s3 + $0x50] sm:$0xff]
      %v621 = vld [vmem:[%s3 + $0x58] sm:$0xff]
      %v622 = vld [vmem:[%s3 + $0x60] sm:$0xff]
      %v623 = vld [vmem:[%s3 + $0x68] sm:$0xff]
      %v624 = vld [vmem:[%s3 + $0x70] sm:$0xff]
      %v625 = vld [vmem:[%s3 + $0x78] sm:$0xff]
      %v626 = vld [vmem:[%s3 + $0x80] sm:$0xff]
      %v627 = vld [vmem:[%s3 + $0x88] sm:$0xff]
      %v628 = vld [vmem:[%s3 + $0x90] sm:$0xff]
      %v629 = vld [vmem:[%s3 + $0x98] sm:$0xff]
      %v630 = vld [vmem:[%s3 + $0xa0] sm:$0xff]
      %v631 = vld [vmem:[%s3 + $0xa8] sm:$0xff]
      %v632 = vld [vmem:[%s3 + $0xb0] sm:$0xff]
      %v633 = vld [vmem:[%s3 + $0xb8] sm:$0xff]
      %v634 = vld [vmem:[%s3 + $0xc0] sm:$0xff]
      %v635 = vld [vmem:[%s3 + $0xc8] sm:$0xff]
      %v636 = vld [vmem:[%s3 + $0xd0] sm:$0xff]
      %v637 = vld [vmem:[%s3 + $0xd8] sm:$0xff]
      %v638 = vld [vmem:[%s3 + $0xe0] sm:$0xff]
      %v639 = vld [vmem:[%s3 + $0xe8] sm:$0xff]
      %v640 = vld [vmem:[%s3 + $0xf0] sm:$0xff]
      %v641 = vld [vmem:[%s3 + $0xf8] sm:$0xff]
      %643 = vset.pattern.permute.xlu0 0
      %644 = vperm.xlu0 %643, %v610
      %v645 = vpop.permute.xlu0 %644
      %648 = vset.pattern.permute.xlu0 0
      %649 = vperm.xlu0 %648, %v611
      %v650 = vpop.permute.xlu0 %649
      %653 = vset.pattern.permute.xlu0 0
      %654 = vperm.xlu0 %653, %v612
      %v655 = vpop.permute.xlu0 %654
      %658 = vset.pattern.permute.xlu0 0
      %659 = vperm.xlu0 %658, %v613
      %v660 = vpop.permute.xlu0 %659
      %663 = vset.pattern.permute.xlu0 0
      %664 = vperm.xlu0 %663, %v614
      %v665 = vpop.permute.xlu0 %664
      %668 = vset.pattern.permute.xlu0 0
      %669 = vperm.xlu0 %668, %v615
      %v670 = vpop.permute.xlu0 %669
      %673 = vset.pattern.permute.xlu0 0
      %674 = vperm.xlu0 %673, %v616
      %v675 = vpop.permute.xlu0 %674
      %678 = vset.pattern.permute.xlu0 0
      %679 = vperm.xlu0 %678, %v617
      %v680 = vpop.permute.xlu0 %679
      %683 = vset.pattern.permute.xlu0 0
      %684 = vperm.xlu0 %683, %v618
      %v685 = vpop.permute.xlu0 %684
      %688 = vset.pattern.permute.xlu0 0
      %689 = vperm.xlu0 %688, %v619
      %v690 = vpop.permute.xlu0 %689
      %693 = vset.pattern.permute.xlu0 0
      %694 = vperm.xlu0 %693, %v620
      %v695 = vpop.permute.xlu0 %694
      %698 = vset.pattern.permute.xlu0 0
      %699 = vperm.xlu0 %698, %v621
      %v700 = vpop.permute.xlu0 %699
      %703 = vset.pattern.permute.xlu0 0
      %704 = vperm.xlu0 %703, %v622
      %v705 = vpop.permute.xlu0 %704
      %708 = vset.pattern.permute.xlu0 0
      %709 = vperm.xlu0 %708, %v623
      %v710 = vpop.permute.xlu0 %709
      %713 = vset.pattern.permute.xlu0 0
      %714 = vperm.xlu0 %713, %v624
      %v715 = vpop.permute.xlu0 %714
      %718 = vset.pattern.permute.xlu0 0
      %719 = vperm.xlu0 %718, %v625
      %v720 = vpop.permute.xlu0 %719
      %723 = vset.pattern.permute.xlu0 0
      %724 = vperm.xlu0 %723, %v626
      %v725 = vpop.permute.xlu0 %724
      %728 = vset.pattern.permute.xlu0 0
      %729 = vperm.xlu0 %728, %v627
      %v730 = vpop.permute.xlu0 %729
      %733 = vset.pattern.permute.xlu0 0
      %734 = vperm.xlu0 %733, %v628
      %v735 = vpop.permute.xlu0 %734
      %738 = vset.pattern.permute.xlu0 0
      %739 = vperm.xlu0 %738, %v629
      %v740 = vpop.permute.xlu0 %739
      %743 = vset.pattern.permute.xlu0 0
      %744 = vperm.xlu0 %743, %v630
      %v745 = vpop.permute.xlu0 %744
      %748 = vset.pattern.permute.xlu0 0
      %749 = vperm.xlu0 %748, %v631
      %v750 = vpop.permute.xlu0 %749
      %753 = vset.pattern.permute.xlu0 0
      %754 = vperm.xlu0 %753, %v632
      %v755 = vpop.permute.xlu0 %754
      %758 = vset.pattern.permute.xlu0 0
      %759 = vperm.xlu0 %758, %v633
      %v760 = vpop.permute.xlu0 %759
      %763 = vset.pattern.permute.xlu0 0
      %764 = vperm.xlu0 %763, %v634
      %v765 = vpop.permute.xlu0 %764
      %768 = vset.pattern.permute.xlu0 0
      %769 = vperm.xlu0 %768, %v635
      %v770 = vpop.permute.xlu0 %769
      %773 = vset.pattern.permute.xlu0 0
      %774 = vperm.xlu0 %773, %v636
      %v775 = vpop.permute.xlu0 %774
      %778 = vset.pattern.permute.xlu0 0
      %779 = vperm.xlu0 %778, %v637
      %v780 = vpop.permute.xlu0 %779
      %783 = vset.pattern.permute.xlu0 0
      %784 = vperm.xlu0 %783, %v638
      %v785 = vpop.permute.xlu0 %784
      %788 = vset.pattern.permute.xlu0 0
      %789 = vperm.xlu0 %788, %v639
      %v790 = vpop.permute.xlu0 %789
      %793 = vset.pattern.permute.xlu0 0
      %794 = vperm.xlu0 %793, %v640
      %v795 = vpop.permute.xlu0 %794
      %798 = vset.pattern.permute.xlu0 0
      %799 = vperm.xlu0 %798, %v641
      %v800 = vpop.permute.xlu0 %799
      %vm802 = vcmask 392192
      %v804 = vsel %vm802, %v578, 0
      %v807 = vsel %vm802, %v579, 0
      %v810 = vsel %vm802, %v580, 0
      %v813 = vsel %vm802, %v581, 0
      %v816 = vsel %vm802, %v582, 0
      %v819 = vsel %vm802, %v583, 0
      %v822 = vsel %vm802, %v584, 0
      %v825 = vsel %vm802, %v585, 0
      %v828 = vsel %vm802, %v586, 0
      %v831 = vsel %vm802, %v587, 0
      %v834 = vsel %vm802, %v588, 0
      %v837 = vsel %vm802, %v589, 0
      %v840 = vsel %vm802, %v590, 0
      %v843 = vsel %vm802, %v591, 0
      %v846 = vsel %vm802, %v592, 0
      %v849 = vsel %vm802, %v593, 0
      %v852 = vsel %vm802, %v594, 0
      %v855 = vsel %vm802, %v595, 0
      %v858 = vsel %vm802, %v596, 0
      %v861 = vsel %vm802, %v597, 0
      %v864 = vsel %vm802, %v598, 0
      %v867 = vsel %vm802, %v599, 0
      %v870 = vsel %vm802, %v600, 0
      %v873 = vsel %vm802, %v601, 0
      %v876 = vsel %vm802, %v602, 0
      %v879 = vsel %vm802, %v603, 0
      %v882 = vsel %vm802, %v604, 0
      %v885 = vsel %vm802, %v605, 0
      %v888 = vsel %vm802, %v606, 0
      %v891 = vsel %vm802, %v607, 0
      %v894 = vsel %vm802, %v608, 0
      %v897 = vsel %vm802, %v609, 0
      %899 = vmatpush.msra.mxu0 0.0
      %900 = vmatpush.msra.mxu0 0.0
      %901 = vmatpush.msra.mxu0 0.0
      %902 = vmatpush.msra.mxu0 0.0
      %903 = vmatpush.msra.mxu0 0.0
      %904 = vmatpush.msra.mxu0 0.0
      %905 = vmatpush.msra.mxu0 0.0
      %906 = vmatpush.msra.mxu0 0.0
      %907 = vmatpush.msra.mxu0 0.0
      %908 = vmatpush.msra.mxu0 0.0
      %909 = vmatpush.msra.mxu0 %v576
      %910 = vmatpush.msra.mxu0 %v575
      %911 = vmatpush.msra.mxu0 %v574
      %912 = vmatpush.msra.mxu0 %v573
      %913 = vmatpush.msra.mxu0 %v572
      %914 = vmatpush.msra.mxu0 %v571
      %915 = vmatmul.f32.gmra.mxu0 %v804
      %v916 = vpop.f32.mrf.mxu0
      %v917 = vadd.f32 %v645, %v916
      %918 = vmatmul.f32.gmra.mxu0 %v807
      %v919 = vpop.f32.mrf.mxu0
      %v920 = vadd.f32 %v650, %v919
      %921 = vmatmul.f32.gmra.mxu0 %v810
      %v922 = vpop.f32.mrf.mxu0
      %v923 = vadd.f32 %v655, %v922
      %924 = vmatmul.f32.gmra.mxu0 %v813
      %v925 = vpop.f32.mrf.mxu0
      %v926 = vadd.f32 %v660, %v925
      %927 = vmatmul.f32.gmra.mxu0 %v816
      %v928 = vpop.f32.mrf.mxu0
      %v929 = vadd.f32 %v665, %v928
      %930 = vmatmul.f32.gmra.mxu0 %v819
      %v931 = vpop.f32.mrf.mxu0
      %v932 = vadd.f32 %v670, %v931
      %933 = vmatmul.f32.gmra.mxu0 %v822
      %v934 = vpop.f32.mrf.mxu0
      %v935 = vadd.f32 %v675, %v934
      %936 = vmatmul.f32.gmra.mxu0 %v825
      %v937 = vpop.f32.mrf.mxu0
      %v938 = vadd.f32 %v680, %v937
      %939 = vmatmul.f32.gmra.mxu0 %v828
      %v940 = vpop.f32.mrf.mxu0
      %v941 = vadd.f32 %v685, %v940
      %942 = vmatmul.f32.gmra.mxu0 %v831
      %v943 = vpop.f32.mrf.mxu0
      %v944 = vadd.f32 %v690, %v943
      %945 = vmatmul.f32.gmra.mxu0 %v834
      %v946 = vpop.f32.mrf.mxu0
      %v947 = vadd.f32 %v695, %v946
      %948 = vmatmul.f32.gmra.mxu0 %v837
      %v949 = vpop.f32.mrf.mxu0
      %v950 = vadd.f32 %v700, %v949
      %951 = vmatmul.f32.gmra.mxu0 %v840
      %v952 = vpop.f32.mrf.mxu0
      %v953 = vadd.f32 %v705, %v952
      %954 = vmatmul.f32.gmra.mxu0 %v843
      %v955 = vpop.f32.mrf.mxu0
      %v956 = vadd.f32 %v710, %v955
      %957 = vmatmul.f32.gmra.mxu0 %v846
      %v958 = vpop.f32.mrf.mxu0
      %v959 = vadd.f32 %v715, %v958
      %960 = vmatmul.f32.gmra.mxu0 %v849
      %v961 = vpop.f32.mrf.mxu0
      %v962 = vadd.f32 %v720, %v961
      %963 = vmatmul.f32.gmra.mxu0 %v852
      %v964 = vpop.f32.mrf.mxu0
      %v965 = vadd.f32 %v725, %v964
      %966 = vmatmul.f32.gmra.mxu0 %v855
      %v967 = vpop.f32.mrf.mxu0
      %v968 = vadd.f32 %v730, %v967
      %969 = vmatmul.f32.gmra.mxu0 %v858
      %v970 = vpop.f32.mrf.mxu0
      %v971 = vadd.f32 %v735, %v970
      %972 = vmatmul.f32.gmra.mxu0 %v861
      %v973 = vpop.f32.mrf.mxu0
      %v974 = vadd.f32 %v740, %v973
      %975 = vmatmul.f32.gmra.mxu0 %v864
      %v976 = vpop.f32.mrf.mxu0
      %v977 = vadd.f32 %v745, %v976
      %978 = vmatmul.f32.gmra.mxu0 %v867
      %v979 = vpop.f32.mrf.mxu0
      %v980 = vadd.f32 %v750, %v979
      %981 = vmatmul.f32.gmra.mxu0 %v870
      %v982 = vpop.f32.mrf.mxu0
      %v983 = vadd.f32 %v755, %v982
      %984 = vmatmul.f32.gmra.mxu0 %v873
      %v985 = vpop.f32.mrf.mxu0
      %v986 = vadd.f32 %v760, %v985
      %987 = vmatmul.f32.gmra.mxu0 %v876
      %v988 = vpop.f32.mrf.mxu0
      %v989 = vadd.f32 %v765, %v988
      %990 = vmatmul.f32.gmra.mxu0 %v879
      %v991 = vpop.f32.mrf.mxu0
      %v992 = vadd.f32 %v770, %v991
      %993 = vmatmul.f32.gmra.mxu0 %v882
      %v994 = vpop.f32.mrf.mxu0
      %v995 = vadd.f32 %v775, %v994
      %996 = vmatmul.f32.gmra.mxu0 %v885
      %v997 = vpop.f32.mrf.mxu0
      %v998 = vadd.f32 %v780, %v997
      %999 = vmatmul.f32.gmra.mxu0 %v888
      %v1000 = vpop.f32.mrf.mxu0
      %v1001 = vadd.f32 %v785, %v1000
      %1002 = vmatmul.f32.gmra.mxu0 %v891
      %v1003 = vpop.f32.mrf.mxu0
      %v1004 = vadd.f32 %v790, %v1003
      %1005 = vmatmul.f32.gmra.mxu0 %v894
      %v1006 = vpop.f32.mrf.mxu0
      %v1007 = vadd.f32 %v795, %v1006
      %1008 = vmatmul.f32.gmra.mxu0 %v897
      %v1009 = vpop.f32.mrf.mxu0
      %v1010 = vadd.f32 %v800, %v1009
      %1011 = vdwg.mxu0
      %v1012 = vmax.f32 %v917, 0.0
      %v1013 = vmax.f32 %v920, 0.0
      %v1014 = vmax.f32 %v923, 0.0
      %v1015 = vmax.f32 %v926, 0.0
      %v1016 = vmax.f32 %v929, 0.0
      %v1017 = vmax.f32 %v932, 0.0
      %v1018 = vmax.f32 %v935, 0.0
      %v1019 = vmax.f32 %v938, 0.0
      %v1020 = vmax.f32 %v941, 0.0
      %v1021 = vmax.f32 %v944, 0.0
      %v1022 = vmax.f32 %v947, 0.0
      %v1023 = vmax.f32 %v950, 0.0
      %v1024 = vmax.f32 %v953, 0.0
      %v1025 = vmax.f32 %v956, 0.0
      %v1026 = vmax.f32 %v959, 0.0
      %v1027 = vmax.f32 %v962, 0.0
      %v1028 = vmax.f32 %v965, 0.0
      %v1029 = vmax.f32 %v968, 0.0
      %v1030 = vmax.f32 %v971, 0.0
      %v1031 = vmax.f32 %v974, 0.0
      %v1032 = vmax.f32 %v977, 0.0
      %v1033 = vmax.f32 %v980, 0.0
      %v1034 = vmax.f32 %v983, 0.0
      %v1035 = vmax.f32 %v986, 0.0
      %v1036 = vmax.f32 %v989, 0.0
      %v1037 = vmax.f32 %v992, 0.0
      %v1038 = vmax.f32 %v995, 0.0
      %v1039 = vmax.f32 %v998, 0.0
      %v1040 = vmax.f32 %v1001, 0.0
      %v1041 = vmax.f32 %v1004, 0.0
      %v1042 = vmax.f32 %v1007, 0.0
      %v1043 = vmax.f32 %v1010, 0.0
      %v1044 = vld [vmem:[%s4] sm:$0xff]
      %v1045 = vld [vmem:[%s4 + $0x8] sm:$0xff]
      %v1046 = vld [vmem:[%s4 + $0x10] sm:$0xff]
      %v1047 = vld [vmem:[%s4 + $0x18] sm:$0xff]
      %v1048 = vld [vmem:[%s4 + $0x20] sm:$0xff]
      %v1049 = vld [vmem:[%s4 + $0x28] sm:$0xff]
      %v1050 = vld [vmem:[%s4 + $0x30] sm:$0xff]
      %v1051 = vld [vmem:[%s4 + $0x38] sm:$0xff]
      %v1052 = vld [vmem:[%s4 + $0x40] sm:$0xff]
      %v1053 = vld [vmem:[%s4 + $0x48] sm:$0xff]
      %v1054 = vld [vmem:[%s4 + $0x50] sm:$0xff]
      %v1055 = vld [vmem:[%s4 + $0x58] sm:$0xff]
      %v1056 = vld [vmem:[%s4 + $0x60] sm:$0xff]
      %v1057 = vld [vmem:[%s4 + $0x68] sm:$0xff]
      %v1058 = vld [vmem:[%s4 + $0x70] sm:$0xff]
      %v1059 = vld [vmem:[%s4 + $0x78] sm:$0xff]
      %v1060 = vld [vmem:[%s4 + $0x80] sm:$0xff]
      %v1061 = vld [vmem:[%s4 + $0x88] sm:$0xff]
      %v1062 = vld [vmem:[%s4 + $0x90] sm:$0xff]
      %v1063 = vld [vmem:[%s4 + $0x98] sm:$0xff]
      %v1064 = vld [vmem:[%s4 + $0xa0] sm:$0xff]
      %v1065 = vld [vmem:[%s4 + $0xa8] sm:$0xff]
      %v1066 = vld [vmem:[%s4 + $0xb0] sm:$0xff]
      %v1067 = vld [vmem:[%s4 + $0xb8] sm:$0xff]
      %v1068 = vld [vmem:[%s4 + $0xc0] sm:$0xff]
      %v1069 = vld [vmem:[%s4 + $0xc8] sm:$0xff]
      %v1070 = vld [vmem:[%s4 + $0xd0] sm:$0xff]
      %v1071 = vld [vmem:[%s4 + $0xd8] sm:$0xff]
      %v1072 = vld [vmem:[%s4 + $0xe0] sm:$0xff]
      %v1073 = vld [vmem:[%s4 + $0xe8] sm:$0xff]
      %v1074 = vld [vmem:[%s4 + $0xf0] sm:$0xff]
      %v1075 = vld [vmem:[%s4 + $0xf8] sm:$0xff]
      %v1076 = vld [vmem:[%s4 + $0x100] sm:$0xff]
      %v1077 = vld [vmem:[%s4 + $0x108] sm:$0xff]
      %v1078 = vld [vmem:[%s4 + $0x110] sm:$0xff]
      %v1079 = vld [vmem:[%s4 + $0x118] sm:$0xff]
      %v1080 = vld [vmem:[%s4 + $0x120] sm:$0xff]
      %v1081 = vld [vmem:[%s4 + $0x128] sm:$0xff]
      %v1082 = vld [vmem:[%s4 + $0x130] sm:$0xff]
      %v1083 = vld [vmem:[%s4 + $0x138] sm:$0xff]
      %v1084 = vld [vmem:[%s4 + $0x140] sm:$0xff]
      %v1085 = vld [vmem:[%s4 + $0x148] sm:$0xff]
      %v1086 = vld [vmem:[%s4 + $0x150] sm:$0xff]
      %v1087 = vld [vmem:[%s4 + $0x158] sm:$0xff]
      %v1088 = vld [vmem:[%s4 + $0x160] sm:$0xff]
      %v1089 = vld [vmem:[%s4 + $0x168] sm:$0xff]
      %v1090 = vld [vmem:[%s4 + $0x170] sm:$0xff]
      %v1091 = vld [vmem:[%s4 + $0x178] sm:$0xff]
      %v1092 = vld [vmem:[%s4 + $0x180] sm:$0xff]
      %v1093 = vld [vmem:[%s4 + $0x188] sm:$0xff]
      %v1094 = vld [vmem:[%s4 + $0x190] sm:$0xff]
      %v1095 = vld [vmem:[%s4 + $0x198] sm:$0xff]
      %v1096 = vld [vmem:[%s4 + $0x1a0] sm:$0xff]
      %v1097 = vld [vmem:[%s4 + $0x1a8] sm:$0xff]
      %v1098 = vld [vmem:[%s4 + $0x1b0] sm:$0xff]
      %v1099 = vld [vmem:[%s4 + $0x1b8] sm:$0xff]
      %v1100 = vld [vmem:[%s4 + $0x1c0] sm:$0xff]
      %v1101 = vld [vmem:[%s4 + $0x1c8] sm:$0xff]
      %v1102 = vld [vmem:[%s4 + $0x1d0] sm:$0xff]
      %v1103 = vld [vmem:[%s4 + $0x1d8] sm:$0xff]
      %v1104 = vld [vmem:[%s4 + $0x1e0] sm:$0xff]
      %v1105 = vld [vmem:[%s4 + $0x1e8] sm:$0xff]
      %v1106 = vld [vmem:[%s4 + $0x1f0] sm:$0xff]
      %v1107 = vld [vmem:[%s4 + $0x1f8] sm:$0xff]
      %v1108 = vld [vmem:[%s5] sm:$0xff]
      %v1109 = vld [vmem:[%s5 + $0x8] sm:$0xff]
      %v1110 = vld [vmem:[%s5 + $0x10] sm:$0xff]
      %v1111 = vld [vmem:[%s5 + $0x18] sm:$0xff]
      %v1112 = vld [vmem:[%s5 + $0x20] sm:$0xff]
      %v1113 = vld [vmem:[%s5 + $0x28] sm:$0xff]
      %v1114 = vld [vmem:[%s5 + $0x30] sm:$0xff]
      %v1115 = vld [vmem:[%s5 + $0x38] sm:$0xff]
      %v1116 = vld [vmem:[%s5 + $0x40] sm:$0xff]
      %v1117 = vld [vmem:[%s5 + $0x48] sm:$0xff]
      %v1118 = vld [vmem:[%s5 + $0x50] sm:$0xff]
      %v1119 = vld [vmem:[%s5 + $0x58] sm:$0xff]
      %v1120 = vld [vmem:[%s5 + $0x60] sm:$0xff]
      %v1121 = vld [vmem:[%s5 + $0x68] sm:$0xff]
      %v1122 = vld [vmem:[%s5 + $0x70] sm:$0xff]
      %v1123 = vld [vmem:[%s5 + $0x78] sm:$0xff]
      %v1124 = vld [vmem:[%s5 + $0x80] sm:$0xff]
      %v1125 = vld [vmem:[%s5 + $0x88] sm:$0xff]
      %v1126 = vld [vmem:[%s5 + $0x90] sm:$0xff]
      %v1127 = vld [vmem:[%s5 + $0x98] sm:$0xff]
      %v1128 = vld [vmem:[%s5 + $0xa0] sm:$0xff]
      %v1129 = vld [vmem:[%s5 + $0xa8] sm:$0xff]
      %v1130 = vld [vmem:[%s5 + $0xb0] sm:$0xff]
      %v1131 = vld [vmem:[%s5 + $0xb8] sm:$0xff]
      %v1132 = vld [vmem:[%s5 + $0xc0] sm:$0xff]
      %v1133 = vld [vmem:[%s5 + $0xc8] sm:$0xff]
      %v1134 = vld [vmem:[%s5 + $0xd0] sm:$0xff]
      %v1135 = vld [vmem:[%s5 + $0xd8] sm:$0xff]
      %v1136 = vld [vmem:[%s5 + $0xe0] sm:$0xff]
      %v1137 = vld [vmem:[%s5 + $0xe8] sm:$0xff]
      %v1138 = vld [vmem:[%s5 + $0xf0] sm:$0xff]
      %v1139 = vld [vmem:[%s5 + $0xf8] sm:$0xff]
      %1141 = vset.pattern.permute.xlu0 0
      %1142 = vperm.xlu0 %1141, %v1108
      %v1143 = vpop.permute.xlu0 %1142
      %1146 = vset.pattern.permute.xlu0 0
      %1147 = vperm.xlu0 %1146, %v1109
      %v1148 = vpop.permute.xlu0 %1147
      %1151 = vset.pattern.permute.xlu0 0
      %1152 = vperm.xlu0 %1151, %v1110
      %v1153 = vpop.permute.xlu0 %1152
      %1156 = vset.pattern.permute.xlu0 0
      %1157 = vperm.xlu0 %1156, %v1111
      %v1158 = vpop.permute.xlu0 %1157
      %1161 = vset.pattern.permute.xlu0 0
      %1162 = vperm.xlu0 %1161, %v1112
      %v1163 = vpop.permute.xlu0 %1162
      %1166 = vset.pattern.permute.xlu0 0
      %1167 = vperm.xlu0 %1166, %v1113
      %v1168 = vpop.permute.xlu0 %1167
      %1171 = vset.pattern.permute.xlu0 0
      %1172 = vperm.xlu0 %1171, %v1114
      %v1173 = vpop.permute.xlu0 %1172
      %1176 = vset.pattern.permute.xlu0 0
      %1177 = vperm.xlu0 %1176, %v1115
      %v1178 = vpop.permute.xlu0 %1177
      %1181 = vset.pattern.permute.xlu0 0
      %1182 = vperm.xlu0 %1181, %v1116
      %v1183 = vpop.permute.xlu0 %1182
      %1186 = vset.pattern.permute.xlu0 0
      %1187 = vperm.xlu0 %1186, %v1117
      %v1188 = vpop.permute.xlu0 %1187
      %1191 = vset.pattern.permute.xlu0 0
      %1192 = vperm.xlu0 %1191, %v1118
      %v1193 = vpop.permute.xlu0 %1192
      %1196 = vset.pattern.permute.xlu0 0
      %1197 = vperm.xlu0 %1196, %v1119
      %v1198 = vpop.permute.xlu0 %1197
      %1201 = vset.pattern.permute.xlu0 0
      %1202 = vperm.xlu0 %1201, %v1120
      %v1203 = vpop.permute.xlu0 %1202
      %1206 = vset.pattern.permute.xlu0 0
      %1207 = vperm.xlu0 %1206, %v1121
      %v1208 = vpop.permute.xlu0 %1207
      %1211 = vset.pattern.permute.xlu0 0
      %1212 = vperm.xlu0 %1211, %v1122
      %v1213 = vpop.permute.xlu0 %1212
      %1216 = vset.pattern.permute.xlu0 0
      %1217 = vperm.xlu0 %1216, %v1123
      %v1218 = vpop.permute.xlu0 %1217
      %1221 = vset.pattern.permute.xlu0 0
      %1222 = vperm.xlu0 %1221, %v1124
      %v1223 = vpop.permute.xlu0 %1222
      %1226 = vset.pattern.permute.xlu0 0
      %1227 = vperm.xlu0 %1226, %v1125
      %v1228 = vpop.permute.xlu0 %1227
      %1231 = vset.pattern.permute.xlu0 0
      %1232 = vperm.xlu0 %1231, %v1126
      %v1233 = vpop.permute.xlu0 %1232
      %1236 = vset.pattern.permute.xlu0 0
      %1237 = vperm.xlu0 %1236, %v1127
      %v1238 = vpop.permute.xlu0 %1237
      %1241 = vset.pattern.permute.xlu0 0
      %1242 = vperm.xlu0 %1241, %v1128
      %v1243 = vpop.permute.xlu0 %1242
      %1246 = vset.pattern.permute.xlu0 0
      %1247 = vperm.xlu0 %1246, %v1129
      %v1248 = vpop.permute.xlu0 %1247
      %1251 = vset.pattern.permute.xlu0 0
      %1252 = vperm.xlu0 %1251, %v1130
      %v1253 = vpop.permute.xlu0 %1252
      %1256 = vset.pattern.permute.xlu0 0
      %1257 = vperm.xlu0 %1256, %v1131
      %v1258 = vpop.permute.xlu0 %1257
      %1261 = vset.pattern.permute.xlu0 0
      %1262 = vperm.xlu0 %1261, %v1132
      %v1263 = vpop.permute.xlu0 %1262
      %1266 = vset.pattern.permute.xlu0 0
      %1267 = vperm.xlu0 %1266, %v1133
      %v1268 = vpop.permute.xlu0 %1267
      %1271 = vset.pattern.permute.xlu0 0
      %1272 = vperm.xlu0 %1271, %v1134
      %v1273 = vpop.permute.xlu0 %1272
      %1276 = vset.pattern.permute.xlu0 0
      %1277 = vperm.xlu0 %1276, %v1135
      %v1278 = vpop.permute.xlu0 %1277
      %1281 = vset.pattern.permute.xlu0 0
      %1282 = vperm.xlu0 %1281, %v1136
      %v1283 = vpop.permute.xlu0 %1282
      %1286 = vset.pattern.permute.xlu0 0
      %1287 = vperm.xlu0 %1286, %v1137
      %v1288 = vpop.permute.xlu0 %1287
      %1291 = vset.pattern.permute.xlu0 0
      %1292 = vperm.xlu0 %1291, %v1138
      %v1293 = vpop.permute.xlu0 %1292
      %1296 = vset.pattern.permute.xlu0 0
      %1297 = vperm.xlu0 %1296, %v1139
      %v1298 = vpop.permute.xlu0 %1297
      %1300 = vmatpush.msra.mxu0 %v1027
      %1301 = vmatpush.msra.mxu0 %v1026
      %1302 = vmatpush.msra.mxu0 %v1025
      %1303 = vmatpush.msra.mxu0 %v1024
      %1304 = vmatpush.msra.mxu0 %v1023
      %1305 = vmatpush.msra.mxu0 %v1022
      %1306 = vmatpush.msra.mxu0 %v1021
      %1307 = vmatpush.msra.mxu0 %v1020
      %1308 = vmatpush.msra.mxu0 %v1019
      %1309 = vmatpush.msra.mxu0 %v1018
      %1310 = vmatpush.msra.mxu0 %v1017
      %1311 = vmatpush.msra.mxu0 %v1016
      %1312 = vmatpush.msra.mxu0 %v1015
      %1313 = vmatpush.msra.mxu0 %v1014
      %1314 = vmatpush.msra.mxu0 %v1013
      %1315 = vmatpush.msra.mxu0 %v1012
      %1316 = vmatmul.f32.gmra.mxu0 %v1044
      %v1317 = vpop.f32.mrf.mxu0
      %v1318 = vadd.f32 %v1143, %v1317
      %1319 = vmatmul.f32.gmra.mxu0 %v1046
      %v1320 = vpop.f32.mrf.mxu0
      %v1321 = vadd.f32 %v1148, %v1320
      %1322 = vmatmul.f32.gmra.mxu0 %v1048
      %v1323 = vpop.f32.mrf.mxu0
      %v1324 = vadd.f32 %v1153, %v1323
      %1325 = vmatmul.f32.gmra.mxu0 %v1050
      %v1326 = vpop.f32.mrf.mxu0
      %v1327 = vadd.f32 %v1158, %v1326
      %1328 = vmatmul.f32.gmra.mxu0 %v1052
      %v1329 = vpop.f32.mrf.mxu0
      %v1330 = vadd.f32 %v1163, %v1329
      %1331 = vmatmul.f32.gmra.mxu0 %v1054
      %v1332 = vpop.f32.mrf.mxu0
      %v1333 = vadd.f32 %v1168, %v1332
      %1334 = vmatmul.f32.gmra.mxu0 %v1056
      %v1335 = vpop.f32.mrf.mxu0
      %v1336 = vadd.f32 %v1173, %v1335
      %1337 = vmatmul.f32.gmra.mxu0 %v1058
      %v1338 = vpop.f32.mrf.mxu0
      %v1339 = vadd.f32 %v1178, %v1338
      %1340 = vmatmul.f32.gmra.mxu0 %v1060
      %v1341 = vpop.f32.mrf.mxu0
      %v1342 = vadd.f32 %v1183, %v1341
      %1343 = vmatmul.f32.gmra.mxu0 %v1062
      %v1344 = vpop.f32.mrf.mxu0
      %v1345 = vadd.f32 %v1188, %v1344
      %1346 = vmatmul.f32.gmra.mxu0 %v1064
      %v1347 = vpop.f32.mrf.mxu0
      %v1348 = vadd.f32 %v1193, %v1347
      %1349 = vmatmul.f32.gmra.mxu0 %v1066
      %v1350 = vpop.f32.mrf.mxu0
      %v1351 = vadd.f32 %v1198, %v1350
      %1352 = vmatmul.f32.gmra.mxu0 %v1068
      %v1353 = vpop.f32.mrf.mxu0
      %v1354 = vadd.f32 %v1203, %v1353
      %1355 = vmatmul.f32.gmra.mxu0 %v1070
      %v1356 = vpop.f32.mrf.mxu0
      %v1357 = vadd.f32 %v1208, %v1356
      %1358 = vmatmul.f32.gmra.mxu0 %v1072
      %v1359 = vpop.f32.mrf.mxu0
      %v1360 = vadd.f32 %v1213, %v1359
      %1361 = vmatmul.f32.gmra.mxu0 %v1074
      %v1362 = vpop.f32.mrf.mxu0
      %v1363 = vadd.f32 %v1218, %v1362
      %1364 = vmatmul.f32.gmra.mxu0 %v1076
      %v1365 = vpop.f32.mrf.mxu0
      %v1366 = vadd.f32 %v1223, %v1365
      %1367 = vmatmul.f32.gmra.mxu0 %v1078
      %v1368 = vpop.f32.mrf.mxu0
      %v1369 = vadd.f32 %v1228, %v1368
      %1370 = vmatmul.f32.gmra.mxu0 %v1080
      %v1371 = vpop.f32.mrf.mxu0
      %v1372 = vadd.f32 %v1233, %v1371
      %1373 = vmatmul.f32.gmra.mxu0 %v1082
      %v1374 = vpop.f32.mrf.mxu0
      %v1375 = vadd.f32 %v1238, %v1374
      %1376 = vmatmul.f32.gmra.mxu0 %v1084
      %v1377 = vpop.f32.mrf.mxu0
      %v1378 = vadd.f32 %v1243, %v1377
      %1379 = vmatmul.f32.gmra.mxu0 %v1086
      %v1380 = vpop.f32.mrf.mxu0
      %v1381 = vadd.f32 %v1248, %v1380
      %1382 = vmatmul.f32.gmra.mxu0 %v1088
      %v1383 = vpop.f32.mrf.mxu0
      %v1384 = vadd.f32 %v1253, %v1383
      %1385 = vmatmul.f32.gmra.mxu0 %v1090
      %v1386 = vpop.f32.mrf.mxu0
      %v1387 = vadd.f32 %v1258, %v1386
      %1388 = vmatmul.f32.gmra.mxu0 %v1092
      %v1389 = vpop.f32.mrf.mxu0
      %v1390 = vadd.f32 %v1263, %v1389
      %1391 = vmatmul.f32.gmra.mxu0 %v1094
      %v1392 = vpop.f32.mrf.mxu0
      %v1393 = vadd.f32 %v1268, %v1392
      %1394 = vmatmul.f32.gmra.mxu0 %v1096
      %v1395 = vpop.f32.mrf.mxu0
      %v1396 = vadd.f32 %v1273, %v1395
      %1397 = vmatmul.f32.gmra.mxu0 %v1098
      %v1398 = vpop.f32.mrf.mxu0
      %v1399 = vadd.f32 %v1278, %v1398
      %1400 = vmatmul.f32.gmra.mxu0 %v1100
      %v1401 = vpop.f32.mrf.mxu0
      %v1402 = vadd.f32 %v1283, %v1401
      %1403 = vmatmul.f32.gmra.mxu0 %v1102
      %v1404 = vpop.f32.mrf.mxu0
      %v1405 = vadd.f32 %v1288, %v1404
      %1406 = vmatmul.f32.gmra.mxu0 %v1104
      %v1407 = vpop.f32.mrf.mxu0
      %v1408 = vadd.f32 %v1293, %v1407
      %1409 = vmatmul.f32.gmra.mxu0 %v1106
      %v1410 = vpop.f32.mrf.mxu0
      %v1411 = vadd.f32 %v1298, %v1410
      %1412 = vdwg.mxu0
      %1413 = vmatpush.msra.mxu0 %v1043
      %1414 = vmatpush.msra.mxu0 %v1042
      %1415 = vmatpush.msra.mxu0 %v1041
      %1416 = vmatpush.msra.mxu0 %v1040
      %1417 = vmatpush.msra.mxu0 %v1039
      %1418 = vmatpush.msra.mxu0 %v1038
      %1419 = vmatpush.msra.mxu0 %v1037
      %1420 = vmatpush.msra.mxu0 %v1036
      %1421 = vmatpush.msra.mxu0 %v1035
      %1422 = vmatpush.msra.mxu0 %v1034
      %1423 = vmatpush.msra.mxu0 %v1033
      %1424 = vmatpush.msra.mxu0 %v1032
      %1425 = vmatpush.msra.mxu0 %v1031
      %1426 = vmatpush.msra.mxu0 %v1030
      %1427 = vmatpush.msra.mxu0 %v1029
      %1428 = vmatpush.msra.mxu0 %v1028
      %1429 = vmatmul.f32.gmra.mxu0 %v1045
      %v1430 = vpop.f32.mrf.mxu0
      %v1431 = vadd.f32 %v1318, %v1430
      %1432 = vmatmul.f32.gmra.mxu0 %v1047
      %v1433 = vpop.f32.mrf.mxu0
      %v1434 = vadd.f32 %v1321, %v1433
      %1435 = vmatmul.f32.gmra.mxu0 %v1049
      %v1436 = vpop.f32.mrf.mxu0
      %v1437 = vadd.f32 %v1324, %v1436
      %1438 = vmatmul.f32.gmra.mxu0 %v1051
      %v1439 = vpop.f32.mrf.mxu0
      %v1440 = vadd.f32 %v1327, %v1439
      %1441 = vmatmul.f32.gmra.mxu0 %v1053
      %v1442 = vpop.f32.mrf.mxu0
      %v1443 = vadd.f32 %v1330, %v1442
      %1444 = vmatmul.f32.gmra.mxu0 %v1055
      %v1445 = vpop.f32.mrf.mxu0
      %v1446 = vadd.f32 %v1333, %v1445
      %1447 = vmatmul.f32.gmra.mxu0 %v1057
      %v1448 = vpop.f32.mrf.mxu0
      %v1449 = vadd.f32 %v1336, %v1448
      %1450 = vmatmul.f32.gmra.mxu0 %v1059
      %v1451 = vpop.f32.mrf.mxu0
      %v1452 = vadd.f32 %v1339, %v1451
      %1453 = vmatmul.f32.gmra.mxu0 %v1061
      %v1454 = vpop.f32.mrf.mxu0
      %v1455 = vadd.f32 %v1342, %v1454
      %1456 = vmatmul.f32.gmra.mxu0 %v1063
      %v1457 = vpop.f32.mrf.mxu0
      %v1458 = vadd.f32 %v1345, %v1457
      %1459 = vmatmul.f32.gmra.mxu0 %v1065
      %v1460 = vpop.f32.mrf.mxu0
      %v1461 = vadd.f32 %v1348, %v1460
      %1462 = vmatmul.f32.gmra.mxu0 %v1067
      %v1463 = vpop.f32.mrf.mxu0
      %v1464 = vadd.f32 %v1351, %v1463
      %1465 = vmatmul.f32.gmra.mxu0 %v1069
      %v1466 = vpop.f32.mrf.mxu0
      %v1467 = vadd.f32 %v1354, %v1466
      %1468 = vmatmul.f32.gmra.mxu0 %v1071
      %v1469 = vpop.f32.mrf.mxu0
      %v1470 = vadd.f32 %v1357, %v1469
      %1471 = vmatmul.f32.gmra.mxu0 %v1073
      %v1472 = vpop.f32.mrf.mxu0
      %v1473 = vadd.f32 %v1360, %v1472
      %1474 = vmatmul.f32.gmra.mxu0 %v1075
      %v1475 = vpop.f32.mrf.mxu0
      %v1476 = vadd.f32 %v1363, %v1475
      %1477 = vmatmul.f32.gmra.mxu0 %v1077
      %v1478 = vpop.f32.mrf.mxu0
      %v1479 = vadd.f32 %v1366, %v1478
      %1480 = vmatmul.f32.gmra.mxu0 %v1079
      %v1481 = vpop.f32.mrf.mxu0
      %v1482 = vadd.f32 %v1369, %v1481
      %1483 = vmatmul.f32.gmra.mxu0 %v1081
      %v1484 = vpop.f32.mrf.mxu0
      %v1485 = vadd.f32 %v1372, %v1484
      %1486 = vmatmul.f32.gmra.mxu0 %v1083
      %v1487 = vpop.f32.mrf.mxu0
      %v1488 = vadd.f32 %v1375, %v1487
      %1489 = vmatmul.f32.gmra.mxu0 %v1085
      %v1490 = vpop.f32.mrf.mxu0
      %v1491 = vadd.f32 %v1378, %v1490
      %1492 = vmatmul.f32.gmra.mxu0 %v1087
      %v1493 = vpop.f32.mrf.mxu0
      %v1494 = vadd.f32 %v1381, %v1493
      %1495 = vmatmul.f32.gmra.mxu0 %v1089
      %v1496 = vpop.f32.mrf.mxu0
      %v1497 = vadd.f32 %v1384, %v1496
      %1498 = vmatmul.f32.gmra.mxu0 %v1091
      %v1499 = vpop.f32.mrf.mxu0
      %v1500 = vadd.f32 %v1387, %v1499
      %1501 = vmatmul.f32.gmra.mxu0 %v1093
      %v1502 = vpop.f32.mrf.mxu0
      %v1503 = vadd.f32 %v1390, %v1502
      %1504 = vmatmul.f32.gmra.mxu0 %v1095
      %v1505 = vpop.f32.mrf.mxu0
      %v1506 = vadd.f32 %v1393, %v1505
      %1507 = vmatmul.f32.gmra.mxu0 %v1097
      %v1508 = vpop.f32.mrf.mxu0
      %v1509 = vadd.f32 %v1396, %v1508
      %1510 = vmatmul.f32.gmra.mxu0 %v1099
      %v1511 = vpop.f32.mrf.mxu0
      %v1512 = vadd.f32 %v1399, %v1511
      %1513 = vmatmul.f32.gmra.mxu0 %v1101
      %v1514 = vpop.f32.mrf.mxu0
      %v1515 = vadd.f32 %v1402, %v1514
      %1516 = vmatmul.f32.gmra.mxu0 %v1103
      %v1517 = vpop.f32.mrf.mxu0
      %v1518 = vadd.f32 %v1405, %v1517
      %1519 = vmatmul.f32.gmra.mxu0 %v1105
      %v1520 = vpop.f32.mrf.mxu0
      %v1521 = vadd.f32 %v1408, %v1520
      %1522 = vmatmul.f32.gmra.mxu0 %v1107
      %v1523 = vpop.f32.mrf.mxu0
      %v1524 = vadd.f32 %v1411, %v1523
      %1525 = vdwg.mxu0
      %v1526 = vmax.f32 %v1431, 0.0
      %v1527 = vmax.f32 %v1434, 0.0
      %v1528 = vmax.f32 %v1437, 0.0
      %v1529 = vmax.f32 %v1440, 0.0
      %v1530 = vmax.f32 %v1443, 0.0
      %v1531 = vmax.f32 %v1446, 0.0
      %v1532 = vmax.f32 %v1449, 0.0
      %v1533 = vmax.f32 %v1452, 0.0
      %v1534 = vmax.f32 %v1455, 0.0
      %v1535 = vmax.f32 %v1458, 0.0
      %v1536 = vmax.f32 %v1461, 0.0
      %v1537 = vmax.f32 %v1464, 0.0
      %v1538 = vmax.f32 %v1467, 0.0
      %v1539 = vmax.f32 %v1470, 0.0
      %v1540 = vmax.f32 %v1473, 0.0
      %v1541 = vmax.f32 %v1476, 0.0
      %v1542 = vmax.f32 %v1479, 0.0
      %v1543 = vmax.f32 %v1482, 0.0
      %v1544 = vmax.f32 %v1485, 0.0
      %v1545 = vmax.f32 %v1488, 0.0
      %v1546 = vmax.f32 %v1491, 0.0
      %v1547 = vmax.f32 %v1494, 0.0
      %v1548 = vmax.f32 %v1497, 0.0
      %v1549 = vmax.f32 %v1500, 0.0
      %v1550 = vmax.f32 %v1503, 0.0
      %v1551 = vmax.f32 %v1506, 0.0
      %v1552 = vmax.f32 %v1509, 0.0
      %v1553 = vmax.f32 %v1512, 0.0
      %v1554 = vmax.f32 %v1515, 0.0
      %v1555 = vmax.f32 %v1518, 0.0
      %v1556 = vmax.f32 %v1521, 0.0
      %v1557 = vmax.f32 %v1524, 0.0
      %v1558 = vld [vmem:[%s6] sm:$0xff]
      %v1559 = vld [vmem:[%s6 + $0x8] sm:$0xff]
      %v1560 = vld [vmem:[%s6 + $0x10] sm:$0xff]
      %v1561 = vld [vmem:[%s6 + $0x18] sm:$0xff]
      %v1562 = vld [vmem:[%s7] sm:$0xff]
      %v1563 = vld [vmem:[%s7 + $0x8] sm:$0xff]
      %1565 = vset.pattern.permute.xlu0 0
      %1566 = vperm.xlu0 %1565, %v1562
      %v1567 = vpop.permute.xlu0 %1566
      %1570 = vset.pattern.permute.xlu0 0
      %1571 = vperm.xlu0 %1570, %v1563
      %v1572 = vpop.permute.xlu0 %1571
      %1574 = vmatpush.msra.mxu0 %v1541
      %1575 = vmatpush.msra.mxu0 %v1540
      %1576 = vmatpush.msra.mxu0 %v1539
      %1577 = vmatpush.msra.mxu0 %v1538
      %1578 = vmatpush.msra.mxu0 %v1537
      %1579 = vmatpush.msra.mxu0 %v1536
      %1580 = vmatpush.msra.mxu0 %v1535
      %1581 = vmatpush.msra.mxu0 %v1534
      %1582 = vmatpush.msra.mxu0 %v1533
      %1583 = vmatpush.msra.mxu0 %v1532
      %1584 = vmatpush.msra.mxu0 %v1531
      %1585 = vmatpush.msra.mxu0 %v1530
      %1586 = vmatpush.msra.mxu0 %v1529
      %1587 = vmatpush.msra.mxu0 %v1528
      %1588 = vmatpush.msra.mxu0 %v1527
      %1589 = vmatpush.msra.mxu0 %v1526
      %1590 = vmatmul.f32.gmra.mxu0 %v1558
      %v1591 = vpop.f32.mrf.mxu0
      %v1592 = vadd.f32 %v1567, %v1591
      %1593 = vmatmul.f32.gmra.mxu0 %v1560
      %v1594 = vpop.f32.mrf.mxu0
      %v1595 = vadd.f32 %v1572, %v1594
      %1596 = vdwg.mxu0
      %1597 = vmatpush.msra.mxu0 %v1557
      %1598 = vmatpush.msra.mxu0 %v1556
      %1599 = vmatpush.msra.mxu0 %v1555
      %1600 = vmatpush.msra.mxu0 %v1554
      %1601 = vmatpush.msra.mxu0 %v1553
      %1602 = vmatpush.msra.mxu0 %v1552
      %1603 = vmatpush.msra.mxu0 %v1551
      %1604 = vmatpush.msra.mxu0 %v1550
      %1605 = vmatpush.msra.mxu0 %v1549
      %1606 = vmatpush.msra.mxu0 %v1548
      %1607 = vmatpush.msra.mxu0 %v1547
      %1608 = vmatpush.msra.mxu0 %v1546
      %1609 = vmatpush.msra.mxu0 %v1545
      %1610 = vmatpush.msra.mxu0 %v1544
      %1611 = vmatpush.msra.mxu0 %v1543
      %1612 = vmatpush.msra.mxu0 %v1542
      %1613 = vmatmul.f32.gmra.mxu0 %v1559
      %v1614 = vpop.f32.mrf.mxu0
      %v1615 = vadd.f32 %v1592, %v1614
      %1616 = vmatmul.f32.gmra.mxu0 %v1561
      %v1617 = vpop.f32.mrf.mxu0
      %v1618 = vadd.f32 %v1595, %v1617
      %1619 = vdwg.mxu0
      %vm1620 = vcmask 130048
      %v1621 = vsel %vm1620, %v1615, -inf
      %v1622 = vrot.slane %v1621, 4
      %v1623 = vmax.f32 %v1621, %v1622
      %v1624 = vrot.slane %v1623, 2
      %v1625 = vmax.f32 %v1623, %v1624
      %v1626 = vrot.slane %v1625, 1
      %v1627 = vmax.f32 %v1625, %v1626
      %v1628 = vsel %vm1620, %v1618, -inf
      %v1629 = vrot.slane %v1628, 4
      %v1630 = vmax.f32 %v1628, %v1629
      %v1631 = vrot.slane %v1630, 2
      %v1632 = vmax.f32 %v1630, %v1631
      %v1633 = vrot.slane %v1632, 1
      %v1634 = vmax.f32 %v1632, %v1633
      %vm1635 = vcmask 1040384
      %v1636 = vsel %vm1635, %v1627, %v1634
      %v1637 = vld [vmem:[%s8] sm:$0xff]
      %v1638 = vld [vmem:[%s8 + $0x8] sm:$0xff]
      %v1639 = vld [vmem:[%s8 + $0x10] sm:$0xff]
      %v1640 = vld [vmem:[%s8 + $0x18] sm:$0xff]
      %v1641 = vld [vmem:[%s8 + $0x20] sm:$0xff]
      %v1642 = vld [vmem:[%s8 + $0x28] sm:$0xff]
      %v1643 = vld [vmem:[%s8 + $0x30] sm:$0xff]
      %v1644 = vld [vmem:[%s8 + $0x38] sm:$0xff]
      %v1645 = vld [vmem:[%s8 + $0x40] sm:$0xff]
      %v1646 = vld [vmem:[%s8 + $0x48] sm:$0xff]
      %v1647 = vld [vmem:[%s8 + $0x50] sm:$0xff]
      %v1648 = vld [vmem:[%s8 + $0x58] sm:$0xff]
      %v1649 = vld [vmem:[%s8 + $0x60] sm:$0xff]
      %v1650 = vld [vmem:[%s8 + $0x68] sm:$0xff]
      %v1651 = vld [vmem:[%s8 + $0x70] sm:$0xff]
      %v1652 = vld [vmem:[%s8 + $0x78] sm:$0xff]
      %v1653 = vld [vmem:[%s8 + $0x80] sm:$0xff]
      %v1654 = vld [vmem:[%s8 + $0x88] sm:$0xff]
      %v1655 = vld [vmem:[%s8 + $0x90] sm:$0xff]
      %v1656 = vld [vmem:[%s8 + $0x98] sm:$0xff]
      %v1657 = vld [vmem:[%s8 + $0xa0] sm:$0xff]
      %v1658 = vld [vmem:[%s8 + $0xa8] sm:$0xff]
      %v1659 = vld [vmem:[%s8 + $0xb0] sm:$0xff]
      %v1660 = vld [vmem:[%s8 + $0xb8] sm:$0xff]
      %v1661 = vld [vmem:[%s8 + $0xc0] sm:$0xff]
      %v1662 = vld [vmem:[%s8 + $0xc8] sm:$0xff]
      %v1663 = vld [vmem:[%s8 + $0xd0] sm:$0xff]
      %v1664 = vld [vmem:[%s8 + $0xd8] sm:$0xff]
      %v1665 = vld [vmem:[%s8 + $0xe0] sm:$0xff]
      %v1666 = vld [vmem:[%s8 + $0xe8] sm:$0xff]
      %v1667 = vld [vmem:[%s8 + $0xf0] sm:$0xff]
      %v1668 = vld [vmem:[%s8 + $0xf8] sm:$0xff]
      %v1669 = vld [vmem:[%s9] sm:$0xff]
      %v1670 = vld [vmem:[%s9 + $0x8] sm:$0xff]
      %v1671 = vld [vmem:[%s9 + $0x10] sm:$0xff]
      %v1672 = vld [vmem:[%s9 + $0x18] sm:$0xff]
      %v1673 = vld [vmem:[%s9 + $0x20] sm:$0xff]
      %v1674 = vld [vmem:[%s9 + $0x28] sm:$0xff]
      %v1675 = vld [vmem:[%s9 + $0x30] sm:$0xff]
      %v1676 = vld [vmem:[%s9 + $0x38] sm:$0xff]
      %v1677 = vld [vmem:[%s9 + $0x40] sm:$0xff]
      %v1678 = vld [vmem:[%s9 + $0x48] sm:$0xff]
      %v1679 = vld [vmem:[%s9 + $0x50] sm:$0xff]
      %v1680 = vld [vmem:[%s9 + $0x58] sm:$0xff]
      %v1681 = vld [vmem:[%s9 + $0x60] sm:$0xff]
      %v1682 = vld [vmem:[%s9 + $0x68] sm:$0xff]
      %v1683 = vld [vmem:[%s9 + $0x70] sm:$0xff]
      %v1684 = vld [vmem:[%s9 + $0x78] sm:$0xff]
      %v1685 = vld [vmem:[%s9 + $0x80] sm:$0xff]
      %v1686 = vld [vmem:[%s9 + $0x88] sm:$0xff]
      %v1687 = vld [vmem:[%s9 + $0x90] sm:$0xff]
      %v1688 = vld [vmem:[%s9 + $0x98] sm:$0xff]
      %v1689 = vld [vmem:[%s9 + $0xa0] sm:$0xff]
      %v1690 = vld [vmem:[%s9 + $0xa8] sm:$0xff]
      %v1691 = vld [vmem:[%s9 + $0xb0] sm:$0xff]
      %v1692 = vld [vmem:[%s9 + $0xb8] sm:$0xff]
      %v1693 = vld [vmem:[%s9 + $0xc0] sm:$0xff]
      %v1694 = vld [vmem:[%s9 + $0xc8] sm:$0xff]
      %v1695 = vld [vmem:[%s9 + $0xd0] sm:$0xff]
      %v1696 = vld [vmem:[%s9 + $0xd8] sm:$0xff]
      %v1697 = vld [vmem:[%s9 + $0xe0] sm:$0xff]
      %v1698 = vld [vmem:[%s9 + $0xe8] sm:$0xff]
      %v1699 = vld [vmem:[%s9 + $0xf0] sm:$0xff]
      %v1700 = vld [vmem:[%s9 + $0xf8] sm:$0xff]
      %1702 = vset.pattern.permute.xlu0 0
      %1703 = vperm.xlu0 %1702, %v1669
      %v1704 = vpop.permute.xlu0 %1703
      %1707 = vset.pattern.permute.xlu0 0
      %1708 = vperm.xlu0 %1707, %v1670
      %v1709 = vpop.permute.xlu0 %1708
      %1712 = vset.pattern.permute.xlu0 0
      %1713 = vperm.xlu0 %1712, %v1671
      %v1714 = vpop.permute.xlu0 %1713
      %1717 = vset.pattern.permute.xlu0 0
      %1718 = vperm.xlu0 %1717, %v1672
      %v1719 = vpop.permute.xlu0 %1718
      %1722 = vset.pattern.permute.xlu0 0
      %1723 = vperm.xlu0 %1722, %v1673
      %v1724 = vpop.permute.xlu0 %1723
      %1727 = vset.pattern.permute.xlu0 0
      %1728 = vperm.xlu0 %1727, %v1674
      %v1729 = vpop.permute.xlu0 %1728
      %1732 = vset.pattern.permute.xlu0 0
      %1733 = vperm.xlu0 %1732, %v1675
      %v1734 = vpop.permute.xlu0 %1733
      %1737 = vset.pattern.permute.xlu0 0
      %1738 = vperm.xlu0 %1737, %v1676
      %v1739 = vpop.permute.xlu0 %1738
      %1742 = vset.pattern.permute.xlu0 0
      %1743 = vperm.xlu0 %1742, %v1677
      %v1744 = vpop.permute.xlu0 %1743
      %1747 = vset.pattern.permute.xlu0 0
      %1748 = vperm.xlu0 %1747, %v1678
      %v1749 = vpop.permute.xlu0 %1748
      %1752 = vset.pattern.permute.xlu0 0
      %1753 = vperm.xlu0 %1752, %v1679
      %v1754 = vpop.permute.xlu0 %1753
      %1757 = vset.pattern.permute.xlu0 0
      %1758 = vperm.xlu0 %1757, %v1680
      %v1759 = vpop.permute.xlu0 %1758
      %1762 = vset.pattern.permute.xlu0 0
      %1763 = vperm.xlu0 %1762, %v1681
      %v1764 = vpop.permute.xlu0 %1763
      %1767 = vset.pattern.permute.xlu0 0
      %1768 = vperm.xlu0 %1767, %v1682
      %v1769 = vpop.permute.xlu0 %1768
      %1772 = vset.pattern.permute.xlu0 0
      %1773 = vperm.xlu0 %1772, %v1683
      %v1774 = vpop.permute.xlu0 %1773
      %1777 = vset.pattern.permute.xlu0 0
      %1778 = vperm.xlu0 %1777, %v1684
      %v1779 = vpop.permute.xlu0 %1778
      %1782 = vset.pattern.permute.xlu0 0
      %1783 = vperm.xlu0 %1782, %v1685
      %v1784 = vpop.permute.xlu0 %1783
      %1787 = vset.pattern.permute.xlu0 0
      %1788 = vperm.xlu0 %1787, %v1686
      %v1789 = vpop.permute.xlu0 %1788
      %1792 = vset.pattern.permute.xlu0 0
      %1793 = vperm.xlu0 %1792, %v1687
      %v1794 = vpop.permute.xlu0 %1793
      %1797 = vset.pattern.permute.xlu0 0
      %1798 = vperm.xlu0 %1797, %v1688
      %v1799 = vpop.permute.xlu0 %1798
      %1802 = vset.pattern.permute.xlu0 0
      %1803 = vperm.xlu0 %1802, %v1689
      %v1804 = vpop.permute.xlu0 %1803
      %1807 = vset.pattern.permute.xlu0 0
      %1808 = vperm.xlu0 %1807, %v1690
      %v1809 = vpop.permute.xlu0 %1808
      %1812 = vset.pattern.permute.xlu0 0
      %1813 = vperm.xlu0 %1812, %v1691
      %v1814 = vpop.permute.xlu0 %1813
      %1817 = vset.pattern.permute.xlu0 0
      %1818 = vperm.xlu0 %1817, %v1692
      %v1819 = vpop.permute.xlu0 %1818
      %1822 = vset.pattern.permute.xlu0 0
      %1823 = vperm.xlu0 %1822, %v1693
      %v1824 = vpop.permute.xlu0 %1823
      %1827 = vset.pattern.permute.xlu0 0
      %1828 = vperm.xlu0 %1827, %v1694
      %v1829 = vpop.permute.xlu0 %1828
      %1832 = vset.pattern.permute.xlu0 0
      %1833 = vperm.xlu0 %1832, %v1695
      %v1834 = vpop.permute.xlu0 %1833
      %1837 = vset.pattern.permute.xlu0 0
      %1838 = vperm.xlu0 %1837, %v1696
      %v1839 = vpop.permute.xlu0 %1838
      %1842 = vset.pattern.permute.xlu0 0
      %1843 = vperm.xlu0 %1842, %v1697
      %v1844 = vpop.permute.xlu0 %1843
      %1847 = vset.pattern.permute.xlu0 0
      %1848 = vperm.xlu0 %1847, %v1698
      %v1849 = vpop.permute.xlu0 %1848
      %1852 = vset.pattern.permute.xlu0 0
      %1853 = vperm.xlu0 %1852, %v1699
      %v1854 = vpop.permute.xlu0 %1853
      %1857 = vset.pattern.permute.xlu0 0
      %1858 = vperm.xlu0 %1857, %v1700
      %v1859 = vpop.permute.xlu0 %1858
      %v1862 = vsel %vm802, %v1637, 0
      %v1865 = vsel %vm802, %v1638, 0
      %v1868 = vsel %vm802, %v1639, 0
      %v1871 = vsel %vm802, %v1640, 0
      %v1874 = vsel %vm802, %v1641, 0
      %v1877 = vsel %vm802, %v1642, 0
      %v1880 = vsel %vm802, %v1643, 0
      %v1883 = vsel %vm802, %v1644, 0
      %v1886 = vsel %vm802, %v1645, 0
      %v1889 = vsel %vm802, %v1646, 0
      %v1892 = vsel %vm802, %v1647, 0
      %v1895 = vsel %vm802, %v1648, 0
      %v1898 = vsel %vm802, %v1649, 0
      %v1901 = vsel %vm802, %v1650, 0
      %v1904 = vsel %vm802, %v1651, 0
      %v1907 = vsel %vm802, %v1652, 0
      %v1910 = vsel %vm802, %v1653, 0
      %v1913 = vsel %vm802, %v1654, 0
      %v1916 = vsel %vm802, %v1655, 0
      %v1919 = vsel %vm802, %v1656, 0
      %v1922 = vsel %vm802, %v1657, 0
      %v1925 = vsel %vm802, %v1658, 0
      %v1928 = vsel %vm802, %v1659, 0
      %v1931 = vsel %vm802, %v1660, 0
      %v1934 = vsel %vm802, %v1661, 0
      %v1937 = vsel %vm802, %v1662, 0
      %v1940 = vsel %vm802, %v1663, 0
      %v1943 = vsel %vm802, %v1664, 0
      %v1946 = vsel %vm802, %v1665, 0
      %v1949 = vsel %vm802, %v1666, 0
      %v1952 = vsel %vm802, %v1667, 0
      %v1955 = vsel %vm802, %v1668, 0
      %1957 = vmatpush.msra.mxu0 0.0
      %1958 = vmatpush.msra.mxu0 0.0
      %1959 = vmatpush.msra.mxu0 0.0
      %1960 = vmatpush.msra.mxu0 0.0
      %1961 = vmatpush.msra.mxu0 0.0
      %1962 = vmatpush.msra.mxu0 0.0
      %1963 = vmatpush.msra.mxu0 0.0
      %1964 = vmatpush.msra.mxu0 0.0
      %1965 = vmatpush.msra.mxu0 0.0
      %1966 = vmatpush.msra.mxu0 0.0
      %1967 = vmatpush.msra.mxu0 %v576
      %1968 = vmatpush.msra.mxu0 %v575
      %1969 = vmatpush.msra.mxu0 %v574
      %1970 = vmatpush.msra.mxu0 %v573
      %1971 = vmatpush.msra.mxu0 %v572
      %1972 = vmatpush.msra.mxu0 %v571
      %1973 = vmatmul.f32.gmra.mxu0 %v1862
      %v1974 = vpop.f32.mrf.mxu0
      %v1975 = vadd.f32 %v1704, %v1974
      %1976 = vmatmul.f32.gmra.mxu0 %v1865
      %v1977 = vpop.f32.mrf.mxu0
      %v1978 = vadd.f32 %v1709, %v1977
      %1979 = vmatmul.f32.gmra.mxu0 %v1868
      %v1980 = vpop.f32.mrf.mxu0
      %v1981 = vadd.f32 %v1714, %v1980
      %1982 = vmatmul.f32.gmra.mxu0 %v1871
      %v1983 = vpop.f32.mrf.mxu0
      %v1984 = vadd.f32 %v1719, %v1983
      %1985 = vmatmul.f32.gmra.mxu0 %v1874
      %v1986 = vpop.f32.mrf.mxu0
      %v1987 = vadd.f32 %v1724, %v1986
      %1988 = vmatmul.f32.gmra.mxu0 %v1877
      %v1989 = vpop.f32.mrf.mxu0
      %v1990 = vadd.f32 %v1729, %v1989
      %1991 = vmatmul.f32.gmra.mxu0 %v1880
      %v1992 = vpop.f32.mrf.mxu0
      %v1993 = vadd.f32 %v1734, %v1992
      %1994 = vmatmul.f32.gmra.mxu0 %v1883
      %v1995 = vpop.f32.mrf.mxu0
      %v1996 = vadd.f32 %v1739, %v1995
      %1997 = vmatmul.f32.gmra.mxu0 %v1886
      %v1998 = vpop.f32.mrf.mxu0
      %v1999 = vadd.f32 %v1744, %v1998
      %2000 = vmatmul.f32.gmra.mxu0 %v1889
      %v2001 = vpop.f32.mrf.mxu0
      %v2002 = vadd.f32 %v1749, %v2001
      %2003 = vmatmul.f32.gmra.mxu0 %v1892
      %v2004 = vpop.f32.mrf.mxu0
      %v2005 = vadd.f32 %v1754, %v2004
      %2006 = vmatmul.f32.gmra.mxu0 %v1895
      %v2007 = vpop.f32.mrf.mxu0
      %v2008 = vadd.f32 %v1759, %v2007
      %2009 = vmatmul.f32.gmra.mxu0 %v1898
      %v2010 = vpop.f32.mrf.mxu0
      %v2011 = vadd.f32 %v1764, %v2010
      %2012 = vmatmul.f32.gmra.mxu0 %v1901
      %v2013 = vpop.f32.mrf.mxu0
      %v2014 = vadd.f32 %v1769, %v2013
      %2015 = vmatmul.f32.gmra.mxu0 %v1904
      %v2016 = vpop.f32.mrf.mxu0
      %v2017 = vadd.f32 %v1774, %v2016
      %2018 = vmatmul.f32.gmra.mxu0 %v1907
      %v2019 = vpop.f32.mrf.mxu0
      %v2020 = vadd.f32 %v1779, %v2019
      %2021 = vmatmul.f32.gmra.mxu0 %v1910
      %v2022 = vpop.f32.mrf.mxu0
      %v2023 = vadd.f32 %v1784, %v2022
      %2024 = vmatmul.f32.gmra.mxu0 %v1913
      %v2025 = vpop.f32.mrf.mxu0
      %v2026 = vadd.f32 %v1789, %v2025
      %2027 = vmatmul.f32.gmra.mxu0 %v1916
      %v2028 = vpop.f32.mrf.mxu0
      %v2029 = vadd.f32 %v1794, %v2028
      %2030 = vmatmul.f32.gmra.mxu0 %v1919
      %v2031 = vpop.f32.mrf.mxu0
      %v2032 = vadd.f32 %v1799, %v2031
      %2033 = vmatmul.f32.gmra.mxu0 %v1922
      %v2034 = vpop.f32.mrf.mxu0
      %v2035 = vadd.f32 %v1804, %v2034
      %2036 = vmatmul.f32.gmra.mxu0 %v1925
      %v2037 = vpop.f32.mrf.mxu0
      %v2038 = vadd.f32 %v1809, %v2037
      %2039 = vmatmul.f32.gmra.mxu0 %v1928
      %v2040 = vpop.f32.mrf.mxu0
      %v2041 = vadd.f32 %v1814, %v2040
      %2042 = vmatmul.f32.gmra.mxu0 %v1931
      %v2043 = vpop.f32.mrf.mxu0
      %v2044 = vadd.f32 %v1819, %v2043
      %2045 = vmatmul.f32.gmra.mxu0 %v1934
      %v2046 = vpop.f32.mrf.mxu0
      %v2047 = vadd.f32 %v1824, %v2046
      %2048 = vmatmul.f32.gmra.mxu0 %v1937
      %v2049 = vpop.f32.mrf.mxu0
      %v2050 = vadd.f32 %v1829, %v2049
      %2051 = vmatmul.f32.gmra.mxu0 %v1940
      %v2052 = vpop.f32.mrf.mxu0
      %v2053 = vadd.f32 %v1834, %v2052
      %2054 = vmatmul.f32.gmra.mxu0 %v1943
      %v2055 = vpop.f32.mrf.mxu0
      %v2056 = vadd.f32 %v1839, %v2055
      %2057 = vmatmul.f32.gmra.mxu0 %v1946
      %v2058 = vpop.f32.mrf.mxu0
      %v2059 = vadd.f32 %v1844, %v2058
      %2060 = vmatmul.f32.gmra.mxu0 %v1949
      %v2061 = vpop.f32.mrf.mxu0
      %v2062 = vadd.f32 %v1849, %v2061
      %2063 = vmatmul.f32.gmra.mxu0 %v1952
      %v2064 = vpop.f32.mrf.mxu0
      %v2065 = vadd.f32 %v1854, %v2064
      %2066 = vmatmul.f32.gmra.mxu0 %v1955
      %v2067 = vpop.f32.mrf.mxu0
      %v2068 = vadd.f32 %v1859, %v2067
      %2069 = vdwg.mxu0
      %v2070 = vmax.f32 %v1975, 0.0
      %v2071 = vmax.f32 %v1978, 0.0
      %v2072 = vmax.f32 %v1981, 0.0
      %v2073 = vmax.f32 %v1984, 0.0
      %v2074 = vmax.f32 %v1987, 0.0
      %v2075 = vmax.f32 %v1990, 0.0
      %v2076 = vmax.f32 %v1993, 0.0
      %v2077 = vmax.f32 %v1996, 0.0
      %v2078 = vmax.f32 %v1999, 0.0
      %v2079 = vmax.f32 %v2002, 0.0
      %v2080 = vmax.f32 %v2005, 0.0
      %v2081 = vmax.f32 %v2008, 0.0
      %v2082 = vmax.f32 %v2011, 0.0
      %v2083 = vmax.f32 %v2014, 0.0
      %v2084 = vmax.f32 %v2017, 0.0
      %v2085 = vmax.f32 %v2020, 0.0
      %v2086 = vmax.f32 %v2023, 0.0
      %v2087 = vmax.f32 %v2026, 0.0
      %v2088 = vmax.f32 %v2029, 0.0
      %v2089 = vmax.f32 %v2032, 0.0
      %v2090 = vmax.f32 %v2035, 0.0
      %v2091 = vmax.f32 %v2038, 0.0
      %v2092 = vmax.f32 %v2041, 0.0
      %v2093 = vmax.f32 %v2044, 0.0
      %v2094 = vmax.f32 %v2047, 0.0
      %v2095 = vmax.f32 %v2050, 0.0
      %v2096 = vmax.f32 %v2053, 0.0
      %v2097 = vmax.f32 %v2056, 0.0
      %v2098 = vmax.f32 %v2059, 0.0
      %v2099 = vmax.f32 %v2062, 0.0
      %v2100 = vmax.f32 %v2065, 0.0
      %v2101 = vmax.f32 %v2068, 0.0
      %v2102 = vld [vmem:[%s10] sm:$0xff]
      %v2103 = vld [vmem:[%s10 + $0x8] sm:$0xff]
      %v2104 = vld [vmem:[%s10 + $0x10] sm:$0xff]
      %v2105 = vld [vmem:[%s10 + $0x18] sm:$0xff]
      %v2106 = vld [vmem:[%s10 + $0x20] sm:$0xff]
      %v2107 = vld [vmem:[%s10 + $0x28] sm:$0xff]
      %v2108 = vld [vmem:[%s10 + $0x30] sm:$0xff]
      %v2109 = vld [vmem:[%s10 + $0x38] sm:$0xff]
      %v2110 = vld [vmem:[%s10 + $0x40] sm:$0xff]
      %v2111 = vld [vmem:[%s10 + $0x48] sm:$0xff]
      %v2112 = vld [vmem:[%s10 + $0x50] sm:$0xff]
      %v2113 = vld [vmem:[%s10 + $0x58] sm:$0xff]
      %v2114 = vld [vmem:[%s10 + $0x60] sm:$0xff]
      %v2115 = vld [vmem:[%s10 + $0x68] sm:$0xff]
      %v2116 = vld [vmem:[%s10 + $0x70] sm:$0xff]
      %v2117 = vld [vmem:[%s10 + $0x78] sm:$0xff]
      %v2118 = vld [vmem:[%s10 + $0x80] sm:$0xff]
      %v2119 = vld [vmem:[%s10 + $0x88] sm:$0xff]
      %v2120 = vld [vmem:[%s10 + $0x90] sm:$0xff]
      %v2121 = vld [vmem:[%s10 + $0x98] sm:$0xff]
      %v2122 = vld [vmem:[%s10 + $0xa0] sm:$0xff]
      %v2123 = vld [vmem:[%s10 + $0xa8] sm:$0xff]
      %v2124 = vld [vmem:[%s10 + $0xb0] sm:$0xff]
      %v2125 = vld [vmem:[%s10 + $0xb8] sm:$0xff]
      %v2126 = vld [vmem:[%s10 + $0xc0] sm:$0xff]
      %v2127 = vld [vmem:[%s10 + $0xc8] sm:$0xff]
      %v2128 = vld [vmem:[%s10 + $0xd0] sm:$0xff]
      %v2129 = vld [vmem:[%s10 + $0xd8] sm:$0xff]
      %v2130 = vld [vmem:[%s10 + $0xe0] sm:$0xff]
      %v2131 = vld [vmem:[%s10 + $0xe8] sm:$0xff]
      %v2132 = vld [vmem:[%s10 + $0xf0] sm:$0xff]
      %v2133 = vld [vmem:[%s10 + $0xf8] sm:$0xff]
      %v2134 = vld [vmem:[%s10 + $0x100] sm:$0xff]
      %v2135 = vld [vmem:[%s10 + $0x108] sm:$0xff]
      %v2136 = vld [vmem:[%s10 + $0x110] sm:$0xff]
      %v2137 = vld [vmem:[%s10 + $0x118] sm:$0xff]
      %v2138 = vld [vmem:[%s10 + $0x120] sm:$0xff]
      %v2139 = vld [vmem:[%s10 + $0x128] sm:$0xff]
      %v2140 = vld [vmem:[%s10 + $0x130] sm:$0xff]
      %v2141 = vld [vmem:[%s10 + $0x138] sm:$0xff]
      %v2142 = vld [vmem:[%s10 + $0x140] sm:$0xff]
      %v2143 = vld [vmem:[%s10 + $0x148] sm:$0xff]
      %v2144 = vld [vmem:[%s10 + $0x150] sm:$0xff]
      %v2145 = vld [vmem:[%s10 + $0x158] sm:$0xff]
      %v2146 = vld [vmem:[%s10 + $0x160] sm:$0xff]
      %v2147 = vld [vmem:[%s10 + $0x168] sm:$0xff]
      %v2148 = vld [vmem:[%s10 + $0x170] sm:$0xff]
      %v2149 = vld [vmem:[%s10 + $0x178] sm:$0xff]
      %v2150 = vld [vmem:[%s10 + $0x180] sm:$0xff]
      %v2151 = vld [vmem:[%s10 + $0x188] sm:$0xff]
      %v2152 = vld [vmem:[%s10 + $0x190] sm:$0xff]
      %v2153 = vld [vmem:[%s10 + $0x198] sm:$0xff]
      %v2154 = vld [vmem:[%s10 + $0x1a0] sm:$0xff]
      %v2155 = vld [vmem:[%s10 + $0x1a8] sm:$0xff]
      %v2156 = vld [vmem:[%s10 + $0x1b0] sm:$0xff]
      %v2157 = vld [vmem:[%s10 + $0x1b8] sm:$0xff]
      %v2158 = vld [vmem:[%s10 + $0x1c0] sm:$0xff]
      %v2159 = vld [vmem:[%s10 + $0x1c8] sm:$0xff]
      %v2160 = vld [vmem:[%s10 + $0x1d0] sm:$0xff]
      %v2161 = vld [vmem:[%s10 + $0x1d8] sm:$0xff]
      %v2162 = vld [vmem:[%s10 + $0x1e0] sm:$0xff]
      %v2163 = vld [vmem:[%s10 + $0x1e8] sm:$0xff]
      %v2164 = vld [vmem:[%s10 + $0x1f0] sm:$0xff]
      %v2165 = vld [vmem:[%s10 + $0x1f8] sm:$0xff]
      %v2166 = vld [vmem:[%s11] sm:$0xff]
      %v2167 = vld [vmem:[%s11 + $0x8] sm:$0xff]
      %v2168 = vld [vmem:[%s11 + $0x10] sm:$0xff]
      %v2169 = vld [vmem:[%s11 + $0x18] sm:$0xff]
      %v2170 = vld [vmem:[%s11 + $0x20] sm:$0xff]
      %v2171 = vld [vmem:[%s11 + $0x28] sm:$0xff]
      %v2172 = vld [vmem:[%s11 + $0x30] sm:$0xff]
      %v2173 = vld [vmem:[%s11 + $0x38] sm:$0xff]
      %v2174 = vld [vmem:[%s11 + $0x40] sm:$0xff]
      %v2175 = vld [vmem:[%s11 + $0x48] sm:$0xff]
      %v2176 = vld [vmem:[%s11 + $0x50] sm:$0xff]
      %v2177 = vld [vmem:[%s11 + $0x58] sm:$0xff]
      %v2178 = vld [vmem:[%s11 + $0x60] sm:$0xff]
      %v2179 = vld [vmem:[%s11 + $0x68] sm:$0xff]
      %v2180 = vld [vmem:[%s11 + $0x70] sm:$0xff]
      %v2181 = vld [vmem:[%s11 + $0x78] sm:$0xff]
      %v2182 = vld [vmem:[%s11 + $0x80] sm:$0xff]
      %v2183 = vld [vmem:[%s11 + $0x88] sm:$0xff]
      %v2184 = vld [vmem:[%s11 + $0x90] sm:$0xff]
      %v2185 = vld [vmem:[%s11 + $0x98] sm:$0xff]
      %v2186 = vld [vmem:[%s11 + $0xa0] sm:$0xff]
      %v2187 = vld [vmem:[%s11 + $0xa8] sm:$0xff]
      %v2188 = vld [vmem:[%s11 + $0xb0] sm:$0xff]
      %v2189 = vld [vmem:[%s11 + $0xb8] sm:$0xff]
      %v2190 = vld [vmem:[%s11 + $0xc0] sm:$0xff]
      %v2191 = vld [vmem:[%s11 + $0xc8] sm:$0xff]
      %v2192 = vld [vmem:[%s11 + $0xd0] sm:$0xff]
      %v2193 = vld [vmem:[%s11 + $0xd8] sm:$0xff]
      %v2194 = vld [vmem:[%s11 + $0xe0] sm:$0xff]
      %v2195 = vld [vmem:[%s11 + $0xe8] sm:$0xff]
      %v2196 = vld [vmem:[%s11 + $0xf0] sm:$0xff]
      %v2197 = vld [vmem:[%s11 + $0xf8] sm:$0xff]
      %2199 = vset.pattern.permute.xlu0 0
      %2200 = vperm.xlu0 %2199, %v2166
      %v2201 = vpop.permute.xlu0 %2200
      %2204 = vset.pattern.permute.xlu0 0
      %2205 = vperm.xlu0 %2204, %v2167
      %v2206 = vpop.permute.xlu0 %2205
      %2209 = vset.pattern.permute.xlu0 0
      %2210 = vperm.xlu0 %2209, %v2168
      %v2211 = vpop.permute.xlu0 %2210
      %2214 = vset.pattern.permute.xlu0 0
      %2215 = vperm.xlu0 %2214, %v2169
      %v2216 = vpop.permute.xlu0 %2215
      %2219 = vset.pattern.permute.xlu0 0
      %2220 = vperm.xlu0 %2219, %v2170
      %v2221 = vpop.permute.xlu0 %2220
      %2224 = vset.pattern.permute.xlu0 0
      %2225 = vperm.xlu0 %2224, %v2171
      %v2226 = vpop.permute.xlu0 %2225
      %2229 = vset.pattern.permute.xlu0 0
      %2230 = vperm.xlu0 %2229, %v2172
      %v2231 = vpop.permute.xlu0 %2230
      %2234 = vset.pattern.permute.xlu0 0
      %2235 = vperm.xlu0 %2234, %v2173
      %v2236 = vpop.permute.xlu0 %2235
      %2239 = vset.pattern.permute.xlu0 0
      %2240 = vperm.xlu0 %2239, %v2174
      %v2241 = vpop.permute.xlu0 %2240
      %2244 = vset.pattern.permute.xlu0 0
      %2245 = vperm.xlu0 %2244, %v2175
      %v2246 = vpop.permute.xlu0 %2245
      %2249 = vset.pattern.permute.xlu0 0
      %2250 = vperm.xlu0 %2249, %v2176
      %v2251 = vpop.permute.xlu0 %2250
      %2254 = vset.pattern.permute.xlu0 0
      %2255 = vperm.xlu0 %2254, %v2177
      %v2256 = vpop.permute.xlu0 %2255
      %2259 = vset.pattern.permute.xlu0 0
      %2260 = vperm.xlu0 %2259, %v2178
      %v2261 = vpop.permute.xlu0 %2260
      %2264 = vset.pattern.permute.xlu0 0
      %2265 = vperm.xlu0 %2264, %v2179
      %v2266 = vpop.permute.xlu0 %2265
      %2269 = vset.pattern.permute.xlu0 0
      %2270 = vperm.xlu0 %2269, %v2180
      %v2271 = vpop.permute.xlu0 %2270
      %2274 = vset.pattern.permute.xlu0 0
      %2275 = vperm.xlu0 %2274, %v2181
      %v2276 = vpop.permute.xlu0 %2275
      %2279 = vset.pattern.permute.xlu0 0
      %2280 = vperm.xlu0 %2279, %v2182
      %v2281 = vpop.permute.xlu0 %2280
      %2284 = vset.pattern.permute.xlu0 0
      %2285 = vperm.xlu0 %2284, %v2183
      %v2286 = vpop.permute.xlu0 %2285
      %2289 = vset.pattern.permute.xlu0 0
      %2290 = vperm.xlu0 %2289, %v2184
      %v2291 = vpop.permute.xlu0 %2290
      %2294 = vset.pattern.permute.xlu0 0
      %2295 = vperm.xlu0 %2294, %v2185
      %v2296 = vpop.permute.xlu0 %2295
      %2299 = vset.pattern.permute.xlu0 0
      %2300 = vperm.xlu0 %2299, %v2186
      %v2301 = vpop.permute.xlu0 %2300
      %2304 = vset.pattern.permute.xlu0 0
      %2305 = vperm.xlu0 %2304, %v2187
      %v2306 = vpop.permute.xlu0 %2305
      %2309 = vset.pattern.permute.xlu0 0
      %2310 = vperm.xlu0 %2309, %v2188
      %v2311 = vpop.permute.xlu0 %2310
      %2314 = vset.pattern.permute.xlu0 0
      %2315 = vperm.xlu0 %2314, %v2189
      %v2316 = vpop.permute.xlu0 %2315
      %2319 = vset.pattern.permute.xlu0 0
      %2320 = vperm.xlu0 %2319, %v2190
      %v2321 = vpop.permute.xlu0 %2320
      %2324 = vset.pattern.permute.xlu0 0
      %2325 = vperm.xlu0 %2324, %v2191
      %v2326 = vpop.permute.xlu0 %2325
      %2329 = vset.pattern.permute.xlu0 0
      %2330 = vperm.xlu0 %2329, %v2192
      %v2331 = vpop.permute.xlu0 %2330
      %2334 = vset.pattern.permute.xlu0 0
      %2335 = vperm.xlu0 %2334, %v2193
      %v2336 = vpop.permute.xlu0 %2335
      %2339 = vset.pattern.permute.xlu0 0
      %2340 = vperm.xlu0 %2339, %v2194
      %v2341 = vpop.permute.xlu0 %2340
      %2344 = vset.pattern.permute.xlu0 0
      %2345 = vperm.xlu0 %2344, %v2195
      %v2346 = vpop.permute.xlu0 %2345
      %2349 = vset.pattern.permute.xlu0 0
      %2350 = vperm.xlu0 %2349, %v2196
      %v2351 = vpop.permute.xlu0 %2350
      %2354 = vset.pattern.permute.xlu0 0
      %2355 = vperm.xlu0 %2354, %v2197
      %v2356 = vpop.permute.xlu0 %2355
      %2358 = vmatpush.msra.mxu0 %v2085
      %2359 = vmatpush.msra.mxu0 %v2084
      %2360 = vmatpush.msra.mxu0 %v2083
      %2361 = vmatpush.msra.mxu0 %v2082
      %2362 = vmatpush.msra.mxu0 %v2081
      %2363 = vmatpush.msra.mxu0 %v2080
      %2364 = vmatpush.msra.mxu0 %v2079
      %2365 = vmatpush.msra.mxu0 %v2078
      %2366 = vmatpush.msra.mxu0 %v2077
      %2367 = vmatpush.msra.mxu0 %v2076
      %2368 = vmatpush.msra.mxu0 %v2075
      %2369 = vmatpush.msra.mxu0 %v2074
      %2370 = vmatpush.msra.mxu0 %v2073
      %2371 = vmatpush.msra.mxu0 %v2072
      %2372 = vmatpush.msra.mxu0 %v2071
      %2373 = vmatpush.msra.mxu0 %v2070
      %2374 = vmatmul.f32.gmra.mxu0 %v2102
      %v2375 = vpop.f32.mrf.mxu0
      %v2376 = vadd.f32 %v2201, %v2375
      %2377 = vmatmul.f32.gmra.mxu0 %v2104
      %v2378 = vpop.f32.mrf.mxu0
      %v2379 = vadd.f32 %v2206, %v2378
      %2380 = vmatmul.f32.gmra.mxu0 %v2106
      %v2381 = vpop.f32.mrf.mxu0
      %v2382 = vadd.f32 %v2211, %v2381
      %2383 = vmatmul.f32.gmra.mxu0 %v2108
      %v2384 = vpop.f32.mrf.mxu0
      %v2385 = vadd.f32 %v2216, %v2384
      %2386 = vmatmul.f32.gmra.mxu0 %v2110
      %v2387 = vpop.f32.mrf.mxu0
      %v2388 = vadd.f32 %v2221, %v2387
      %2389 = vmatmul.f32.gmra.mxu0 %v2112
      %v2390 = vpop.f32.mrf.mxu0
      %v2391 = vadd.f32 %v2226, %v2390
      %2392 = vmatmul.f32.gmra.mxu0 %v2114
      %v2393 = vpop.f32.mrf.mxu0
      %v2394 = vadd.f32 %v2231, %v2393
      %2395 = vmatmul.f32.gmra.mxu0 %v2116
      %v2396 = vpop.f32.mrf.mxu0
      %v2397 = vadd.f32 %v2236, %v2396
      %2398 = vmatmul.f32.gmra.mxu0 %v2118
      %v2399 = vpop.f32.mrf.mxu0
      %v2400 = vadd.f32 %v2241, %v2399
      %2401 = vmatmul.f32.gmra.mxu0 %v2120
      %v2402 = vpop.f32.mrf.mxu0
      %v2403 = vadd.f32 %v2246, %v2402
      %2404 = vmatmul.f32.gmra.mxu0 %v2122
      %v2405 = vpop.f32.mrf.mxu0
      %v2406 = vadd.f32 %v2251, %v2405
      %2407 = vmatmul.f32.gmra.mxu0 %v2124
      %v2408 = vpop.f32.mrf.mxu0
      %v2409 = vadd.f32 %v2256, %v2408
      %2410 = vmatmul.f32.gmra.mxu0 %v2126
      %v2411 = vpop.f32.mrf.mxu0
      %v2412 = vadd.f32 %v2261, %v2411
      %2413 = vmatmul.f32.gmra.mxu0 %v2128
      %v2414 = vpop.f32.mrf.mxu0
      %v2415 = vadd.f32 %v2266, %v2414
      %2416 = vmatmul.f32.gmra.mxu0 %v2130
      %v2417 = vpop.f32.mrf.mxu0
      %v2418 = vadd.f32 %v2271, %v2417
      %2419 = vmatmul.f32.gmra.mxu0 %v2132
      %v2420 = vpop.f32.mrf.mxu0
      %v2421 = vadd.f32 %v2276, %v2420
      %2422 = vmatmul.f32.gmra.mxu0 %v2134
      %v2423 = vpop.f32.mrf.mxu0
      %v2424 = vadd.f32 %v2281, %v2423
      %2425 = vmatmul.f32.gmra.mxu0 %v2136
      %v2426 = vpop.f32.mrf.mxu0
      %v2427 = vadd.f32 %v2286, %v2426
      %2428 = vmatmul.f32.gmra.mxu0 %v2138
      %v2429 = vpop.f32.mrf.mxu0
      %v2430 = vadd.f32 %v2291, %v2429
      %2431 = vmatmul.f32.gmra.mxu0 %v2140
      %v2432 = vpop.f32.mrf.mxu0
      %v2433 = vadd.f32 %v2296, %v2432
      %2434 = vmatmul.f32.gmra.mxu0 %v2142
      %v2435 = vpop.f32.mrf.mxu0
      %v2436 = vadd.f32 %v2301, %v2435
      %2437 = vmatmul.f32.gmra.mxu0 %v2144
      %v2438 = vpop.f32.mrf.mxu0
      %v2439 = vadd.f32 %v2306, %v2438
      %2440 = vmatmul.f32.gmra.mxu0 %v2146
      %v2441 = vpop.f32.mrf.mxu0
      %v2442 = vadd.f32 %v2311, %v2441
      %2443 = vmatmul.f32.gmra.mxu0 %v2148
      %v2444 = vpop.f32.mrf.mxu0
      %v2445 = vadd.f32 %v2316, %v2444
      %2446 = vmatmul.f32.gmra.mxu0 %v2150
      %v2447 = vpop.f32.mrf.mxu0
      %v2448 = vadd.f32 %v2321, %v2447
      %2449 = vmatmul.f32.gmra.mxu0 %v2152
      %v2450 = vpop.f32.mrf.mxu0
      %v2451 = vadd.f32 %v2326, %v2450
      %2452 = vmatmul.f32.gmra.mxu0 %v2154
      %v2453 = vpop.f32.mrf.mxu0
      %v2454 = vadd.f32 %v2331, %v2453
      %2455 = vmatmul.f32.gmra.mxu0 %v2156
      %v2456 = vpop.f32.mrf.mxu0
      %v2457 = vadd.f32 %v2336, %v2456
      %2458 = vmatmul.f32.gmra.mxu0 %v2158
      %v2459 = vpop.f32.mrf.mxu0
      %v2460 = vadd.f32 %v2341, %v2459
      %2461 = vmatmul.f32.gmra.mxu0 %v2160
      %v2462 = vpop.f32.mrf.mxu0
      %v2463 = vadd.f32 %v2346, %v2462
      %2464 = vmatmul.f32.gmra.mxu0 %v2162
      %v2465 = vpop.f32.mrf.mxu0
      %v2466 = vadd.f32 %v2351, %v2465
      %2467 = vmatmul.f32.gmra.mxu0 %v2164
      %v2468 = vpop.f32.mrf.mxu0
      %v2469 = vadd.f32 %v2356, %v2468
      %2470 = vdwg.mxu0
      %2471 = vmatpush.msra.mxu0 %v2101
      %2472 = vmatpush.msra.mxu0 %v2100
      %2473 = vmatpush.msra.mxu0 %v2099
      %2474 = vmatpush.msra.mxu0 %v2098
      %2475 = vmatpush.msra.mxu0 %v2097
      %2476 = vmatpush.msra.mxu0 %v2096
      %2477 = vmatpush.msra.mxu0 %v2095
      %2478 = vmatpush.msra.mxu0 %v2094
      %2479 = vmatpush.msra.mxu0 %v2093
      %2480 = vmatpush.msra.mxu0 %v2092
      %2481 = vmatpush.msra.mxu0 %v2091
      %2482 = vmatpush.msra.mxu0 %v2090
      %2483 = vmatpush.msra.mxu0 %v2089
      %2484 = vmatpush.msra.mxu0 %v2088
      %2485 = vmatpush.msra.mxu0 %v2087
      %2486 = vmatpush.msra.mxu0 %v2086
      %2487 = vmatmul.f32.gmra.mxu0 %v2103
      %v2488 = vpop.f32.mrf.mxu0
      %v2489 = vadd.f32 %v2376, %v2488
      %2490 = vmatmul.f32.gmra.mxu0 %v2105
      %v2491 = vpop.f32.mrf.mxu0
      %v2492 = vadd.f32 %v2379, %v2491
      %2493 = vmatmul.f32.gmra.mxu0 %v2107
      %v2494 = vpop.f32.mrf.mxu0
      %v2495 = vadd.f32 %v2382, %v2494
      %2496 = vmatmul.f32.gmra.mxu0 %v2109
      %v2497 = vpop.f32.mrf.mxu0
      %v2498 = vadd.f32 %v2385, %v2497
      %2499 = vmatmul.f32.gmra.mxu0 %v2111
      %v2500 = vpop.f32.mrf.mxu0
      %v2501 = vadd.f32 %v2388, %v2500
      %2502 = vmatmul.f32.gmra.mxu0 %v2113
      %v2503 = vpop.f32.mrf.mxu0
      %v2504 = vadd.f32 %v2391, %v2503
      %2505 = vmatmul.f32.gmra.mxu0 %v2115
      %v2506 = vpop.f32.mrf.mxu0
      %v2507 = vadd.f32 %v2394, %v2506
      %2508 = vmatmul.f32.gmra.mxu0 %v2117
      %v2509 = vpop.f32.mrf.mxu0
      %v2510 = vadd.f32 %v2397, %v2509
      %2511 = vmatmul.f32.gmra.mxu0 %v2119
      %v2512 = vpop.f32.mrf.mxu0
      %v2513 = vadd.f32 %v2400, %v2512
      %2514 = vmatmul.f32.gmra.mxu0 %v2121
      %v2515 = vpop.f32.mrf.mxu0
      %v2516 = vadd.f32 %v2403, %v2515
      %2517 = vmatmul.f32.gmra.mxu0 %v2123
      %v2518 = vpop.f32.mrf.mxu0
      %v2519 = vadd.f32 %v2406, %v2518
      %2520 = vmatmul.f32.gmra.mxu0 %v2125
      %v2521 = vpop.f32.mrf.mxu0
      %v2522 = vadd.f32 %v2409, %v2521
      %2523 = vmatmul.f32.gmra.mxu0 %v2127
      %v2524 = vpop.f32.mrf.mxu0
      %v2525 = vadd.f32 %v2412, %v2524
      %2526 = vmatmul.f32.gmra.mxu0 %v2129
      %v2527 = vpop.f32.mrf.mxu0
      %v2528 = vadd.f32 %v2415, %v2527
      %2529 = vmatmul.f32.gmra.mxu0 %v2131
      %v2530 = vpop.f32.mrf.mxu0
      %v2531 = vadd.f32 %v2418, %v2530
      %2532 = vmatmul.f32.gmra.mxu0 %v2133
      %v2533 = vpop.f32.mrf.mxu0
      %v2534 = vadd.f32 %v2421, %v2533
      %2535 = vmatmul.f32.gmra.mxu0 %v2135
      %v2536 = vpop.f32.mrf.mxu0
      %v2537 = vadd.f32 %v2424, %v2536
      %2538 = vmatmul.f32.gmra.mxu0 %v2137
      %v2539 = vpop.f32.mrf.mxu0
      %v2540 = vadd.f32 %v2427, %v2539
      %2541 = vmatmul.f32.gmra.mxu0 %v2139
      %v2542 = vpop.f32.mrf.mxu0
      %v2543 = vadd.f32 %v2430, %v2542
      %2544 = vmatmul.f32.gmra.mxu0 %v2141
      %v2545 = vpop.f32.mrf.mxu0
      %v2546 = vadd.f32 %v2433, %v2545
      %2547 = vmatmul.f32.gmra.mxu0 %v2143
      %v2548 = vpop.f32.mrf.mxu0
      %v2549 = vadd.f32 %v2436, %v2548
      %2550 = vmatmul.f32.gmra.mxu0 %v2145
      %v2551 = vpop.f32.mrf.mxu0
      %v2552 = vadd.f32 %v2439, %v2551
      %2553 = vmatmul.f32.gmra.mxu0 %v2147
      %v2554 = vpop.f32.mrf.mxu0
      %v2555 = vadd.f32 %v2442, %v2554
      %2556 = vmatmul.f32.gmra.mxu0 %v2149
      %v2557 = vpop.f32.mrf.mxu0
      %v2558 = vadd.f32 %v2445, %v2557
      %2559 = vmatmul.f32.gmra.mxu0 %v2151
      %v2560 = vpop.f32.mrf.mxu0
      %v2561 = vadd.f32 %v2448, %v2560
      %2562 = vmatmul.f32.gmra.mxu0 %v2153
      %v2563 = vpop.f32.mrf.mxu0
      %v2564 = vadd.f32 %v2451, %v2563
      %2565 = vmatmul.f32.gmra.mxu0 %v2155
      %v2566 = vpop.f32.mrf.mxu0
      %v2567 = vadd.f32 %v2454, %v2566
      %2568 = vmatmul.f32.gmra.mxu0 %v2157
      %v2569 = vpop.f32.mrf.mxu0
      %v2570 = vadd.f32 %v2457, %v2569
      %2571 = vmatmul.f32.gmra.mxu0 %v2159
      %v2572 = vpop.f32.mrf.mxu0
      %v2573 = vadd.f32 %v2460, %v2572
      %2574 = vmatmul.f32.gmra.mxu0 %v2161
      %v2575 = vpop.f32.mrf.mxu0
      %v2576 = vadd.f32 %v2463, %v2575
      %2577 = vmatmul.f32.gmra.mxu0 %v2163
      %v2578 = vpop.f32.mrf.mxu0
      %v2579 = vadd.f32 %v2466, %v2578
      %2580 = vmatmul.f32.gmra.mxu0 %v2165
      %v2581 = vpop.f32.mrf.mxu0
      %v2582 = vadd.f32 %v2469, %v2581
      %2583 = vdwg.mxu0
      %v2584 = vmax.f32 %v2489, 0.0
      %v2585 = vmax.f32 %v2492, 0.0
      %v2586 = vmax.f32 %v2495, 0.0
      %v2587 = vmax.f32 %v2498, 0.0
      %v2588 = vmax.f32 %v2501, 0.0
      %v2589 = vmax.f32 %v2504, 0.0
      %v2590 = vmax.f32 %v2507, 0.0
      %v2591 = vmax.f32 %v2510, 0.0
      %v2592 = vmax.f32 %v2513, 0.0
      %v2593 = vmax.f32 %v2516, 0.0
      %v2594 = vmax.f32 %v2519, 0.0
      %v2595 = vmax.f32 %v2522, 0.0
      %v2596 = vmax.f32 %v2525, 0.0
      %v2597 = vmax.f32 %v2528, 0.0
      %v2598 = vmax.f32 %v2531, 0.0
      %v2599 = vmax.f32 %v2534, 0.0
      %v2600 = vmax.f32 %v2537, 0.0
      %v2601 = vmax.f32 %v2540, 0.0
      %v2602 = vmax.f32 %v2543, 0.0
      %v2603 = vmax.f32 %v2546, 0.0
      %v2604 = vmax.f32 %v2549, 0.0
      %v2605 = vmax.f32 %v2552, 0.0
      %v2606 = vmax.f32 %v2555, 0.0
      %v2607 = vmax.f32 %v2558, 0.0
      %v2608 = vmax.f32 %v2561, 0.0
      %v2609 = vmax.f32 %v2564, 0.0
      %v2610 = vmax.f32 %v2567, 0.0
      %v2611 = vmax.f32 %v2570, 0.0
      %v2612 = vmax.f32 %v2573, 0.0
      %v2613 = vmax.f32 %v2576, 0.0
      %v2614 = vmax.f32 %v2579, 0.0
      %v2615 = vmax.f32 %v2582, 0.0
      %v2616 = vld [vmem:[%s12] sm:$0xff]
      %v2617 = vld [vmem:[%s12 + $0x8] sm:$0xff]
      %v2618 = vld [vmem:[%s12 + $0x10] sm:$0xff]
      %v2619 = vld [vmem:[%s12 + $0x18] sm:$0xff]
      %v2620 = vld [vmem:[%s13] sm:$0xff]
      %v2621 = vld [vmem:[%s13 + $0x8] sm:$0xff]
      %2623 = vset.pattern.permute.xlu0 0
      %2624 = vperm.xlu0 %2623, %v2620
      %v2625 = vpop.permute.xlu0 %2624
      %2628 = vset.pattern.permute.xlu0 0
      %2629 = vperm.xlu0 %2628, %v2621
      %v2630 = vpop.permute.xlu0 %2629
      %2632 = vmatpush.msra.mxu0 %v2599
      %2633 = vmatpush.msra.mxu0 %v2598
      %2634 = vmatpush.msra.mxu0 %v2597
      %2635 = vmatpush.msra.mxu0 %v2596
      %2636 = vmatpush.msra.mxu0 %v2595
      %2637 = vmatpush.msra.mxu0 %v2594
      %2638 = vmatpush.msra.mxu0 %v2593
      %2639 = vmatpush.msra.mxu0 %v2592
      %2640 = vmatpush.msra.mxu0 %v2591
      %2641 = vmatpush.msra.mxu0 %v2590
      %2642 = vmatpush.msra.mxu0 %v2589
      %2643 = vmatpush.msra.mxu0 %v2588
      %2644 = vmatpush.msra.mxu0 %v2587
      %2645 = vmatpush.msra.mxu0 %v2586
      %2646 = vmatpush.msra.mxu0 %v2585
      %2647 = vmatpush.msra.mxu0 %v2584
      %2648 = vmatmul.f32.gmra.mxu0 %v2616
      %v2649 = vpop.f32.mrf.mxu0
      %v2650 = vadd.f32 %v2625, %v2649
      %2651 = vmatmul.f32.gmra.mxu0 %v2618
      %v2652 = vpop.f32.mrf.mxu0
      %v2653 = vadd.f32 %v2630, %v2652
      %2654 = vdwg.mxu0
      %2655 = vmatpush.msra.mxu0 %v2615
      %2656 = vmatpush.msra.mxu0 %v2614
      %2657 = vmatpush.msra.mxu0 %v2613
      %2658 = vmatpush.msra.mxu0 %v2612
      %2659 = vmatpush.msra.mxu0 %v2611
      %2660 = vmatpush.msra.mxu0 %v2610
      %2661 = vmatpush.msra.mxu0 %v2609
      %2662 = vmatpush.msra.mxu0 %v2608
      %2663 = vmatpush.msra.mxu0 %v2607
      %2664 = vmatpush.msra.mxu0 %v2606
      %2665 = vmatpush.msra.mxu0 %v2605
      %2666 = vmatpush.msra.mxu0 %v2604
      %2667 = vmatpush.msra.mxu0 %v2603
      %2668 = vmatpush.msra.mxu0 %v2602
      %2669 = vmatpush.msra.mxu0 %v2601
      %2670 = vmatpush.msra.mxu0 %v2600
      %2671 = vmatmul.f32.gmra.mxu0 %v2617
      %v2672 = vpop.f32.mrf.mxu0
      %v2673 = vadd.f32 %v2650, %v2672
      %2674 = vmatmul.f32.gmra.mxu0 %v2619
      %v2675 = vpop.f32.mrf.mxu0
      %v2676 = vadd.f32 %v2653, %v2675
      %2677 = vdwg.mxu0
      %v2678 = vsel %vm1620, %v2673, -inf
      %v2679 = vrot.slane %v2678, 4
      %v2680 = vmax.f32 %v2678, %v2679
      %v2681 = vrot.slane %v2680, 2
      %v2682 = vmax.f32 %v2680, %v2681
      %v2683 = vrot.slane %v2682, 1
      %v2684 = vmax.f32 %v2682, %v2683
      %v2685 = vsel %vm1620, %v2676, -inf
      %v2686 = vrot.slane %v2685, 4
      %v2687 = vmax.f32 %v2685, %v2686
      %v2688 = vrot.slane %v2687, 2
      %v2689 = vmax.f32 %v2687, %v2688
      %v2690 = vrot.slane %v2689, 1
      %v2691 = vmax.f32 %v2689, %v2690
      %v2692 = vsel %vm1635, %v2684, %v2691
      %v2693 = vmul.f32 %v1636, 0.5263158
      %v2694 = vand.u32 2147483647, %v2693
      %vm2695 = vcmp.gt.f32.partialorder %v2694, 2.4142137
      %vm2696 = vcmp.gt.f32.partialorder %v2694, 0.41421357
      %v2697 = vmax.f32 %v2694, 1e-30
      %v2698 = vrcp.pop %v2697
      %v2699 = vmul.f32 %v2697, %v2698
      %v2700 = vsub.f32 1.0, %v2699
      %v2701 = vmul.f32 %v2698, %v2700
      %v2702 = vadd.f32 %v2698, %v2701
      %vm2703 = vweird.f32 %v2697
      %vm2704 = vweird.f32 %v2698
      %vm2705 = vmor %vm2703, %vm2704
      %v2706 = vsel %vm2705, %v2698, %v2702
      %v2707 = vand.u32 2147483647, %v2697
      %vm2708 = vcmp.eq.f32.partialorder %v2707, 8.507059e+37
      %v2709 = vand.u32 %v2697, 2147483648
      %v2710 = vor.u32 1.1754944e-38, %v2709
      %v2711 = vsel %vm2708, %v2710, %v2706
      %v2712 = vmul.f32 -1.0, %v2711
      %v2713 = vsub.f32 %v2694, 1.0
      %v2714 = vadd.f32 %v2694, 1.0
      %v2715 = vrcp.pop %v2714
      %v2716 = vmul.f32 %v2714, %v2715
      %v2717 = vsub.f32 1.0, %v2716
      %v2718 = vmul.f32 %v2715, %v2717
      %v2719 = vadd.f32 %v2715, %v2718
      %vm2720 = vweird.f32 %v2714
      %vm2721 = vweird.f32 %v2715
      %vm2722 = vmor %vm2720, %vm2721
      %v2723 = vsel %vm2722, %v2715, %v2719
      %v2724 = vand.u32 2147483647, %v2714
      %vm2725 = vcmp.eq.f32.partialorder %v2724, 8.507059e+37
      %v2726 = vand.u32 %v2714, 2147483648
      %v2727 = vor.u32 1.1754944e-38, %v2726
      %v2728 = vsel %vm2725, %v2727, %v2723
      %v2729 = vmul.f32 %v2713, %v2728
      %v2730 = vsel %vm2696, %v2729, %v2694
      %v2731 = vsel %vm2695, %v2712, %v2730
      %v2732 = vsel %vm2696, 0.7853982, 0.0
      %v2733 = vsel %vm2695, 1.5707964, %v2732
      %v2734 = vmul.f32 %v2731, %v2731
      %v2735 = vmul.f32 %v2734, 0.080537446
      %v2736 = vsub.f32 %v2735, 0.13877685
      %v2737 = vmul.f32 %v2736, %v2734
      %v2738 = vadd.f32 %v2737, 0.19977711
      %v2739 = vmul.f32 %v2738, %v2734
      %v2740 = vsub.f32 %v2739, 0.3333295
      %v2741 = vmul.f32 %v2731, %v2734
      %v2742 = vmul.f32 %v2741, %v2740
      %v2743 = vadd.f32 %v2731, %v2742
      %v2744 = vadd.f32 %v2733, %v2743
      %vm2745 = vcmp.lt.f32.partialorder %v2693, 0.0
      %v2746 = vsub.f32 0.0, %v2744
      %v2747 = vsel %vm2745, %v2746, %v2744
      %v2748 = vmul.f32 %v2747, 1.2095776
      %v2749 = vadd.f32 %v577, %v2692
      %v2750 = vmul.f32 %v2748, 1.442695
      %v2751 = vpow.pop %v2750
      %v2752 = vmul.f32 %v2749, %v2751
      %vm2753 = vcmask 123904
      %2754 = vst.msk [vmem:[%s563] sm:$0x3] %vm2753, %v2752
      %v2755 = vsel %vm2753, %v2748, 0.0
      %2756 = vadd.xlane.f32.xlu0 %v2755
      %v2757 = vpop.xlane.xlu0 %2756
      %vm2758 = vcmask 1041408
      %v2759 = vsel %vm2758, %v2757, 0.0
      %v2760 = vrot.slane %v2759, 4
      %v2761 = vadd.f32 %v2759, %v2760
      %v2762 = vrot.slane %v2761, 2
      %v2763 = vadd.f32 %v2761, %v2762
      %v2764 = vrot.slane %v2763, 1
      %v2765 = vadd.f32 %v2763, %v2764
      %2766 = vst [vmem:[%s570] sm:$0xff] %v2765
      %p2767 = scmp.lt.s32.totalorder %s31, 1
      %s2768 = scalar_select %p2767, %s31, 1
      %p2769 = scmp.lt.s32.totalorder %s32, 0
      %s2770 = scalar_select %p2769, %s32, 0
      %s2771 = sadd.s32 %s2770, %s2768
      %s2772 = smul.addr %s2771, 2
      %s2773 = scalar_lea.vmem %s14, %s2772
      %p2774 = scmp.lt.s32.totalorder %s31, 1
      %s2775 = scalar_select %p2774, %s31, 1
      %p2776 = scmp.lt.s32.totalorder %s32, 0
      %s2777 = scalar_select %p2776, %s32, 0
      %s2778 = sadd.s32 %s2777, %s2775
      %s2779 = smul.addr %s2778, 8
      %s2780 = scalar_lea.vmem %s15, %s2779
      // Predicated region
      $region77: #{flow_assembly_forward.4} parent=75 // pred_check
        %p2781 = pneg %p367
      $region78: #{flow_assembly_forward.4} parent=75 // pred_check_branch
        %2783 = sbr.rel (%p2781) target = $region80
      $region79: #{flow_assembly_forward.4} parent=75 // pred_region
        _
      $region80: #{flow_assembly_forward.4} parent=75 // pred_fallthru
        _
      // Predicated region
      $region81: #{flow_assembly_forward.4} parent=75 // pred_check
        %p2784 = pneg %p395
      $region82: #{flow_assembly_forward.4} parent=75 // pred_check_branch
        %2786 = sbr.rel (%p2784) target = $region84
      $region83: #{flow_assembly_forward.4} parent=75 // pred_region
        _
      $region84: #{flow_assembly_forward.4} parent=75 // pred_fallthru
        _
    $region76: #{flow_assembly_forward.4} parent=5 // pred_fallthru
      _
    %p2787 = scmp.le.s32.totalorder 2, %s22
    // Predicated region
    $region85: #{flow_assembly_forward.4} parent=5 // pred_check
      %p2788 = pneg %p2787
    $region86: #{flow_assembly_forward.4} parent=5 // pred_check_branch
      %2790 = sbr.rel (%p2788) target = $region88
    $region87: #{flow_assembly_forward.4} parent=5 // pred_region
      %s2791 = ssub.s32 %s22, 2
      // Predicated region
      $region89: #{flow_assembly_forward.4} parent=87 // pred_check
        %p2792 = pneg %p373
      $region90: #{flow_assembly_forward.4} parent=87 // pred_check_branch
        %2794 = sbr.rel (%p2792) target = $region92
      $region91: #{flow_assembly_forward.4} parent=87 // pred_region
        %p2795 = scmp.lt.s32.totalorder %s33, 1
        %s2796 = scalar_select %p2795, %s33, 1
        %p2797 = scmp.lt.s32.totalorder %s34, 0
        %s2798 = scalar_select %p2797, %s34, 0
        %s2799 = sadd.s32 %s2798, %s2796
        %s2800 = smul.addr %s2799, 2
        %s2801 = scalar_lea.vmem %s14, %s2800
      $region92: #{flow_assembly_forward.4} parent=87 // pred_fallthru
        _
      // Predicated region
      $region93: #{flow_assembly_forward.4} parent=87 // pred_check
        %p2802 = pneg %p401
      $region94: #{flow_assembly_forward.4} parent=87 // pred_check_branch
        %2804 = sbr.rel (%p2802) target = $region96
      $region95: #{flow_assembly_forward.4} parent=87 // pred_region
        %p2805 = scmp.lt.s32.totalorder %s33, 1
        %s2806 = scalar_select %p2805, %s33, 1
        %p2807 = scmp.lt.s32.totalorder %s34, 0
        %s2808 = scalar_select %p2807, %s34, 0
        %s2809 = sadd.s32 %s2808, %s2806
        %s2810 = smul.addr %s2809, 8
        %s2811 = scalar_lea.vmem %s15, %s2810
      $region96: #{flow_assembly_forward.4} parent=87 // pred_fallthru
        _
    $region88: #{flow_assembly_forward.4} parent=5 // pred_fallthru
      _
  $region6: #{flow_assembly_forward.4} parent=0 // loop_footer
    %s26 = sadd.s32 1, %s22
  $region7: #{flow_assembly_forward.4} parent=0 // loop_footer_branch
    %21 = sbr.rel target = $region3
  $region8: #{flow_assembly_forward.4} parent=0 // loop_exit
    _

</llo_original>
